<compile_context>
chip_gen: v7x
topology: tpu7x:2x2x1
jax: 0.10.0
libtpu: 0.0.40
codegen_flags: <defaults>
</compile_context>

<pallas_src>
import jax
import jax.numpy as jnp
from jax.experimental import pallas as pl
from jax.experimental.pallas import tpu as pltpu

# ----------------------------------------------------------------------------
# Problem dimensions (small shapes consistent with the module; reduction=16 needs C >= 16).
# ----------------------------------------------------------------------------
N_BATCH = 2
C_CH = 64
H_SZ = W_SZ = 32
CA_RED = 16
CA_HID = C_CH // CA_RED          # 4
SA_K = 7                         # SpatialAttention kernel_size
SA_PAD = SA_K // 2               # 3


# ----------------------------------------------------------------------------
# Fused CBAM kernel (one grid step per image).
#   x_ref  : (1, H, W, C)   input feature map (NHWC, C on lanes)
#   w1_ref : (C, HID)       ChannelAttention fc1 (1x1 conv, bias=False)
#   w2_ref : (HID, C)       ChannelAttention fc2 (1x1 conv, bias=False)
#   t_ref  : (2*7*W, W)     stacked banded-Toeplitz blocks of the 7x7 spatial conv
#   out_ref: (1, H, W, C)   refined output = x * sigmoid(channel) * sigmoid(spatial)
# ----------------------------------------------------------------------------
def _cbam_kernel(x_ref, w1_ref, w2_ref, t_ref, out_ref):
    _, h_sz, w_sz, _ = x_ref.shape
    x = x_ref[0]                                                    # (H, W, C)

    # --- ChannelAttention: global avg / max pool over (H, W), shared MLP, sigmoid ---
    avg = jnp.mean(jnp.mean(x, axis=0), axis=0, keepdims=True)      # (1, C)
    mx = jnp.max(jnp.max(x, axis=0), axis=0, keepdims=True)         # (1, C)
    v = jnp.concatenate([avg, mx], axis=0)                          # (2, C)
    hidden = jnp.maximum(
        jnp.dot(v, w1_ref[...], preferred_element_type=jnp.float32), 0.0)   # (2, HID)
    o = jnp.dot(hidden, w2_ref[...], preferred_element_type=jnp.float32)    # (2, C)
    att_c = jax.nn.sigmoid(o[0:1, :] + o[1:2, :])                   # (1, C)
    xc = x * att_c.reshape(1, 1, -1)                                # channel-refined, stays in VMEM

    # --- SpatialAttention: channel mean/max planes, 7x7 conv as ONE Toeplitz matmul ---
    mean_p = jnp.mean(xc, axis=-1)                                  # (H, W), W on lanes
    max_p = jnp.max(xc, axis=-1)                                    # (H, W)
    zpad = jnp.zeros((SA_PAD, w_sz), jnp.float32)
    pm = jnp.concatenate([zpad, mean_p, zpad], axis=0)              # (H + 6, W), row-padded
    px = jnp.concatenate([zpad, max_p, zpad], axis=0)               # (H + 6, W)
    # Stack the 2*7 row-shifted planes along the contraction axis -> single K = 2*7*W matmul.
    stacked = jnp.concatenate(
        [pm[dy:dy + h_sz, :] for dy in range(SA_K)]
        + [px[dy:dy + h_sz, :] for dy in range(SA_K)], axis=-1)     # (H, 14*W)
    acc = jnp.dot(stacked, t_ref[...], preferred_element_type=jnp.float32)  # (H, W)
    att_s = jax.nn.sigmoid(acc)                                     # (H, W), W on lanes

    # --- Fused final broadcast multiply: out = xc * att_s ---
    # att_s has W on lanes but must broadcast along the lane (=C) axis of xc, so transpose the
    # plane once (XLU) and store row by row with a cheap (W, 1) -> (W, C) lane broadcast.
    att_s_t = att_s.T                                               # (W, H), W on sublanes
    for h in range(h_sz):
        out_ref[0, h] = xc[h] * att_s_t[:, h:h + 1]                 # (W, C)


def cbam_pallas(x_nhwc, ca_w1, ca_w2, t_stack):
    n, h, w, c = x_nhwc.shape
    hid = ca_w1.shape[1]
    return pl.pallas_call(
        _cbam_kernel,
        out_shape=jax.ShapeDtypeStruct((n, h, w, c), jnp.float32),
        grid=(n,),
        in_specs=[
            pl.BlockSpec((1, h, w, c), lambda i: (i, 0, 0, 0)),
            pl.BlockSpec((c, hid), lambda i: (0, 0)),
            pl.BlockSpec((hid, c), lambda i: (0, 0)),
            pl.BlockSpec(t_stack.shape, lambda i: (0, 0)),
        ],
        out_specs=pl.BlockSpec((1, h, w, c), lambda i: (i, 0, 0, 0)),
        compiler_params=pltpu.CompilerParams(dimension_semantics=("parallel",)),
    )(x_nhwc, ca_w1, ca_w2, t_stack)


# ----------------------------------------------------------------------------
# Wrapper: layout plumbing only (NCHW <-> NHWC, Toeplitz construction from the 7x7 weights).
# ----------------------------------------------------------------------------
def build_sa_toeplitz(sa_w, w_sz):
    """Banded Toeplitz blocks T[p, dy][k, w] = sa_w[p, dy, k - w + 3] (0 outside the band),
    stacked p-major / dy-minor to shape (2*7*W, W) to match the in-kernel concat order."""
    i = jnp.arange(w_sz)[:, None]
    j = jnp.arange(w_sz)[None, :]
    d = i - j + SA_PAD
    valid = (d >= 0) & (d < SA_K)
    blocks = jnp.where(valid[None, None, :, :],
                       sa_w[:, :, jnp.clip(d, 0, SA_K - 1)], 0.0)   # (2, 7, W, W)
    return blocks.reshape(2 * SA_K * w_sz, w_sz)


@jax.jit
def cbam_forward(x_nchw, params):
    x = jnp.transpose(x_nchw, (0, 2, 3, 1))                         # NCHW -> NHWC
    t_stack = build_sa_toeplitz(params["sa_w"], x.shape[2])
    y = cbam_pallas(x, params["ca_w1"], params["ca_w2"], t_stack)
    return jnp.transpose(y, (0, 3, 1, 2))                           # NHWC -> NCHW


# ----------------------------------------------------------------------------
# Pure-JAX reference (for an in-script correctness check).
# ----------------------------------------------------------------------------
def cbam_reference(x_nchw, params):
    w1, w2, sa_w = params["ca_w1"], params["ca_w2"], params["sa_w"]
    hp = jax.lax.Precision.HIGHEST

    def mlp(v):                                                     # (N, C) -> (N, C)
        h = jnp.maximum(jnp.dot(v, w1, precision=hp), 0.0)
        return jnp.dot(h, w2, precision=hp)

    avg = jnp.mean(x_nchw, axis=(2, 3))
    mx = jnp.max(x_nchw, axis=(2, 3))
    att_c = jax.nn.sigmoid(mlp(avg) + mlp(mx))                      # (N, C)
    xc = x_nchw * att_c[:, :, None, None]

    mean_p = jnp.mean(xc, axis=1, keepdims=True)
    max_p = jnp.max(xc, axis=1, keepdims=True)
    planes = jnp.concatenate([mean_p, max_p], axis=1)               # (N, 2, H, W)
    conv = jax.lax.conv_general_dilated(
        planes, sa_w[None], window_strides=(1, 1), padding="SAME",
        dimension_numbers=("NCHW", "OIHW", "NCHW"), precision=hp)   # (N, 1, H, W)
    return xc * jax.nn.sigmoid(conv)


def init_params(key):
    k1, k2, k3 = jax.random.split(key, 3)
    return {
        # ChannelAttention 1x1 convs (bias=False), stored as (C, HID) / (HID, C) matmul weights.
        "ca_w1": jax.random.normal(k1, (C_CH, CA_HID), jnp.float32) / (C_CH ** 0.5),
        "ca_w2": jax.random.normal(k2, (CA_HID, C_CH), jnp.float32) / (CA_HID ** 0.5),
        # SpatialAttention 7x7 conv weight (out=1, in=2) stored as (2, 7, 7), bias=False.
        "sa_w": 0.1 * jax.random.normal(k3, (2, SA_K, SA_K), jnp.float32),
    }


if __name__ == "__main__":
    key = jax.random.PRNGKey(0)
    pkey, xkey = jax.random.split(key)
    params = init_params(pkey)
    x = jax.random.normal(xkey, (N_BATCH, C_CH, H_SZ, W_SZ), jnp.float32)  # NCHW like PyTorch

    out = cbam_forward(x, params)
    jax.block_until_ready(out)

    assert out.shape == x.shape
    assert bool(jnp.all(jnp.isfinite(out)))
    ref = cbam_reference(x, params)
    err = float(jnp.max(jnp.abs(out - ref)))
    assert err < 5e-3, f"mismatch vs pure-JAX reference: max abs err = {err}"
    print("KERNEL_OK")
</pallas_src>

<mosaic_0001>
module attributes {stable_mosaic.version = 11 : i64} {
  func.func @_cbam_kernel(%arg0: i32, %arg1: memref<1x32x32x64xf32, #tpu.memory_space<vmem>>, %arg2: memref<64x4xf32, #tpu.memory_space<vmem>>, %arg3: memref<4x64xf32, #tpu.memory_space<vmem>>, %arg4: memref<448x32xf32, #tpu.memory_space<vmem>>, %arg5: memref<1x32x32x64xf32, #tpu.memory_space<vmem>>) attributes {dimension_semantics = [#tpu.dimension_semantics<parallel>], iteration_bounds = array<i64: 2>, scalar_prefetch = 0 : i64, scratch_operands = 0 : i64, tpu.core_type = #tpu.core_type<tc>, window_params = [{transform_indices = @transform_0, window_bounds = array<i64: 1, 32, 32, 64>}, {pipeline_mode = #tpu.pipeline_mode<synchronous>, transform_indices = @transform_1, window_bounds = array<i64: 64, 4>}, {pipeline_mode = #tpu.pipeline_mode<synchronous>, transform_indices = @transform_2, window_bounds = array<i64: 4, 64>}, {pipeline_mode = #tpu.pipeline_mode<synchronous>, transform_indices = @transform_3, window_bounds = array<i64: 448, 32>}, {transform_indices = @transform_4, window_bounds = array<i64: 1, 32, 32, 64>}]} {
    %c0 = arith.constant 0 : index
    %c0_0 = arith.constant 0 : index
    %c0_1 = arith.constant 0 : index
    %c0_2 = arith.constant 0 : index
    %0 = vector.load %arg1[%c0, %c0_0, %c0_1, %c0_2] : memref<1x32x32x64xf32, #tpu.memory_space<vmem>>, vector<1x32x32x64xf32>
    %1 = vector.shape_cast %0 : vector<1x32x32x64xf32> to vector<32x32x64xf32>
    %cst = arith.constant dense<0.000000e+00> : vector<32x64xf32>
    %2 = vector.multi_reduction <add>, %1, %cst [0] : vector<32x32x64xf32> to vector<32x64xf32>
    %cst_3 = arith.constant 3.200000e+01 : f32
    %3 = vector.broadcast %cst_3 : f32 to vector<32x64xf32>
    %4 = arith.divf %2, %3 : vector<32x64xf32>
    %cst_4 = arith.constant dense<0.000000e+00> : vector<64xf32>
    %5 = vector.multi_reduction <add>, %4, %cst_4 [0] : vector<32x64xf32> to vector<64xf32>
    %6 = vector.shape_cast %5 : vector<64xf32> to vector<1x64xf32>
    %cst_5 = arith.constant 3.200000e+01 : f32
    %7 = vector.broadcast %cst_5 : f32 to vector<1x64xf32>
    %8 = arith.divf %6, %7 : vector<1x64xf32>
    %cst_6 = arith.constant dense<0xFF800000> : vector<32x64xf32>
    %9 = vector.multi_reduction <maximumf>, %1, %cst_6 [0] : vector<32x32x64xf32> to vector<32x64xf32>
    %cst_7 = arith.constant dense<0xFF800000> : vector<64xf32>
    %10 = vector.multi_reduction <maximumf>, %9, %cst_7 [0] : vector<32x64xf32> to vector<64xf32>
    %11 = vector.shape_cast %10 : vector<64xf32> to vector<1x64xf32>
    %12 = tpu.concatenate %8, %11 in 0 : vector<1x64xf32>, vector<1x64xf32> -> vector<2x64xf32>
    %c0_8 = arith.constant 0 : index
    %c0_9 = arith.constant 0 : index
    %13 = vector.load %arg2[%c0_8, %c0_9] : memref<64x4xf32, #tpu.memory_space<vmem>>, vector<64x4xf32>
    %cst_10 = arith.constant dense<0.000000e+00> : vector<2x4xf32>
    %14 = tpu.matmul %12, %13, %cst_10 {dimension_numbers = #tpu.dot_dimension_numbers<[1], [0], [0], [1], [0, 0, 1, 1], [], []>} : vector<2x64xf32>, vector<64x4xf32>, vector<2x4xf32> -> vector<2x4xf32>
    %cst_11 = arith.constant 0.000000e+00 : f32
    %15 = vector.broadcast %cst_11 : f32 to vector<2x4xf32>
    %16 = arith.maximumf %14, %15 : vector<2x4xf32>
    %c0_12 = arith.constant 0 : index
    %c0_13 = arith.constant 0 : index
    %17 = vector.load %arg3[%c0_12, %c0_13] : memref<4x64xf32, #tpu.memory_space<vmem>>, vector<4x64xf32>
    %cst_14 = arith.constant dense<0.000000e+00> : vector<2x64xf32>
    %18 = tpu.matmul %16, %17, %cst_14 {dimension_numbers = #tpu.dot_dimension_numbers<[1], [0], [0], [1], [0, 0, 1, 1], [], []>} : vector<2x4xf32>, vector<4x64xf32>, vector<2x64xf32> -> vector<2x64xf32>
    %19 = vector.extract_strided_slice %18 {offsets = [0, 0], sizes = [1, 64], strides = [1, 1]} : vector<2x64xf32> to vector<1x64xf32>
    %20 = vector.extract_strided_slice %18 {offsets = [1, 0], sizes = [1, 64], strides = [1, 1]} : vector<2x64xf32> to vector<1x64xf32>
    %21 = arith.addf %19, %20 : vector<1x64xf32>
    %22 = arith.negf %21 : vector<1x64xf32>
    %23 = math.exp %22 : vector<1x64xf32>
    %cst_15 = arith.constant 1.000000e+00 : f32
    %24 = vector.broadcast %cst_15 : f32 to vector<1x64xf32>
    %25 = arith.addf %24, %23 : vector<1x64xf32>
    %26 = arith.divf %24, %25 : vector<1x64xf32>
    %27 = vector.shape_cast %26 : vector<1x64xf32> to vector<1x1x64xf32>
    %28 = vector.broadcast %27 : vector<1x1x64xf32> to vector<32x32x64xf32>
    %29 = arith.mulf %1, %28 : vector<32x32x64xf32>
    %cst_16 = arith.constant dense<0.000000e+00> : vector<32x32xf32>
    %30 = vector.multi_reduction <add>, %29, %cst_16 [2] : vector<32x32x64xf32> to vector<32x32xf32>
    %cst_17 = arith.constant 6.400000e+01 : f32
    %31 = vector.broadcast %cst_17 : f32 to vector<32x32xf32>
    %32 = arith.divf %30, %31 : vector<32x32xf32>
    %cst_18 = arith.constant dense<0xFF800000> : vector<32x32xf32>
    %33 = vector.multi_reduction <maximumf>, %29, %cst_18 [2] : vector<32x32x64xf32> to vector<32x32xf32>
    %cst_19 = arith.constant 0.000000e+00 : f32
    %34 = vector.broadcast %cst_19 : f32 to vector<3x32xf32>
    %35 = tpu.concatenate %34, %32, %34 in 0 : vector<3x32xf32>, vector<32x32xf32>, vector<3x32xf32> -> vector<38x32xf32>
    %36 = tpu.concatenate %34, %33, %34 in 0 : vector<3x32xf32>, vector<32x32xf32>, vector<3x32xf32> -> vector<38x32xf32>
    %37 = vector.extract_strided_slice %35 {offsets = [0, 0], sizes = [32, 32], strides = [1, 1]} : vector<38x32xf32> to vector<32x32xf32>
    %38 = vector.extract_strided_slice %35 {offsets = [1, 0], sizes = [32, 32], strides = [1, 1]} : vector<38x32xf32> to vector<32x32xf32>
    %39 = vector.extract_strided_slice %35 {offsets = [2, 0], sizes = [32, 32], strides = [1, 1]} : vector<38x32xf32> to vector<32x32xf32>
    %40 = vector.extract_strided_slice %35 {offsets = [3, 0], sizes = [32, 32], strides = [1, 1]} : vector<38x32xf32> to vector<32x32xf32>
    %41 = vector.extract_strided_slice %35 {offsets = [4, 0], sizes = [32, 32], strides = [1, 1]} : vector<38x32xf32> to vector<32x32xf32>
    %42 = vector.extract_strided_slice %35 {offsets = [5, 0], sizes = [32, 32], strides = [1, 1]} : vector<38x32xf32> to vector<32x32xf32>
    %43 = vector.extract_strided_slice %35 {offsets = [6, 0], sizes = [32, 32], strides = [1, 1]} : vector<38x32xf32> to vector<32x32xf32>
    %44 = vector.extract_strided_slice %36 {offsets = [0, 0], sizes = [32, 32], strides = [1, 1]} : vector<38x32xf32> to vector<32x32xf32>
    %45 = vector.extract_strided_slice %36 {offsets = [1, 0], sizes = [32, 32], strides = [1, 1]} : vector<38x32xf32> to vector<32x32xf32>
    %46 = vector.extract_strided_slice %36 {offsets = [2, 0], sizes = [32, 32], strides = [1, 1]} : vector<38x32xf32> to vector<32x32xf32>
    %47 = vector.extract_strided_slice %36 {offsets = [3, 0], sizes = [32, 32], strides = [1, 1]} : vector<38x32xf32> to vector<32x32xf32>
    %48 = vector.extract_strided_slice %36 {offsets = [4, 0], sizes = [32, 32], strides = [1, 1]} : vector<38x32xf32> to vector<32x32xf32>
    %49 = vector.extract_strided_slice %36 {offsets = [5, 0], sizes = [32, 32], strides = [1, 1]} : vector<38x32xf32> to vector<32x32xf32>
    %50 = vector.extract_strided_slice %36 {offsets = [6, 0], sizes = [32, 32], strides = [1, 1]} : vector<38x32xf32> to vector<32x32xf32>
    %51 = tpu.concatenate %37, %38, %39, %40, %41, %42, %43, %44, %45, %46, %47, %48, %49, %50 in 1 : vector<32x32xf32>, vector<32x32xf32>, vector<32x32xf32>, vector<32x32xf32>, vector<32x32xf32>, vector<32x32xf32>, vector<32x32xf32>, vector<32x32xf32>, vector<32x32xf32>, vector<32x32xf32>, vector<32x32xf32>, vector<32x32xf32>, vector<32x32xf32>, vector<32x32xf32> -> vector<32x448xf32>
    %c0_20 = arith.constant 0 : index
    %c0_21 = arith.constant 0 : index
    %52 = vector.load %arg4[%c0_20, %c0_21] : memref<448x32xf32, #tpu.memory_space<vmem>>, vector<448x32xf32>
    %cst_22 = arith.constant dense<0.000000e+00> : vector<32x32xf32>
    %53 = tpu.matmul %51, %52, %cst_22 {dimension_numbers = #tpu.dot_dimension_numbers<[1], [0], [0], [1], [0, 0, 1, 1], [], []>} : vector<32x448xf32>, vector<448x32xf32>, vector<32x32xf32> -> vector<32x32xf32>
    %54 = arith.negf %53 : vector<32x32xf32>
    %55 = math.exp %54 : vector<32x32xf32>
    %cst_23 = arith.constant 1.000000e+00 : f32
    %56 = vector.broadcast %cst_23 : f32 to vector<32x32xf32>
    %57 = arith.addf %56, %55 : vector<32x32xf32>
    %58 = arith.divf %56, %57 : vector<32x32xf32>
    %59 = tpu.transpose %58, [1, 0] : vector<32x32xf32> -> vector<32x32xf32>
    %60 = vector.extract_strided_slice %29 {offsets = [0, 0, 0], sizes = [1, 32, 64], strides = [1, 1, 1]} : vector<32x32x64xf32> to vector<1x32x64xf32>
    %61 = vector.shape_cast %60 : vector<1x32x64xf32> to vector<32x64xf32>
    %62 = vector.extract_strided_slice %59 {offsets = [0, 0], sizes = [32, 1], strides = [1, 1]} : vector<32x32xf32> to vector<32x1xf32>
    %63 = vector.broadcast %62 : vector<32x1xf32> to vector<32x64xf32>
    %64 = arith.mulf %61, %63 : vector<32x64xf32>
    %c0_24 = arith.constant 0 : index
    %c0_25 = arith.constant 0 : index
    %c0_26 = arith.constant 0 : index
    %c0_27 = arith.constant 0 : index
    %65 = vector.load %arg5[%c0_24, %c0_25, %c0_26, %c0_27] : memref<1x32x32x64xf32, #tpu.memory_space<vmem>>, vector<1x1x32x64xf32>
    %66 = vector.shape_cast %65 : vector<1x1x32x64xf32> to vector<32x64xf32>
    %67 = vector.shape_cast %64 : vector<32x64xf32> to vector<1x1x32x64xf32>
    tpu.vector_store %arg5[%c0_24, %c0_25, %c0_26, %c0_27], %67 {strides = array<i32>} : memref<1x32x32x64xf32, #tpu.memory_space<vmem>>, vector<1x1x32x64xf32>,
    %68 = vector.extract_strided_slice %29 {offsets = [1, 0, 0], sizes = [1, 32, 64], strides = [1, 1, 1]} : vector<32x32x64xf32> to vector<1x32x64xf32>
    %69 = vector.shape_cast %68 : vector<1x32x64xf32> to vector<32x64xf32>
    %70 = vector.extract_strided_slice %59 {offsets = [0, 1], sizes = [32, 1], strides = [1, 1]} : vector<32x32xf32> to vector<32x1xf32>
    %71 = vector.broadcast %70 : vector<32x1xf32> to vector<32x64xf32>
    %72 = arith.mulf %69, %71 : vector<32x64xf32>
    %c0_28 = arith.constant 0 : index
    %c1 = arith.constant 1 : index
    %c0_29 = arith.constant 0 : index
    %c0_30 = arith.constant 0 : index
    %73 = vector.load %arg5[%c0_28, %c1, %c0_29, %c0_30] : memref<1x32x32x64xf32, #tpu.memory_space<vmem>>, vector<1x1x32x64xf32>
    %74 = vector.shape_cast %73 : vector<1x1x32x64xf32> to vector<32x64xf32>
    %75 = vector.shape_cast %72 : vector<32x64xf32> to vector<1x1x32x64xf32>
    tpu.vector_store %arg5[%c0_28, %c1, %c0_29, %c0_30], %75 {strides = array<i32>} : memref<1x32x32x64xf32, #tpu.memory_space<vmem>>, vector<1x1x32x64xf32>,
    %76 = vector.extract_strided_slice %29 {offsets = [2, 0, 0], sizes = [1, 32, 64], strides = [1, 1, 1]} : vector<32x32x64xf32> to vector<1x32x64xf32>
    %77 = vector.shape_cast %76 : vector<1x32x64xf32> to vector<32x64xf32>
    %78 = vector.extract_strided_slice %59 {offsets = [0, 2], sizes = [32, 1], strides = [1, 1]} : vector<32x32xf32> to vector<32x1xf32>
    %79 = vector.broadcast %78 : vector<32x1xf32> to vector<32x64xf32>
    %80 = arith.mulf %77, %79 : vector<32x64xf32>
    %c0_31 = arith.constant 0 : index
    %c2 = arith.constant 2 : index
    %c0_32 = arith.constant 0 : index
    %c0_33 = arith.constant 0 : index
    %81 = vector.load %arg5[%c0_31, %c2, %c0_32, %c0_33] : memref<1x32x32x64xf32, #tpu.memory_space<vmem>>, vector<1x1x32x64xf32>
    %82 = vector.shape_cast %81 : vector<1x1x32x64xf32> to vector<32x64xf32>
    %83 = vector.shape_cast %80 : vector<32x64xf32> to vector<1x1x32x64xf32>
    tpu.vector_store %arg5[%c0_31, %c2, %c0_32, %c0_33], %83 {strides = array<i32>} : memref<1x32x32x64xf32, #tpu.memory_space<vmem>>, vector<1x1x32x64xf32>,
    %84 = vector.extract_strided_slice %29 {offsets = [3, 0, 0], sizes = [1, 32, 64], strides = [1, 1, 1]} : vector<32x32x64xf32> to vector<1x32x64xf32>
    %85 = vector.shape_cast %84 : vector<1x32x64xf32> to vector<32x64xf32>
    %86 = vector.extract_strided_slice %59 {offsets = [0, 3], sizes = [32, 1], strides = [1, 1]} : vector<32x32xf32> to vector<32x1xf32>
    %87 = vector.broadcast %86 : vector<32x1xf32> to vector<32x64xf32>
    %88 = arith.mulf %85, %87 : vector<32x64xf32>
    %c0_34 = arith.constant 0 : index
    %c3 = arith.constant 3 : index
    %c0_35 = arith.constant 0 : index
    %c0_36 = arith.constant 0 : index
    %89 = vector.load %arg5[%c0_34, %c3, %c0_35, %c0_36] : memref<1x32x32x64xf32, #tpu.memory_space<vmem>>, vector<1x1x32x64xf32>
    %90 = vector.shape_cast %89 : vector<1x1x32x64xf32> to vector<32x64xf32>
    %91 = vector.shape_cast %88 : vector<32x64xf32> to vector<1x1x32x64xf32>
    tpu.vector_store %arg5[%c0_34, %c3, %c0_35, %c0_36], %91 {strides = array<i32>} : memref<1x32x32x64xf32, #tpu.memory_space<vmem>>, vector<1x1x32x64xf32>,
    %92 = vector.extract_strided_slice %29 {offsets = [4, 0, 0], sizes = [1, 32, 64], strides = [1, 1, 1]} : vector<32x32x64xf32> to vector<1x32x64xf32>
    %93 = vector.shape_cast %92 : vector<1x32x64xf32> to vector<32x64xf32>
    %94 = vector.extract_strided_slice %59 {offsets = [0, 4], sizes = [32, 1], strides = [1, 1]} : vector<32x32xf32> to vector<32x1xf32>
    %95 = vector.broadcast %94 : vector<32x1xf32> to vector<32x64xf32>
    %96 = arith.mulf %93, %95 : vector<32x64xf32>
    %c0_37 = arith.constant 0 : index
    %c4 = arith.constant 4 : index
    %c0_38 = arith.constant 0 : index
    %c0_39 = arith.constant 0 : index
    %97 = vector.load %arg5[%c0_37, %c4, %c0_38, %c0_39] : memref<1x32x32x64xf32, #tpu.memory_space<vmem>>, vector<1x1x32x64xf32>
    %98 = vector.shape_cast %97 : vector<1x1x32x64xf32> to vector<32x64xf32>
    %99 = vector.shape_cast %96 : vector<32x64xf32> to vector<1x1x32x64xf32>
    tpu.vector_store %arg5[%c0_37, %c4, %c0_38, %c0_39], %99 {strides = array<i32>} : memref<1x32x32x64xf32, #tpu.memory_space<vmem>>, vector<1x1x32x64xf32>,
    %100 = vector.extract_strided_slice %29 {offsets = [5, 0, 0], sizes = [1, 32, 64], strides = [1, 1, 1]} : vector<32x32x64xf32> to vector<1x32x64xf32>
    %101 = vector.shape_cast %100 : vector<1x32x64xf32> to vector<32x64xf32>
    %102 = vector.extract_strided_slice %59 {offsets = [0, 5], sizes = [32, 1], strides = [1, 1]} : vector<32x32xf32> to vector<32x1xf32>
    %103 = vector.broadcast %102 : vector<32x1xf32> to vector<32x64xf32>
    %104 = arith.mulf %101, %103 : vector<32x64xf32>
    %c0_40 = arith.constant 0 : index
    %c5 = arith.constant 5 : index
    %c0_41 = arith.constant 0 : index
    %c0_42 = arith.constant 0 : index
    %105 = vector.load %arg5[%c0_40, %c5, %c0_41, %c0_42] : memref<1x32x32x64xf32, #tpu.memory_space<vmem>>, vector<1x1x32x64xf32>
    %106 = vector.shape_cast %105 : vector<1x1x32x64xf32> to vector<32x64xf32>
    %107 = vector.shape_cast %104 : vector<32x64xf32> to vector<1x1x32x64xf32>
    tpu.vector_store %arg5[%c0_40, %c5, %c0_41, %c0_42], %107 {strides = array<i32>} : memref<1x32x32x64xf32, #tpu.memory_space<vmem>>, vector<1x1x32x64xf32>,
    %108 = vector.extract_strided_slice %29 {offsets = [6, 0, 0], sizes = [1, 32, 64], strides = [1, 1, 1]} : vector<32x32x64xf32> to vector<1x32x64xf32>
    %109 = vector.shape_cast %108 : vector<1x32x64xf32> to vector<32x64xf32>
    %110 = vector.extract_strided_slice %59 {offsets = [0, 6], sizes = [32, 1], strides = [1, 1]} : vector<32x32xf32> to vector<32x1xf32>
    %111 = vector.broadcast %110 : vector<32x1xf32> to vector<32x64xf32>
    %112 = arith.mulf %109, %111 : vector<32x64xf32>
    %c0_43 = arith.constant 0 : index
    %c6 = arith.constant 6 : index
    %c0_44 = arith.constant 0 : index
    %c0_45 = arith.constant 0 : index
    %113 = vector.load %arg5[%c0_43, %c6, %c0_44, %c0_45] : memref<1x32x32x64xf32, #tpu.memory_space<vmem>>, vector<1x1x32x64xf32>
    %114 = vector.shape_cast %113 : vector<1x1x32x64xf32> to vector<32x64xf32>
    %115 = vector.shape_cast %112 : vector<32x64xf32> to vector<1x1x32x64xf32>
    tpu.vector_store %arg5[%c0_43, %c6, %c0_44, %c0_45], %115 {strides = array<i32>} : memref<1x32x32x64xf32, #tpu.memory_space<vmem>>, vector<1x1x32x64xf32>,
    %116 = vector.extract_strided_slice %29 {offsets = [7, 0, 0], sizes = [1, 32, 64], strides = [1, 1, 1]} : vector<32x32x64xf32> to vector<1x32x64xf32>
    %117 = vector.shape_cast %116 : vector<1x32x64xf32> to vector<32x64xf32>
    %118 = vector.extract_strided_slice %59 {offsets = [0, 7], sizes = [32, 1], strides = [1, 1]} : vector<32x32xf32> to vector<32x1xf32>
    %119 = vector.broadcast %118 : vector<32x1xf32> to vector<32x64xf32>
    %120 = arith.mulf %117, %119 : vector<32x64xf32>
    %c0_46 = arith.constant 0 : index
    %c7 = arith.constant 7 : index
    %c0_47 = arith.constant 0 : index
    %c0_48 = arith.constant 0 : index
    %121 = vector.load %arg5[%c0_46, %c7, %c0_47, %c0_48] : memref<1x32x32x64xf32, #tpu.memory_space<vmem>>, vector<1x1x32x64xf32>
    %122 = vector.shape_cast %121 : vector<1x1x32x64xf32> to vector<32x64xf32>
    %123 = vector.shape_cast %120 : vector<32x64xf32> to vector<1x1x32x64xf32>
    tpu.vector_store %arg5[%c0_46, %c7, %c0_47, %c0_48], %123 {strides = array<i32>} : memref<1x32x32x64xf32, #tpu.memory_space<vmem>>, vector<1x1x32x64xf32>,
    %124 = vector.extract_strided_slice %29 {offsets = [8, 0, 0], sizes = [1, 32, 64], strides = [1, 1, 1]} : vector<32x32x64xf32> to vector<1x32x64xf32>
    %125 = vector.shape_cast %124 : vector<1x32x64xf32> to vector<32x64xf32>
    %126 = vector.extract_strided_slice %59 {offsets = [0, 8], sizes = [32, 1], strides = [1, 1]} : vector<32x32xf32> to vector<32x1xf32>
    %127 = vector.broadcast %126 : vector<32x1xf32> to vector<32x64xf32>
    %128 = arith.mulf %125, %127 : vector<32x64xf32>
    %c0_49 = arith.constant 0 : index
    %c8 = arith.constant 8 : index
    %c0_50 = arith.constant 0 : index
    %c0_51 = arith.constant 0 : index
    %129 = vector.load %arg5[%c0_49, %c8, %c0_50, %c0_51] : memref<1x32x32x64xf32, #tpu.memory_space<vmem>>, vector<1x1x32x64xf32>
    %130 = vector.shape_cast %129 : vector<1x1x32x64xf32> to vector<32x64xf32>
    %131 = vector.shape_cast %128 : vector<32x64xf32> to vector<1x1x32x64xf32>
    tpu.vector_store %arg5[%c0_49, %c8, %c0_50, %c0_51], %131 {strides = array<i32>} : memref<1x32x32x64xf32, #tpu.memory_space<vmem>>, vector<1x1x32x64xf32>,
    %132 = vector.extract_strided_slice %29 {offsets = [9, 0, 0], sizes = [1, 32, 64], strides = [1, 1, 1]} : vector<32x32x64xf32> to vector<1x32x64xf32>
    %133 = vector.shape_cast %132 : vector<1x32x64xf32> to vector<32x64xf32>
    %134 = vector.extract_strided_slice %59 {offsets = [0, 9], sizes = [32, 1], strides = [1, 1]} : vector<32x32xf32> to vector<32x1xf32>
    %135 = vector.broadcast %134 : vector<32x1xf32> to vector<32x64xf32>
    %136 = arith.mulf %133, %135 : vector<32x64xf32>
    %c0_52 = arith.constant 0 : index
    %c9 = arith.constant 9 : index
    %c0_53 = arith.constant 0 : index
    %c0_54 = arith.constant 0 : index
    %137 = vector.load %arg5[%c0_52, %c9, %c0_53, %c0_54] : memref<1x32x32x64xf32, #tpu.memory_space<vmem>>, vector<1x1x32x64xf32>
    %138 = vector.shape_cast %137 : vector<1x1x32x64xf32> to vector<32x64xf32>
    %139 = vector.shape_cast %136 : vector<32x64xf32> to vector<1x1x32x64xf32>
    tpu.vector_store %arg5[%c0_52, %c9, %c0_53, %c0_54], %139 {strides = array<i32>} : memref<1x32x32x64xf32, #tpu.memory_space<vmem>>, vector<1x1x32x64xf32>,
    %140 = vector.extract_strided_slice %29 {offsets = [10, 0, 0], sizes = [1, 32, 64], strides = [1, 1, 1]} : vector<32x32x64xf32> to vector<1x32x64xf32>
    %141 = vector.shape_cast %140 : vector<1x32x64xf32> to vector<32x64xf32>
    %142 = vector.extract_strided_slice %59 {offsets = [0, 10], sizes = [32, 1], strides = [1, 1]} : vector<32x32xf32> to vector<32x1xf32>
    %143 = vector.broadcast %142 : vector<32x1xf32> to vector<32x64xf32>
    %144 = arith.mulf %141, %143 : vector<32x64xf32>
    %c0_55 = arith.constant 0 : index
    %c10 = arith.constant 10 : index
    %c0_56 = arith.constant 0 : index
    %c0_57 = arith.constant 0 : index
    %145 = vector.load %arg5[%c0_55, %c10, %c0_56, %c0_57] : memref<1x32x32x64xf32, #tpu.memory_space<vmem>>, vector<1x1x32x64xf32>
    %146 = vector.shape_cast %145 : vector<1x1x32x64xf32> to vector<32x64xf32>
    %147 = vector.shape_cast %144 : vector<32x64xf32> to vector<1x1x32x64xf32>
    tpu.vector_store %arg5[%c0_55, %c10, %c0_56, %c0_57], %147 {strides = array<i32>} : memref<1x32x32x64xf32, #tpu.memory_space<vmem>>, vector<1x1x32x64xf32>,
    %148 = vector.extract_strided_slice %29 {offsets = [11, 0, 0], sizes = [1, 32, 64], strides = [1, 1, 1]} : vector<32x32x64xf32> to vector<1x32x64xf32>
    %149 = vector.shape_cast %148 : vector<1x32x64xf32> to vector<32x64xf32>
    %150 = vector.extract_strided_slice %59 {offsets = [0, 11], sizes = [32, 1], strides = [1, 1]} : vector<32x32xf32> to vector<32x1xf32>
    %151 = vector.broadcast %150 : vector<32x1xf32> to vector<32x64xf32>
    %152 = arith.mulf %149, %151 : vector<32x64xf32>
    %c0_58 = arith.constant 0 : index
    %c11 = arith.constant 11 : index
    %c0_59 = arith.constant 0 : index
    %c0_60 = arith.constant 0 : index
    %153 = vector.load %arg5[%c0_58, %c11, %c0_59, %c0_60] : memref<1x32x32x64xf32, #tpu.memory_space<vmem>>, vector<1x1x32x64xf32>
    %154 = vector.shape_cast %153 : vector<1x1x32x64xf32> to vector<32x64xf32>
    %155 = vector.shape_cast %152 : vector<32x64xf32> to vector<1x1x32x64xf32>
    tpu.vector_store %arg5[%c0_58, %c11, %c0_59, %c0_60], %155 {strides = array<i32>} : memref<1x32x32x64xf32, #tpu.memory_space<vmem>>, vector<1x1x32x64xf32>,
    %156 = vector.extract_strided_slice %29 {offsets = [12, 0, 0], sizes = [1, 32, 64], strides = [1, 1, 1]} : vector<32x32x64xf32> to vector<1x32x64xf32>
    %157 = vector.shape_cast %156 : vector<1x32x64xf32> to vector<32x64xf32>
    %158 = vector.extract_strided_slice %59 {offsets = [0, 12], sizes = [32, 1], strides = [1, 1]} : vector<32x32xf32> to vector<32x1xf32>
    %159 = vector.broadcast %158 : vector<32x1xf32> to vector<32x64xf32>
    %160 = arith.mulf %157, %159 : vector<32x64xf32>
    %c0_61 = arith.constant 0 : index
    %c12 = arith.constant 12 : index
    %c0_62 = arith.constant 0 : index
    %c0_63 = arith.constant 0 : index
    %161 = vector.load %arg5[%c0_61, %c12, %c0_62, %c0_63] : memref<1x32x32x64xf32, #tpu.memory_space<vmem>>, vector<1x1x32x64xf32>
    %162 = vector.shape_cast %161 : vector<1x1x32x64xf32> to vector<32x64xf32>
    %163 = vector.shape_cast %160 : vector<32x64xf32> to vector<1x1x32x64xf32>
    tpu.vector_store %arg5[%c0_61, %c12, %c0_62, %c0_63], %163 {strides = array<i32>} : memref<1x32x32x64xf32, #tpu.memory_space<vmem>>, vector<1x1x32x64xf32>,
    %164 = vector.extract_strided_slice %29 {offsets = [13, 0, 0], sizes = [1, 32, 64], strides = [1, 1, 1]} : vector<32x32x64xf32> to vector<1x32x64xf32>
    %165 = vector.shape_cast %164 : vector<1x32x64xf32> to vector<32x64xf32>
    %166 = vector.extract_strided_slice %59 {offsets = [0, 13], sizes = [32, 1], strides = [1, 1]} : vector<32x32xf32> to vector<32x1xf32>
    %167 = vector.broadcast %166 : vector<32x1xf32> to vector<32x64xf32>
    %168 = arith.mulf %165, %167 : vector<32x64xf32>
    %c0_64 = arith.constant 0 : index
    %c13 = arith.constant 13 : index
    %c0_65 = arith.constant 0 : index
    %c0_66 = arith.constant 0 : index
    %169 = vector.load %arg5[%c0_64, %c13, %c0_65, %c0_66] : memref<1x32x32x64xf32, #tpu.memory_space<vmem>>, vector<1x1x32x64xf32>
    %170 = vector.shape_cast %169 : vector<1x1x32x64xf32> to vector<32x64xf32>
    %171 = vector.shape_cast %168 : vector<32x64xf32> to vector<1x1x32x64xf32>
    tpu.vector_store %arg5[%c0_64, %c13, %c0_65, %c0_66], %171 {strides = array<i32>} : memref<1x32x32x64xf32, #tpu.memory_space<vmem>>, vector<1x1x32x64xf32>,
    %172 = vector.extract_strided_slice %29 {offsets = [14, 0, 0], sizes = [1, 32, 64], strides = [1, 1, 1]} : vector<32x32x64xf32> to vector<1x32x64xf32>
    %173 = vector.shape_cast %172 : vector<1x32x64xf32> to vector<32x64xf32>
    %174 = vector.extract_strided_slice %59 {offsets = [0, 14], sizes = [32, 1], strides = [1, 1]} : vector<32x32xf32> to vector<32x1xf32>
    %175 = vector.broadcast %174 : vector<32x1xf32> to vector<32x64xf32>
    %176 = arith.mulf %173, %175 : vector<32x64xf32>
    %c0_67 = arith.constant 0 : index
    %c14 = arith.constant 14 : index
    %c0_68 = arith.constant 0 : index
    %c0_69 = arith.constant 0 : index
    %177 = vector.load %arg5[%c0_67, %c14, %c0_68, %c0_69] : memref<1x32x32x64xf32, #tpu.memory_space<vmem>>, vector<1x1x32x64xf32>
    %178 = vector.shape_cast %177 : vector<1x1x32x64xf32> to vector<32x64xf32>
    %179 = vector.shape_cast %176 : vector<32x64xf32> to vector<1x1x32x64xf32>
    tpu.vector_store %arg5[%c0_67, %c14, %c0_68, %c0_69], %179 {strides = array<i32>} : memref<1x32x32x64xf32, #tpu.memory_space<vmem>>, vector<1x1x32x64xf32>,
    %180 = vector.extract_strided_slice %29 {offsets = [15, 0, 0], sizes = [1, 32, 64], strides = [1, 1, 1]} : vector<32x32x64xf32> to vector<1x32x64xf32>
    %181 = vector.shape_cast %180 : vector<1x32x64xf32> to vector<32x64xf32>
    %182 = vector.extract_strided_slice %59 {offsets = [0, 15], sizes = [32, 1], strides = [1, 1]} : vector<32x32xf32> to vector<32x1xf32>
    %183 = vector.broadcast %182 : vector<32x1xf32> to vector<32x64xf32>
    %184 = arith.mulf %181, %183 : vector<32x64xf32>
    %c0_70 = arith.constant 0 : index
    %c15 = arith.constant 15 : index
    %c0_71 = arith.constant 0 : index
    %c0_72 = arith.constant 0 : index
    %185 = vector.load %arg5[%c0_70, %c15, %c0_71, %c0_72] : memref<1x32x32x64xf32, #tpu.memory_space<vmem>>, vector<1x1x32x64xf32>
    %186 = vector.shape_cast %185 : vector<1x1x32x64xf32> to vector<32x64xf32>
    %187 = vector.shape_cast %184 : vector<32x64xf32> to vector<1x1x32x64xf32>
    tpu.vector_store %arg5[%c0_70, %c15, %c0_71, %c0_72], %187 {strides = array<i32>} : memref<1x32x32x64xf32, #tpu.memory_space<vmem>>, vector<1x1x32x64xf32>,
    %188 = vector.extract_strided_slice %29 {offsets = [16, 0, 0], sizes = [1, 32, 64], strides = [1, 1, 1]} : vector<32x32x64xf32> to vector<1x32x64xf32>
    %189 = vector.shape_cast %188 : vector<1x32x64xf32> to vector<32x64xf32>
    %190 = vector.extract_strided_slice %59 {offsets = [0, 16], sizes = [32, 1], strides = [1, 1]} : vector<32x32xf32> to vector<32x1xf32>
    %191 = vector.broadcast %190 : vector<32x1xf32> to vector<32x64xf32>
    %192 = arith.mulf %189, %191 : vector<32x64xf32>
    %c0_73 = arith.constant 0 : index
    %c16 = arith.constant 16 : index
    %c0_74 = arith.constant 0 : index
    %c0_75 = arith.constant 0 : index
    %193 = vector.load %arg5[%c0_73, %c16, %c0_74, %c0_75] : memref<1x32x32x64xf32, #tpu.memory_space<vmem>>, vector<1x1x32x64xf32>
    %194 = vector.shape_cast %193 : vector<1x1x32x64xf32> to vector<32x64xf32>
    %195 = vector.shape_cast %192 : vector<32x64xf32> to vector<1x1x32x64xf32>
    tpu.vector_store %arg5[%c0_73, %c16, %c0_74, %c0_75], %195 {strides = array<i32>} : memref<1x32x32x64xf32, #tpu.memory_space<vmem>>, vector<1x1x32x64xf32>,
    %196 = vector.extract_strided_slice %29 {offsets = [17, 0, 0], sizes = [1, 32, 64], strides = [1, 1, 1]} : vector<32x32x64xf32> to vector<1x32x64xf32>
    %197 = vector.shape_cast %196 : vector<1x32x64xf32> to vector<32x64xf32>
    %198 = vector.extract_strided_slice %59 {offsets = [0, 17], sizes = [32, 1], strides = [1, 1]} : vector<32x32xf32> to vector<32x1xf32>
    %199 = vector.broadcast %198 : vector<32x1xf32> to vector<32x64xf32>
    %200 = arith.mulf %197, %199 : vector<32x64xf32>
    %c0_76 = arith.constant 0 : index
    %c17 = arith.constant 17 : index
    %c0_77 = arith.constant 0 : index
    %c0_78 = arith.constant 0 : index
    %201 = vector.load %arg5[%c0_76, %c17, %c0_77, %c0_78] : memref<1x32x32x64xf32, #tpu.memory_space<vmem>>, vector<1x1x32x64xf32>
    %202 = vector.shape_cast %201 : vector<1x1x32x64xf32> to vector<32x64xf32>
    %203 = vector.shape_cast %200 : vector<32x64xf32> to vector<1x1x32x64xf32>
    tpu.vector_store %arg5[%c0_76, %c17, %c0_77, %c0_78], %203 {strides = array<i32>} : memref<1x32x32x64xf32, #tpu.memory_space<vmem>>, vector<1x1x32x64xf32>,
    %204 = vector.extract_strided_slice %29 {offsets = [18, 0, 0], sizes = [1, 32, 64], strides = [1, 1, 1]} : vector<32x32x64xf32> to vector<1x32x64xf32>
    %205 = vector.shape_cast %204 : vector<1x32x64xf32> to vector<32x64xf32>
    %206 = vector.extract_strided_slice %59 {offsets = [0, 18], sizes = [32, 1], strides = [1, 1]} : vector<32x32xf32> to vector<32x1xf32>
    %207 = vector.broadcast %206 : vector<32x1xf32> to vector<32x64xf32>
    %208 = arith.mulf %205, %207 : vector<32x64xf32>
    %c0_79 = arith.constant 0 : index
    %c18 = arith.constant 18 : index
    %c0_80 = arith.constant 0 : index
    %c0_81 = arith.constant 0 : index
    %209 = vector.load %arg5[%c0_79, %c18, %c0_80, %c0_81] : memref<1x32x32x64xf32, #tpu.memory_space<vmem>>, vector<1x1x32x64xf32>
    %210 = vector.shape_cast %209 : vector<1x1x32x64xf32> to vector<32x64xf32>
    %211 = vector.shape_cast %208 : vector<32x64xf32> to vector<1x1x32x64xf32>
    tpu.vector_store %arg5[%c0_79, %c18, %c0_80, %c0_81], %211 {strides = array<i32>} : memref<1x32x32x64xf32, #tpu.memory_space<vmem>>, vector<1x1x32x64xf32>,
    %212 = vector.extract_strided_slice %29 {offsets = [19, 0, 0], sizes = [1, 32, 64], strides = [1, 1, 1]} : vector<32x32x64xf32> to vector<1x32x64xf32>
    %213 = vector.shape_cast %212 : vector<1x32x64xf32> to vector<32x64xf32>
    %214 = vector.extract_strided_slice %59 {offsets = [0, 19], sizes = [32, 1], strides = [1, 1]} : vector<32x32xf32> to vector<32x1xf32>
    %215 = vector.broadcast %214 : vector<32x1xf32> to vector<32x64xf32>
    %216 = arith.mulf %213, %215 : vector<32x64xf32>
    %c0_82 = arith.constant 0 : index
    %c19 = arith.constant 19 : index
    %c0_83 = arith.constant 0 : index
    %c0_84 = arith.constant 0 : index
    %217 = vector.load %arg5[%c0_82, %c19, %c0_83, %c0_84] : memref<1x32x32x64xf32, #tpu.memory_space<vmem>>, vector<1x1x32x64xf32>
    %218 = vector.shape_cast %217 : vector<1x1x32x64xf32> to vector<32x64xf32>
    %219 = vector.shape_cast %216 : vector<32x64xf32> to vector<1x1x32x64xf32>
    tpu.vector_store %arg5[%c0_82, %c19, %c0_83, %c0_84], %219 {strides = array<i32>} : memref<1x32x32x64xf32, #tpu.memory_space<vmem>>, vector<1x1x32x64xf32>,
    %220 = vector.extract_strided_slice %29 {offsets = [20, 0, 0], sizes = [1, 32, 64], strides = [1, 1, 1]} : vector<32x32x64xf32> to vector<1x32x64xf32>
    %221 = vector.shape_cast %220 : vector<1x32x64xf32> to vector<32x64xf32>
    %222 = vector.extract_strided_slice %59 {offsets = [0, 20], sizes = [32, 1], strides = [1, 1]} : vector<32x32xf32> to vector<32x1xf32>
    %223 = vector.broadcast %222 : vector<32x1xf32> to vector<32x64xf32>
    %224 = arith.mulf %221, %223 : vector<32x64xf32>
    %c0_85 = arith.constant 0 : index
    %c20 = arith.constant 20 : index
    %c0_86 = arith.constant 0 : index
    %c0_87 = arith.constant 0 : index
    %225 = vector.load %arg5[%c0_85, %c20, %c0_86, %c0_87] : memref<1x32x32x64xf32, #tpu.memory_space<vmem>>, vector<1x1x32x64xf32>
    %226 = vector.shape_cast %225 : vector<1x1x32x64xf32> to vector<32x64xf32>
    %227 = vector.shape_cast %224 : vector<32x64xf32> to vector<1x1x32x64xf32>
    tpu.vector_store %arg5[%c0_85, %c20, %c0_86, %c0_87], %227 {strides = array<i32>} : memref<1x32x32x64xf32, #tpu.memory_space<vmem>>, vector<1x1x32x64xf32>,
    %228 = vector.extract_strided_slice %29 {offsets = [21, 0, 0], sizes = [1, 32, 64], strides = [1, 1, 1]} : vector<32x32x64xf32> to vector<1x32x64xf32>
    %229 = vector.shape_cast %228 : vector<1x32x64xf32> to vector<32x64xf32>
    %230 = vector.extract_strided_slice %59 {offsets = [0, 21], sizes = [32, 1], strides = [1, 1]} : vector<32x32xf32> to vector<32x1xf32>
    %231 = vector.broadcast %230 : vector<32x1xf32> to vector<32x64xf32>
    %232 = arith.mulf %229, %231 : vector<32x64xf32>
    %c0_88 = arith.constant 0 : index
    %c21 = arith.constant 21 : index
    %c0_89 = arith.constant 0 : index
    %c0_90 = arith.constant 0 : index
    %233 = vector.load %arg5[%c0_88, %c21, %c0_89, %c0_90] : memref<1x32x32x64xf32, #tpu.memory_space<vmem>>, vector<1x1x32x64xf32>
    %234 = vector.shape_cast %233 : vector<1x1x32x64xf32> to vector<32x64xf32>
    %235 = vector.shape_cast %232 : vector<32x64xf32> to vector<1x1x32x64xf32>
    tpu.vector_store %arg5[%c0_88, %c21, %c0_89, %c0_90], %235 {strides = array<i32>} : memref<1x32x32x64xf32, #tpu.memory_space<vmem>>, vector<1x1x32x64xf32>,
    %236 = vector.extract_strided_slice %29 {offsets = [22, 0, 0], sizes = [1, 32, 64], strides = [1, 1, 1]} : vector<32x32x64xf32> to vector<1x32x64xf32>
    %237 = vector.shape_cast %236 : vector<1x32x64xf32> to vector<32x64xf32>
    %238 = vector.extract_strided_slice %59 {offsets = [0, 22], sizes = [32, 1], strides = [1, 1]} : vector<32x32xf32> to vector<32x1xf32>
    %239 = vector.broadcast %238 : vector<32x1xf32> to vector<32x64xf32>
    %240 = arith.mulf %237, %239 : vector<32x64xf32>
    %c0_91 = arith.constant 0 : index
    %c22 = arith.constant 22 : index
    %c0_92 = arith.constant 0 : index
    %c0_93 = arith.constant 0 : index
    %241 = vector.load %arg5[%c0_91, %c22, %c0_92, %c0_93] : memref<1x32x32x64xf32, #tpu.memory_space<vmem>>, vector<1x1x32x64xf32>
    %242 = vector.shape_cast %241 : vector<1x1x32x64xf32> to vector<32x64xf32>
    %243 = vector.shape_cast %240 : vector<32x64xf32> to vector<1x1x32x64xf32>
    tpu.vector_store %arg5[%c0_91, %c22, %c0_92, %c0_93], %243 {strides = array<i32>} : memref<1x32x32x64xf32, #tpu.memory_space<vmem>>, vector<1x1x32x64xf32>,
    %244 = vector.extract_strided_slice %29 {offsets = [23, 0, 0], sizes = [1, 32, 64], strides = [1, 1, 1]} : vector<32x32x64xf32> to vector<1x32x64xf32>
    %245 = vector.shape_cast %244 : vector<1x32x64xf32> to vector<32x64xf32>
    %246 = vector.extract_strided_slice %59 {offsets = [0, 23], sizes = [32, 1], strides = [1, 1]} : vector<32x32xf32> to vector<32x1xf32>
    %247 = vector.broadcast %246 : vector<32x1xf32> to vector<32x64xf32>
    %248 = arith.mulf %245, %247 : vector<32x64xf32>
    %c0_94 = arith.constant 0 : index
    %c23 = arith.constant 23 : index
    %c0_95 = arith.constant 0 : index
    %c0_96 = arith.constant 0 : index
    %249 = vector.load %arg5[%c0_94, %c23, %c0_95, %c0_96] : memref<1x32x32x64xf32, #tpu.memory_space<vmem>>, vector<1x1x32x64xf32>
    %250 = vector.shape_cast %249 : vector<1x1x32x64xf32> to vector<32x64xf32>
    %251 = vector.shape_cast %248 : vector<32x64xf32> to vector<1x1x32x64xf32>
    tpu.vector_store %arg5[%c0_94, %c23, %c0_95, %c0_96], %251 {strides = array<i32>} : memref<1x32x32x64xf32, #tpu.memory_space<vmem>>, vector<1x1x32x64xf32>,
    %252 = vector.extract_strided_slice %29 {offsets = [24, 0, 0], sizes = [1, 32, 64], strides = [1, 1, 1]} : vector<32x32x64xf32> to vector<1x32x64xf32>
    %253 = vector.shape_cast %252 : vector<1x32x64xf32> to vector<32x64xf32>
    %254 = vector.extract_strided_slice %59 {offsets = [0, 24], sizes = [32, 1], strides = [1, 1]} : vector<32x32xf32> to vector<32x1xf32>
    %255 = vector.broadcast %254 : vector<32x1xf32> to vector<32x64xf32>
    %256 = arith.mulf %253, %255 : vector<32x64xf32>
    %c0_97 = arith.constant 0 : index
    %c24 = arith.constant 24 : index
    %c0_98 = arith.constant 0 : index
    %c0_99 = arith.constant 0 : index
    %257 = vector.load %arg5[%c0_97, %c24, %c0_98, %c0_99] : memref<1x32x32x64xf32, #tpu.memory_space<vmem>>, vector<1x1x32x64xf32>
    %258 = vector.shape_cast %257 : vector<1x1x32x64xf32> to vector<32x64xf32>
    %259 = vector.shape_cast %256 : vector<32x64xf32> to vector<1x1x32x64xf32>
    tpu.vector_store %arg5[%c0_97, %c24, %c0_98, %c0_99], %259 {strides = array<i32>} : memref<1x32x32x64xf32, #tpu.memory_space<vmem>>, vector<1x1x32x64xf32>,
    %260 = vector.extract_strided_slice %29 {offsets = [25, 0, 0], sizes = [1, 32, 64], strides = [1, 1, 1]} : vector<32x32x64xf32> to vector<1x32x64xf32>
    %261 = vector.shape_cast %260 : vector<1x32x64xf32> to vector<32x64xf32>
    %262 = vector.extract_strided_slice %59 {offsets = [0, 25], sizes = [32, 1], strides = [1, 1]} : vector<32x32xf32> to vector<32x1xf32>
    %263 = vector.broadcast %262 : vector<32x1xf32> to vector<32x64xf32>
    %264 = arith.mulf %261, %263 : vector<32x64xf32>
    %c0_100 = arith.constant 0 : index
    %c25 = arith.constant 25 : index
    %c0_101 = arith.constant 0 : index
    %c0_102 = arith.constant 0 : index
    %265 = vector.load %arg5[%c0_100, %c25, %c0_101, %c0_102] : memref<1x32x32x64xf32, #tpu.memory_space<vmem>>, vector<1x1x32x64xf32>
    %266 = vector.shape_cast %265 : vector<1x1x32x64xf32> to vector<32x64xf32>
    %267 = vector.shape_cast %264 : vector<32x64xf32> to vector<1x1x32x64xf32>
    tpu.vector_store %arg5[%c0_100, %c25, %c0_101, %c0_102], %267 {strides = array<i32>} : memref<1x32x32x64xf32, #tpu.memory_space<vmem>>, vector<1x1x32x64xf32>,
    %268 = vector.extract_strided_slice %29 {offsets = [26, 0, 0], sizes = [1, 32, 64], strides = [1, 1, 1]} : vector<32x32x64xf32> to vector<1x32x64xf32>
    %269 = vector.shape_cast %268 : vector<1x32x64xf32> to vector<32x64xf32>
    %270 = vector.extract_strided_slice %59 {offsets = [0, 26], sizes = [32, 1], strides = [1, 1]} : vector<32x32xf32> to vector<32x1xf32>
    %271 = vector.broadcast %270 : vector<32x1xf32> to vector<32x64xf32>
    %272 = arith.mulf %269, %271 : vector<32x64xf32>
    %c0_103 = arith.constant 0 : index
    %c26 = arith.constant 26 : index
    %c0_104 = arith.constant 0 : index
    %c0_105 = arith.constant 0 : index
    %273 = vector.load %arg5[%c0_103, %c26, %c0_104, %c0_105] : memref<1x32x32x64xf32, #tpu.memory_space<vmem>>, vector<1x1x32x64xf32>
    %274 = vector.shape_cast %273 : vector<1x1x32x64xf32> to vector<32x64xf32>
    %275 = vector.shape_cast %272 : vector<32x64xf32> to vector<1x1x32x64xf32>
    tpu.vector_store %arg5[%c0_103, %c26, %c0_104, %c0_105], %275 {strides = array<i32>} : memref<1x32x32x64xf32, #tpu.memory_space<vmem>>, vector<1x1x32x64xf32>,
    %276 = vector.extract_strided_slice %29 {offsets = [27, 0, 0], sizes = [1, 32, 64], strides = [1, 1, 1]} : vector<32x32x64xf32> to vector<1x32x64xf32>
    %277 = vector.shape_cast %276 : vector<1x32x64xf32> to vector<32x64xf32>
    %278 = vector.extract_strided_slice %59 {offsets = [0, 27], sizes = [32, 1], strides = [1, 1]} : vector<32x32xf32> to vector<32x1xf32>
    %279 = vector.broadcast %278 : vector<32x1xf32> to vector<32x64xf32>
    %280 = arith.mulf %277, %279 : vector<32x64xf32>
    %c0_106 = arith.constant 0 : index
    %c27 = arith.constant 27 : index
    %c0_107 = arith.constant 0 : index
    %c0_108 = arith.constant 0 : index
    %281 = vector.load %arg5[%c0_106, %c27, %c0_107, %c0_108] : memref<1x32x32x64xf32, #tpu.memory_space<vmem>>, vector<1x1x32x64xf32>
    %282 = vector.shape_cast %281 : vector<1x1x32x64xf32> to vector<32x64xf32>
    %283 = vector.shape_cast %280 : vector<32x64xf32> to vector<1x1x32x64xf32>
    tpu.vector_store %arg5[%c0_106, %c27, %c0_107, %c0_108], %283 {strides = array<i32>} : memref<1x32x32x64xf32, #tpu.memory_space<vmem>>, vector<1x1x32x64xf32>,
    %284 = vector.extract_strided_slice %29 {offsets = [28, 0, 0], sizes = [1, 32, 64], strides = [1, 1, 1]} : vector<32x32x64xf32> to vector<1x32x64xf32>
    %285 = vector.shape_cast %284 : vector<1x32x64xf32> to vector<32x64xf32>
    %286 = vector.extract_strided_slice %59 {offsets = [0, 28], sizes = [32, 1], strides = [1, 1]} : vector<32x32xf32> to vector<32x1xf32>
    %287 = vector.broadcast %286 : vector<32x1xf32> to vector<32x64xf32>
    %288 = arith.mulf %285, %287 : vector<32x64xf32>
    %c0_109 = arith.constant 0 : index
    %c28 = arith.constant 28 : index
    %c0_110 = arith.constant 0 : index
    %c0_111 = arith.constant 0 : index
    %289 = vector.load %arg5[%c0_109, %c28, %c0_110, %c0_111] : memref<1x32x32x64xf32, #tpu.memory_space<vmem>>, vector<1x1x32x64xf32>
    %290 = vector.shape_cast %289 : vector<1x1x32x64xf32> to vector<32x64xf32>
    %291 = vector.shape_cast %288 : vector<32x64xf32> to vector<1x1x32x64xf32>
    tpu.vector_store %arg5[%c0_109, %c28, %c0_110, %c0_111], %291 {strides = array<i32>} : memref<1x32x32x64xf32, #tpu.memory_space<vmem>>, vector<1x1x32x64xf32>,
    %292 = vector.extract_strided_slice %29 {offsets = [29, 0, 0], sizes = [1, 32, 64], strides = [1, 1, 1]} : vector<32x32x64xf32> to vector<1x32x64xf32>
    %293 = vector.shape_cast %292 : vector<1x32x64xf32> to vector<32x64xf32>
    %294 = vector.extract_strided_slice %59 {offsets = [0, 29], sizes = [32, 1], strides = [1, 1]} : vector<32x32xf32> to vector<32x1xf32>
    %295 = vector.broadcast %294 : vector<32x1xf32> to vector<32x64xf32>
    %296 = arith.mulf %293, %295 : vector<32x64xf32>
    %c0_112 = arith.constant 0 : index
    %c29 = arith.constant 29 : index
    %c0_113 = arith.constant 0 : index
    %c0_114 = arith.constant 0 : index
    %297 = vector.load %arg5[%c0_112, %c29, %c0_113, %c0_114] : memref<1x32x32x64xf32, #tpu.memory_space<vmem>>, vector<1x1x32x64xf32>
    %298 = vector.shape_cast %297 : vector<1x1x32x64xf32> to vector<32x64xf32>
    %299 = vector.shape_cast %296 : vector<32x64xf32> to vector<1x1x32x64xf32>
    tpu.vector_store %arg5[%c0_112, %c29, %c0_113, %c0_114], %299 {strides = array<i32>} : memref<1x32x32x64xf32, #tpu.memory_space<vmem>>, vector<1x1x32x64xf32>,
    %300 = vector.extract_strided_slice %29 {offsets = [30, 0, 0], sizes = [1, 32, 64], strides = [1, 1, 1]} : vector<32x32x64xf32> to vector<1x32x64xf32>
    %301 = vector.shape_cast %300 : vector<1x32x64xf32> to vector<32x64xf32>
    %302 = vector.extract_strided_slice %59 {offsets = [0, 30], sizes = [32, 1], strides = [1, 1]} : vector<32x32xf32> to vector<32x1xf32>
    %303 = vector.broadcast %302 : vector<32x1xf32> to vector<32x64xf32>
    %304 = arith.mulf %301, %303 : vector<32x64xf32>
    %c0_115 = arith.constant 0 : index
    %c30 = arith.constant 30 : index
    %c0_116 = arith.constant 0 : index
    %c0_117 = arith.constant 0 : index
    %305 = vector.load %arg5[%c0_115, %c30, %c0_116, %c0_117] : memref<1x32x32x64xf32, #tpu.memory_space<vmem>>, vector<1x1x32x64xf32>
    %306 = vector.shape_cast %305 : vector<1x1x32x64xf32> to vector<32x64xf32>
    %307 = vector.shape_cast %304 : vector<32x64xf32> to vector<1x1x32x64xf32>
    tpu.vector_store %arg5[%c0_115, %c30, %c0_116, %c0_117], %307 {strides = array<i32>} : memref<1x32x32x64xf32, #tpu.memory_space<vmem>>, vector<1x1x32x64xf32>,
    %308 = vector.extract_strided_slice %29 {offsets = [31, 0, 0], sizes = [1, 32, 64], strides = [1, 1, 1]} : vector<32x32x64xf32> to vector<1x32x64xf32>
    %309 = vector.shape_cast %308 : vector<1x32x64xf32> to vector<32x64xf32>
    %310 = vector.extract_strided_slice %59 {offsets = [0, 31], sizes = [32, 1], strides = [1, 1]} : vector<32x32xf32> to vector<32x1xf32>
    %311 = vector.broadcast %310 : vector<32x1xf32> to vector<32x64xf32>
    %312 = arith.mulf %309, %311 : vector<32x64xf32>
    %c0_118 = arith.constant 0 : index
    %c31 = arith.constant 31 : index
    %c0_119 = arith.constant 0 : index
    %c0_120 = arith.constant 0 : index
    %313 = vector.load %arg5[%c0_118, %c31, %c0_119, %c0_120] : memref<1x32x32x64xf32, #tpu.memory_space<vmem>>, vector<1x1x32x64xf32>
    %314 = vector.shape_cast %313 : vector<1x1x32x64xf32> to vector<32x64xf32>
    %315 = vector.shape_cast %312 : vector<32x64xf32> to vector<1x1x32x64xf32>
    tpu.vector_store %arg5[%c0_118, %c31, %c0_119, %c0_120], %315 {strides = array<i32>} : memref<1x32x32x64xf32, #tpu.memory_space<vmem>>, vector<1x1x32x64xf32>,
    return
  }
  func.func @transform_0(%arg0: i32) -> (i32, i32, i32, i32) {
    %c0_i32 = arith.constant 0 : i32
    %c0_i32_0 = arith.constant 0 : i32
    %c0_i32_1 = arith.constant 0 : i32
    %c0_i32_2 = arith.constant 0 : i32
    return %arg0, %c0_i32, %c0_i32_0, %c0_i32_1 : i32, i32, i32, i32
  }
  func.func @transform_1(%arg0: i32) -> (i32, i32) {
    %c0_i32 = arith.constant 0 : i32
    %c0_i32_0 = arith.constant 0 : i32
    %c0_i32_1 = arith.constant 0 : i32
    return %c0_i32, %c0_i32_0 : i32, i32
  }
  func.func @transform_2(%arg0: i32) -> (i32, i32) {
    %c0_i32 = arith.constant 0 : i32
    %c0_i32_0 = arith.constant 0 : i32
    %c0_i32_1 = arith.constant 0 : i32
    return %c0_i32, %c0_i32_0 : i32, i32
  }
  func.func @transform_3(%arg0: i32) -> (i32, i32) {
    %c0_i32 = arith.constant 0 : i32
    %c0_i32_0 = arith.constant 0 : i32
    %c0_i32_1 = arith.constant 0 : i32
    return %c0_i32, %c0_i32_0 : i32, i32
  }
  func.func @transform_4(%arg0: i32) -> (i32, i32, i32, i32) {
    %c0_i32 = arith.constant 0 : i32
    %c0_i32_0 = arith.constant 0 : i32
    %c0_i32_1 = arith.constant 0 : i32
    %c0_i32_2 = arith.constant 0 : i32
    return %arg0, %c0_i32, %c0_i32_0, %c0_i32_1 : i32, i32, i32, i32
  }
}

</mosaic_0001>

<llo_original>
// kernel: cbam_forward.1
$region0: #{cbam_forward.1}
  #allocation0 [shape = 'u32[]', space=smem, size = 0x4, offset = 0x4, fixed_abs, tag = 'smem constant byte address 0x4 - core index']
  #allocation1 [shape = 'u32[144,128]{1,0:T(1,128)}', space=vmem, size = 0x12000, scoped, tag = 'internal scratch']
  %s0 = inlined_call_operand.vmem [shape: f32[2,32,32,64], index: 0, kind: input, shape index: {}]
  %s1 = inlined_call_operand.vmem [shape: f32[64,4], index: 1, kind: input, shape index: {}]
  %s2 = inlined_call_operand.vmem [shape: f32[4,64], index: 2, kind: input, shape index: {}]
  %s3 = inlined_call_operand.vmem [shape: f32[448,32], index: 3, kind: input, shape index: {}]
  %s4 = inlined_call_operand.hbm [shape: f32[2,32,32,64], index: 4, kind: output, shape index: {}]
  %s5 = sld [smem:[#allocation0]]
  $region49: #{cbam_forward.1} parent=0
    _
  %s7 = ssub.s32 1, %s5
  %s8 = scalar_select 0, %s7, %s5
  $region1: #{cbam_forward.1} parent=0
    #allocation2 [shape = 'u8[1048576]{0}', space=vmem, size = 0x100000, scoped, tag = 'output window, operand 0']
    #allocation3 [shape = 's32[2]{0}', space=sflag, size = 0x8, scoped, tag = 'scoped memory for cbam_forward.1']
    %9 = vsyncpa [#allocation3], 0
    %s10 = scalar_lea.sflag [#allocation3], 1
    %11 = vsyncpa %s10, 0
    loop: start=0, step=1, limit=4
    $region2: #{cbam_forward.1} parent=1 // loop_pre_header
      _
    $region3: #{cbam_forward.1} parent=1 // loop_header
      %s13 = sphi 0, %s17
      %p14 = scmp.ge.s32.totalorder %s13, 4
      %s23 = sphi 0, %s25
      %s26 = sphi 0, %s23
      %s27 = sphi 0, %s26
      %s43 = sphi 0, %s27
      %s47 = sphi 0, %s47
      %s49 = sphi 0, %s47
      %s50 = sphi 0, %s49
      %s64 = sphi 0, %s50
      %s68 = sphi 0, %s68
      %s70 = sphi 0, %s68
      %s71 = sphi 0, %s70
      %s85 = sphi 0, %s71
      %s89 = sphi 0, %s89
      %s91 = sphi 0, %s89
      %s92 = sphi 0, %s91
      %s106 = sphi 0, %s92
      %s112 = sphi 0, %s114
      %s115 = sphi 0, %s112
      %s116 = sphi 0, %s115
      %s132 = sphi 0, %s116
    $region4: #{cbam_forward.1} parent=1 // loop_header_branch
      %16 = sbr.rel (%p14) target = $region8
    $region5: #{cbam_forward.1} parent=1 // loop_body
      %s18 = ssub.s32 %s13, 1
      %s19 = ssub.s32 %s13, 2
      %s20 = sadd.s32 %s13, 1
      %s21 = ssub.s32 %s13, %s20
      %p22 = scmp.eq.s32.totalorder %s21, 0
      %s24 = sadd.s32 %s23, 1
      %s25 = scalar_select %p22, %s23, %s24
      %p28 = pneg %p22
      %p29 = scmp.eq.s32.totalorder %s13, 1
      %p30 = por %p28, %p29
      %p31 = scmp.ne.s32.totalorder %s23, %s26
      %p32 = scmp.eq.s32.totalorder %s13, 0
      %p33 = por %p31, %p32
      %p34 = scmp.ne.s32.totalorder %s23, %s26
      %p35 = scmp.eq.s32.totalorder %s18, 1
      %p36 = por %p34, %p35
      %p37 = scmp.ne.s32.totalorder %s26, %s27
      %p38 = scmp.eq.s32.totalorder %s18, 0
      %p39 = por %p37, %p38
      %p40 = scmp.ne.s32.totalorder %s26, %s27
      %p41 = scmp.eq.s32.totalorder %s19, 1
      %p42 = por %p40, %p41
      %p44 = scmp.ne.s32.totalorder %s27, %s43
      %p45 = scmp.eq.s32.totalorder %s19, 0
      %p46 = por %p44, %p45
      %s48 = sadd.s32 %s47, 1
      %p51 = scmp.eq.s32.totalorder %s13, 1
      %p52 = scmp.ne.s32.totalorder %s47, %s49
      %p53 = scmp.eq.s32.totalorder %s13, 0
      %p54 = por %p52, %p53
      %p55 = scmp.ne.s32.totalorder %s47, %s49
      %p56 = scmp.eq.s32.totalorder %s18, 1
      %p57 = por %p55, %p56
      %p58 = scmp.ne.s32.totalorder %s49, %s50
      %p59 = scmp.eq.s32.totalorder %s18, 0
      %p60 = por %p58, %p59
      %p61 = scmp.ne.s32.totalorder %s49, %s50
      %p62 = scmp.eq.s32.totalorder %s19, 1
      %p63 = por %p61, %p62
      %p65 = scmp.ne.s32.totalorder %s50, %s64
      %p66 = scmp.eq.s32.totalorder %s19, 0
      %p67 = por %p65, %p66
      %s69 = sadd.s32 %s68, 1
      %p72 = scmp.eq.s32.totalorder %s13, 1
      %p73 = scmp.ne.s32.totalorder %s68, %s70
      %p74 = scmp.eq.s32.totalorder %s13, 0
      %p75 = por %p73, %p74
      %p76 = scmp.ne.s32.totalorder %s68, %s70
      %p77 = scmp.eq.s32.totalorder %s18, 1
      %p78 = por %p76, %p77
      %p79 = scmp.ne.s32.totalorder %s70, %s71
      %p80 = scmp.eq.s32.totalorder %s18, 0
      %p81 = por %p79, %p80
      %p82 = scmp.ne.s32.totalorder %s70, %s71
      %p83 = scmp.eq.s32.totalorder %s19, 1
      %p84 = por %p82, %p83
      %p86 = scmp.ne.s32.totalorder %s71, %s85
      %p87 = scmp.eq.s32.totalorder %s19, 0
      %p88 = por %p86, %p87
      %s90 = sadd.s32 %s89, 1
      %p93 = scmp.eq.s32.totalorder %s13, 1
      %p94 = scmp.ne.s32.totalorder %s89, %s91
      %p95 = scmp.eq.s32.totalorder %s13, 0
      %p96 = por %p94, %p95
      %p97 = scmp.ne.s32.totalorder %s89, %s91
      %p98 = scmp.eq.s32.totalorder %s18, 1
      %p99 = por %p97, %p98
      %p100 = scmp.ne.s32.totalorder %s91, %s92
      %p101 = scmp.eq.s32.totalorder %s18, 0
      %p102 = por %p100, %p101
      %p103 = scmp.ne.s32.totalorder %s91, %s92
      %p104 = scmp.eq.s32.totalorder %s19, 1
      %p105 = por %p103, %p104
      %p107 = scmp.ne.s32.totalorder %s92, %s106
      %p108 = scmp.eq.s32.totalorder %s19, 0
      %p109 = por %p107, %p108
      %s110 = ssub.s32 %s13, %s20
      %p111 = scmp.eq.s32.totalorder %s110, 0
      %s113 = sadd.s32 %s112, 1
      %s114 = scalar_select %p111, %s112, %s113
      %p117 = pneg %p111
      %p118 = scmp.eq.s32.totalorder %s13, 1
      %p119 = por %p117, %p118
      %p120 = scmp.ne.s32.totalorder %s112, %s115
      %p121 = scmp.eq.s32.totalorder %s13, 0
      %p122 = por %p120, %p121
      %p123 = scmp.ne.s32.totalorder %s112, %s115
      %p124 = scmp.eq.s32.totalorder %s18, 1
      %p125 = por %p123, %p124
      %p126 = scmp.ne.s32.totalorder %s115, %s116
      %p127 = scmp.eq.s32.totalorder %s18, 0
      %p128 = por %p126, %p127
      %p129 = scmp.ne.s32.totalorder %s115, %s116
      %p130 = scmp.eq.s32.totalorder %s19, 1
      %p131 = por %p129, %p130
      %p133 = scmp.ne.s32.totalorder %s116, %s132
      %p134 = scmp.eq.s32.totalorder %s19, 0
      %p135 = por %p133, %p134
      %p136 = scmp.le.s32.totalorder 1, %s13
      %p137 = scmp.lt.s32.totalorder %s13, 3
      %p138 = pnand %p136, %p137
      %p139 = pneg %p138
      // Predicated region
      $region9: #{cbam_forward.1} parent=5 // pred_check
        _
      $region10: #{cbam_forward.1} parent=5 // pred_check_branch
        %141 = sbr.rel (%p138) target = $region12
      $region11: #{cbam_forward.1} parent=5 // pred_region
        %s142 = ssub.s32 %s13, 1
        // Predicated region
        $region13: #{cbam_forward.1} parent=11 // pred_check
          %p143 = pneg %p60
        $region14: #{cbam_forward.1} parent=11 // pred_check_branch
          %145 = sbr.rel (%p143) target = $region16
        $region15: #{cbam_forward.1} parent=11 // pred_region
          _
        $region16: #{cbam_forward.1} parent=11 // pred_fallthru
          _
        // Predicated region
        $region17: #{cbam_forward.1} parent=11 // pred_check
          %p146 = pneg %p81
        $region18: #{cbam_forward.1} parent=11 // pred_check_branch
          %148 = sbr.rel (%p146) target = $region20
        $region19: #{cbam_forward.1} parent=11 // pred_region
          _
        $region20: #{cbam_forward.1} parent=11 // pred_fallthru
          _
        // Predicated region
        $region21: #{cbam_forward.1} parent=11 // pred_check
          %p149 = pneg %p102
        $region22: #{cbam_forward.1} parent=11 // pred_check_branch
          %151 = sbr.rel (%p149) target = $region24
        $region23: #{cbam_forward.1} parent=11 // pred_region
          _
        $region24: #{cbam_forward.1} parent=11 // pred_fallthru
          _
      $region12: #{cbam_forward.1} parent=5 // pred_fallthru
        _
      %p152 = scmp.lt.s32.totalorder %s13, 2
      // Predicated region
      $region25: #{cbam_forward.1} parent=5 // pred_check
        %p153 = pneg %p152
      $region26: #{cbam_forward.1} parent=5 // pred_check_branch
        %155 = sbr.rel (%p153) target = $region28
      $region27: #{cbam_forward.1} parent=5 // pred_region
        // Predicated region
        $region29: #{cbam_forward.1} parent=27 // pred_check
          %p156 = pneg %p33
        $region30: #{cbam_forward.1} parent=27 // pred_check_branch
          %158 = sbr.rel (%p156) target = $region32
        $region31: #{cbam_forward.1} parent=27 // pred_region
          %p159 = scmp.lt.s32.totalorder %s13, 1
          %s160 = scalar_select %p159, %s13, 1
          %s161 = smul.addr %s160, 128
          %s162 = smul.addr %s161, 8
          %s163 = scalar_lea.vmem %s0, %s162
        $region32: #{cbam_forward.1} parent=27 // pred_fallthru
          _
      $region28: #{cbam_forward.1} parent=5 // pred_fallthru
        _
      %p164 = scmp.le.s32.totalorder 1, %s13
      %p165 = scmp.lt.s32.totalorder %s13, 3
      %p166 = pnand %p164, %p165
      %p167 = pneg %p166
      // Predicated region
      $region33: #{cbam_forward.1} parent=5 // pred_check
        _
      $region34: #{cbam_forward.1} parent=5 // pred_check_branch
        %169 = sbr.rel (%p166) target = $region36
      $region35: #{cbam_forward.1} parent=5 // pred_region
        %s170 = ssub.s32 %s13, 1
        %p171 = scmp.lt.s32.totalorder %s18, 1
        %s172 = scalar_select %p171, %s18, 1
        %s173 = smul.addr %s172, 128
        %s174 = smul.addr %s173, 8
        %s175 = scalar_lea.vmem %s0, %s174
        %p176 = pneg %p39
        %p177 = pneg %p36
        %p178 = pneg %p60
        %p179 = pneg %p57
        %p180 = pneg %p81
        %p181 = pneg %p78
        %p182 = pneg %p102
        %p183 = pneg %p99
        %p184 = pneg %p128
        %p185 = pneg %p125
        %s186 = sand.u32 %s115, 1
        %s187 = scalar_lea.sflag [#allocation3], %s186
        %s188 = sand.u32 %s115, 1
        %s189 = smul.addr %s188, 1024
        %s190 = scalar_lea.vmem [#allocation2], %s189
        %p191 = scmp.lt.s32.totalorder %s18, 1
        %s192 = scalar_select %p191, %s18, 1
        %s193 = smul.addr %s192, 128
        %s194 = smul.addr %s193, 8
        %s195 = scalar_lea.vmem %s0, %s194
        %v196 = vld [vmem:[%s195] sm:$0xff]
        %v197 = vld [vmem:[%s195 + $0x8] sm:$0xff]
        %v198 = vld [vmem:[%s195 + $0x10] sm:$0xff]
        %v199 = vld [vmem:[%s195 + $0x18] sm:$0xff]
        %v200 = vld [vmem:[%s195 + $0x20] sm:$0xff]
        %v201 = vld [vmem:[%s195 + $0x28] sm:$0xff]
        %v202 = vld [vmem:[%s195 + $0x30] sm:$0xff]
        %v203 = vld [vmem:[%s195 + $0x38] sm:$0xff]
        %v204 = vld [vmem:[%s195 + $0x40] sm:$0xff]
        %v205 = vld [vmem:[%s195 + $0x48] sm:$0xff]
        %v206 = vld [vmem:[%s195 + $0x50] sm:$0xff]
        %v207 = vld [vmem:[%s195 + $0x58] sm:$0xff]
        %v208 = vld [vmem:[%s195 + $0x60] sm:$0xff]
        %v209 = vld [vmem:[%s195 + $0x68] sm:$0xff]
        %v210 = vld [vmem:[%s195 + $0x70] sm:$0xff]
        %v211 = vld [vmem:[%s195 + $0x78] sm:$0xff]
        %v212 = vld [vmem:[%s195 + $0x80] sm:$0xff]
        %v213 = vld [vmem:[%s195 + $0x88] sm:$0xff]
        %v214 = vld [vmem:[%s195 + $0x90] sm:$0xff]
        %v215 = vld [vmem:[%s195 + $0x98] sm:$0xff]
        %v216 = vld [vmem:[%s195 + $0xa0] sm:$0xff]
        %v217 = vld [vmem:[%s195 + $0xa8] sm:$0xff]
        %v218 = vld [vmem:[%s195 + $0xb0] sm:$0xff]
        %v219 = vld [vmem:[%s195 + $0xb8] sm:$0xff]
        %v220 = vld [vmem:[%s195 + $0xc0] sm:$0xff]
        %v221 = vld [vmem:[%s195 + $0xc8] sm:$0xff]
        %v222 = vld [vmem:[%s195 + $0xd0] sm:$0xff]
        %v223 = vld [vmem:[%s195 + $0xd8] sm:$0xff]
        %v224 = vld [vmem:[%s195 + $0xe0] sm:$0xff]
        %v225 = vld [vmem:[%s195 + $0xe8] sm:$0xff]
        %v226 = vld [vmem:[%s195 + $0xf0] sm:$0xff]
        %v227 = vld [vmem:[%s195 + $0xf8] sm:$0xff]
        %v228 = vld [vmem:[%s195 + $0x100] sm:$0xff]
        %v229 = vld [vmem:[%s195 + $0x108] sm:$0xff]
        %v230 = vld [vmem:[%s195 + $0x110] sm:$0xff]
        %v231 = vld [vmem:[%s195 + $0x118] sm:$0xff]
        %v232 = vld [vmem:[%s195 + $0x120] sm:$0xff]
        %v233 = vld [vmem:[%s195 + $0x128] sm:$0xff]
        %v234 = vld [vmem:[%s195 + $0x130] sm:$0xff]
        %v235 = vld [vmem:[%s195 + $0x138] sm:$0xff]
        %v236 = vld [vmem:[%s195 + $0x140] sm:$0xff]
        %v237 = vld [vmem:[%s195 + $0x148] sm:$0xff]
        %v238 = vld [vmem:[%s195 + $0x150] sm:$0xff]
        %v239 = vld [vmem:[%s195 + $0x158] sm:$0xff]
        %v240 = vld [vmem:[%s195 + $0x160] sm:$0xff]
        %v241 = vld [vmem:[%s195 + $0x168] sm:$0xff]
        %v242 = vld [vmem:[%s195 + $0x170] sm:$0xff]
        %v243 = vld [vmem:[%s195 + $0x178] sm:$0xff]
        %v244 = vld [vmem:[%s195 + $0x180] sm:$0xff]
        %v245 = vld [vmem:[%s195 + $0x188] sm:$0xff]
        %v246 = vld [vmem:[%s195 + $0x190] sm:$0xff]
        %v247 = vld [vmem:[%s195 + $0x198] sm:$0xff]
        %v248 = vld [vmem:[%s195 + $0x1a0] sm:$0xff]
        %v249 = vld [vmem:[%s195 + $0x1a8] sm:$0xff]
        %v250 = vld [vmem:[%s195 + $0x1b0] sm:$0xff]
        %v251 = vld [vmem:[%s195 + $0x1b8] sm:$0xff]
        %v252 = vld [vmem:[%s195 + $0x1c0] sm:$0xff]
        %v253 = vld [vmem:[%s195 + $0x1c8] sm:$0xff]
        %v254 = vld [vmem:[%s195 + $0x1d0] sm:$0xff]
        %v255 = vld [vmem:[%s195 + $0x1d8] sm:$0xff]
        %v256 = vld [vmem:[%s195 + $0x1e0] sm:$0xff]
        %v257 = vld [vmem:[%s195 + $0x1e8] sm:$0xff]
        %v258 = vld [vmem:[%s195 + $0x1f0] sm:$0xff]
        %v259 = vld [vmem:[%s195 + $0x1f8] sm:$0xff]
        %v260 = vld [vmem:[%s195 + $0x200] sm:$0xff]
        %v261 = vld [vmem:[%s195 + $0x208] sm:$0xff]
        %v262 = vld [vmem:[%s195 + $0x210] sm:$0xff]
        %v263 = vld [vmem:[%s195 + $0x218] sm:$0xff]
        %v264 = vld [vmem:[%s195 + $0x220] sm:$0xff]
        %v265 = vld [vmem:[%s195 + $0x228] sm:$0xff]
        %v266 = vld [vmem:[%s195 + $0x230] sm:$0xff]
        %v267 = vld [vmem:[%s195 + $0x238] sm:$0xff]
        %v268 = vld [vmem:[%s195 + $0x240] sm:$0xff]
        %v269 = vld [vmem:[%s195 + $0x248] sm:$0xff]
        %v270 = vld [vmem:[%s195 + $0x250] sm:$0xff]
        %v271 = vld [vmem:[%s195 + $0x258] sm:$0xff]
        %v272 = vld [vmem:[%s195 + $0x260] sm:$0xff]
        %v273 = vld [vmem:[%s195 + $0x268] sm:$0xff]
        %v274 = vld [vmem:[%s195 + $0x270] sm:$0xff]
        %v275 = vld [vmem:[%s195 + $0x278] sm:$0xff]
        %v276 = vld [vmem:[%s195 + $0x280] sm:$0xff]
        %v277 = vld [vmem:[%s195 + $0x288] sm:$0xff]
        %v278 = vld [vmem:[%s195 + $0x290] sm:$0xff]
        %v279 = vld [vmem:[%s195 + $0x298] sm:$0xff]
        %v280 = vld [vmem:[%s195 + $0x2a0] sm:$0xff]
        %v281 = vld [vmem:[%s195 + $0x2a8] sm:$0xff]
        %v282 = vld [vmem:[%s195 + $0x2b0] sm:$0xff]
        %v283 = vld [vmem:[%s195 + $0x2b8] sm:$0xff]
        %v284 = vld [vmem:[%s195 + $0x2c0] sm:$0xff]
        %v285 = vld [vmem:[%s195 + $0x2c8] sm:$0xff]
        %v286 = vld [vmem:[%s195 + $0x2d0] sm:$0xff]
        %v287 = vld [vmem:[%s195 + $0x2d8] sm:$0xff]
        %v288 = vld [vmem:[%s195 + $0x2e0] sm:$0xff]
        %v289 = vld [vmem:[%s195 + $0x2e8] sm:$0xff]
        %v290 = vld [vmem:[%s195 + $0x2f0] sm:$0xff]
        %v291 = vld [vmem:[%s195 + $0x2f8] sm:$0xff]
        %v292 = vld [vmem:[%s195 + $0x300] sm:$0xff]
        %v293 = vld [vmem:[%s195 + $0x308] sm:$0xff]
        %v294 = vld [vmem:[%s195 + $0x310] sm:$0xff]
        %v295 = vld [vmem:[%s195 + $0x318] sm:$0xff]
        %v296 = vld [vmem:[%s195 + $0x320] sm:$0xff]
        %v297 = vld [vmem:[%s195 + $0x328] sm:$0xff]
        %v298 = vld [vmem:[%s195 + $0x330] sm:$0xff]
        %v299 = vld [vmem:[%s195 + $0x338] sm:$0xff]
        %v300 = vld [vmem:[%s195 + $0x340] sm:$0xff]
        %v301 = vld [vmem:[%s195 + $0x348] sm:$0xff]
        %v302 = vld [vmem:[%s195 + $0x350] sm:$0xff]
        %v303 = vld [vmem:[%s195 + $0x358] sm:$0xff]
        %v304 = vld [vmem:[%s195 + $0x360] sm:$0xff]
        %v305 = vld [vmem:[%s195 + $0x368] sm:$0xff]
        %v306 = vld [vmem:[%s195 + $0x370] sm:$0xff]
        %v307 = vld [vmem:[%s195 + $0x378] sm:$0xff]
        %v308 = vld [vmem:[%s195 + $0x380] sm:$0xff]
        %v309 = vld [vmem:[%s195 + $0x388] sm:$0xff]
        %v310 = vld [vmem:[%s195 + $0x390] sm:$0xff]
        %v311 = vld [vmem:[%s195 + $0x398] sm:$0xff]
        %v312 = vld [vmem:[%s195 + $0x3a0] sm:$0xff]
        %v313 = vld [vmem:[%s195 + $0x3a8] sm:$0xff]
        %v314 = vld [vmem:[%s195 + $0x3b0] sm:$0xff]
        %v315 = vld [vmem:[%s195 + $0x3b8] sm:$0xff]
        %v316 = vld [vmem:[%s195 + $0x3c0] sm:$0xff]
        %v317 = vld [vmem:[%s195 + $0x3c8] sm:$0xff]
        %v318 = vld [vmem:[%s195 + $0x3d0] sm:$0xff]
        %v319 = vld [vmem:[%s195 + $0x3d8] sm:$0xff]
        %v320 = vld [vmem:[%s195 + $0x3e0] sm:$0xff]
        %v321 = vld [vmem:[%s195 + $0x3e8] sm:$0xff]
        %v322 = vld [vmem:[%s195 + $0x3f0] sm:$0xff]
        %v323 = vld [vmem:[%s195 + $0x3f8] sm:$0xff]
        %vm324 = vcmask 523264
        %v325 = vsel %vm324, %v196, 0.0
        %v326 = vsel %vm324, %v200, 0.0
        %v327 = vadd.f32 %v325, %v326
        %v328 = vsel %vm324, %v204, 0.0
        %v329 = vadd.f32 %v327, %v328
        %v330 = vsel %vm324, %v208, 0.0
        %v331 = vadd.f32 %v329, %v330
        %v332 = vsel %vm324, %v212, 0.0
        %v333 = vadd.f32 %v331, %v332
        %v334 = vsel %vm324, %v216, 0.0
        %v335 = vadd.f32 %v333, %v334
        %v336 = vsel %vm324, %v220, 0.0
        %v337 = vadd.f32 %v335, %v336
        %v338 = vsel %vm324, %v224, 0.0
        %v339 = vadd.f32 %v337, %v338
        %v340 = vsel %vm324, %v228, 0.0
        %v341 = vadd.f32 %v339, %v340
        %v342 = vsel %vm324, %v232, 0.0
        %v343 = vadd.f32 %v341, %v342
        %v344 = vsel %vm324, %v236, 0.0
        %v345 = vadd.f32 %v343, %v344
        %v346 = vsel %vm324, %v240, 0.0
        %v347 = vadd.f32 %v345, %v346
        %v348 = vsel %vm324, %v244, 0.0
        %v349 = vadd.f32 %v347, %v348
        %v350 = vsel %vm324, %v248, 0.0
        %v351 = vadd.f32 %v349, %v350
        %v352 = vsel %vm324, %v252, 0.0
        %v353 = vadd.f32 %v351, %v352
        %v354 = vsel %vm324, %v256, 0.0
        %v355 = vadd.f32 %v353, %v354
        %v356 = vsel %vm324, %v260, 0.0
        %v357 = vadd.f32 %v355, %v356
        %v358 = vsel %vm324, %v264, 0.0
        %v359 = vadd.f32 %v357, %v358
        %v360 = vsel %vm324, %v268, 0.0
        %v361 = vadd.f32 %v359, %v360
        %v362 = vsel %vm324, %v272, 0.0
        %v363 = vadd.f32 %v361, %v362
        %v364 = vsel %vm324, %v276, 0.0
        %v365 = vadd.f32 %v363, %v364
        %v366 = vsel %vm324, %v280, 0.0
        %v367 = vadd.f32 %v365, %v366
        %v368 = vsel %vm324, %v284, 0.0
        %v369 = vadd.f32 %v367, %v368
        %v370 = vsel %vm324, %v288, 0.0
        %v371 = vadd.f32 %v369, %v370
        %v372 = vsel %vm324, %v292, 0.0
        %v373 = vadd.f32 %v371, %v372
        %v374 = vsel %vm324, %v296, 0.0
        %v375 = vadd.f32 %v373, %v374
        %v376 = vsel %vm324, %v300, 0.0
        %v377 = vadd.f32 %v375, %v376
        %v378 = vsel %vm324, %v304, 0.0
        %v379 = vadd.f32 %v377, %v378
        %v380 = vsel %vm324, %v308, 0.0
        %v381 = vadd.f32 %v379, %v380
        %v382 = vsel %vm324, %v312, 0.0
        %v383 = vadd.f32 %v381, %v382
        %v384 = vsel %vm324, %v316, 0.0
        %v385 = vadd.f32 %v383, %v384
        %v386 = vsel %vm324, %v320, 0.0
        %v387 = vadd.f32 %v385, %v386
        %v388 = vsel %vm324, %v197, 0.0
        %v389 = vsel %vm324, %v201, 0.0
        %v390 = vadd.f32 %v388, %v389
        %v391 = vsel %vm324, %v205, 0.0
        %v392 = vadd.f32 %v390, %v391
        %v393 = vsel %vm324, %v209, 0.0
        %v394 = vadd.f32 %v392, %v393
        %v395 = vsel %vm324, %v213, 0.0
        %v396 = vadd.f32 %v394, %v395
        %v397 = vsel %vm324, %v217, 0.0
        %v398 = vadd.f32 %v396, %v397
        %v399 = vsel %vm324, %v221, 0.0
        %v400 = vadd.f32 %v398, %v399
        %v401 = vsel %vm324, %v225, 0.0
        %v402 = vadd.f32 %v400, %v401
        %v403 = vsel %vm324, %v229, 0.0
        %v404 = vadd.f32 %v402, %v403
        %v405 = vsel %vm324, %v233, 0.0
        %v406 = vadd.f32 %v404, %v405
        %v407 = vsel %vm324, %v237, 0.0
        %v408 = vadd.f32 %v406, %v407
        %v409 = vsel %vm324, %v241, 0.0
        %v410 = vadd.f32 %v408, %v409
        %v411 = vsel %vm324, %v245, 0.0
        %v412 = vadd.f32 %v410, %v411
        %v413 = vsel %vm324, %v249, 0.0
        %v414 = vadd.f32 %v412, %v413
        %v415 = vsel %vm324, %v253, 0.0
        %v416 = vadd.f32 %v414, %v415
        %v417 = vsel %vm324, %v257, 0.0
        %v418 = vadd.f32 %v416, %v417
        %v419 = vsel %vm324, %v261, 0.0
        %v420 = vadd.f32 %v418, %v419
        %v421 = vsel %vm324, %v265, 0.0
        %v422 = vadd.f32 %v420, %v421
        %v423 = vsel %vm324, %v269, 0.0
        %v424 = vadd.f32 %v422, %v423
        %v425 = vsel %vm324, %v273, 0.0
        %v426 = vadd.f32 %v424, %v425
        %v427 = vsel %vm324, %v277, 0.0
        %v428 = vadd.f32 %v426, %v427
        %v429 = vsel %vm324, %v281, 0.0
        %v430 = vadd.f32 %v428, %v429
        %v431 = vsel %vm324, %v285, 0.0
        %v432 = vadd.f32 %v430, %v431
        %v433 = vsel %vm324, %v289, 0.0
        %v434 = vadd.f32 %v432, %v433
        %v435 = vsel %vm324, %v293, 0.0
        %v436 = vadd.f32 %v434, %v435
        %v437 = vsel %vm324, %v297, 0.0
        %v438 = vadd.f32 %v436, %v437
        %v439 = vsel %vm324, %v301, 0.0
        %v440 = vadd.f32 %v438, %v439
        %v441 = vsel %vm324, %v305, 0.0
        %v442 = vadd.f32 %v440, %v441
        %v443 = vsel %vm324, %v309, 0.0
        %v444 = vadd.f32 %v442, %v443
        %v445 = vsel %vm324, %v313, 0.0
        %v446 = vadd.f32 %v444, %v445
        %v447 = vsel %vm324, %v317, 0.0
        %v448 = vadd.f32 %v446, %v447
        %v449 = vsel %vm324, %v321, 0.0
        %v450 = vadd.f32 %v448, %v449
        %v451 = vsel %vm324, %v198, 0.0
        %v452 = vsel %vm324, %v202, 0.0
        %v453 = vadd.f32 %v451, %v452
        %v454 = vsel %vm324, %v206, 0.0
        %v455 = vadd.f32 %v453, %v454
        %v456 = vsel %vm324, %v210, 0.0
        %v457 = vadd.f32 %v455, %v456
        %v458 = vsel %vm324, %v214, 0.0
        %v459 = vadd.f32 %v457, %v458
        %v460 = vsel %vm324, %v218, 0.0
        %v461 = vadd.f32 %v459, %v460
        %v462 = vsel %vm324, %v222, 0.0
        %v463 = vadd.f32 %v461, %v462
        %v464 = vsel %vm324, %v226, 0.0
        %v465 = vadd.f32 %v463, %v464
        %v466 = vsel %vm324, %v230, 0.0
        %v467 = vadd.f32 %v465, %v466
        %v468 = vsel %vm324, %v234, 0.0
        %v469 = vadd.f32 %v467, %v468
        %v470 = vsel %vm324, %v238, 0.0
        %v471 = vadd.f32 %v469, %v470
        %v472 = vsel %vm324, %v242, 0.0
        %v473 = vadd.f32 %v471, %v472
        %v474 = vsel %vm324, %v246, 0.0
        %v475 = vadd.f32 %v473, %v474
        %v476 = vsel %vm324, %v250, 0.0
        %v477 = vadd.f32 %v475, %v476
        %v478 = vsel %vm324, %v254, 0.0
        %v479 = vadd.f32 %v477, %v478
        %v480 = vsel %vm324, %v258, 0.0
        %v481 = vadd.f32 %v479, %v480
        %v482 = vsel %vm324, %v262, 0.0
        %v483 = vadd.f32 %v481, %v482
        %v484 = vsel %vm324, %v266, 0.0
        %v485 = vadd.f32 %v483, %v484
        %v486 = vsel %vm324, %v270, 0.0
        %v487 = vadd.f32 %v485, %v486
        %v488 = vsel %vm324, %v274, 0.0
        %v489 = vadd.f32 %v487, %v488
        %v490 = vsel %vm324, %v278, 0.0
        %v491 = vadd.f32 %v489, %v490
        %v492 = vsel %vm324, %v282, 0.0
        %v493 = vadd.f32 %v491, %v492
        %v494 = vsel %vm324, %v286, 0.0
        %v495 = vadd.f32 %v493, %v494
        %v496 = vsel %vm324, %v290, 0.0
        %v497 = vadd.f32 %v495, %v496
        %v498 = vsel %vm324, %v294, 0.0
        %v499 = vadd.f32 %v497, %v498
        %v500 = vsel %vm324, %v298, 0.0
        %v501 = vadd.f32 %v499, %v500
        %v502 = vsel %vm324, %v302, 0.0
        %v503 = vadd.f32 %v501, %v502
        %v504 = vsel %vm324, %v306, 0.0
        %v505 = vadd.f32 %v503, %v504
        %v506 = vsel %vm324, %v310, 0.0
        %v507 = vadd.f32 %v505, %v506
        %v508 = vsel %vm324, %v314, 0.0
        %v509 = vadd.f32 %v507, %v508
        %v510 = vsel %vm324, %v318, 0.0
        %v511 = vadd.f32 %v509, %v510
        %v512 = vsel %vm324, %v322, 0.0
        %v513 = vadd.f32 %v511, %v512
        %v514 = vsel %vm324, %v199, 0.0
        %v515 = vsel %vm324, %v203, 0.0
        %v516 = vadd.f32 %v514, %v515
        %v517 = vsel %vm324, %v207, 0.0
        %v518 = vadd.f32 %v516, %v517
        %v519 = vsel %vm324, %v211, 0.0
        %v520 = vadd.f32 %v518, %v519
        %v521 = vsel %vm324, %v215, 0.0
        %v522 = vadd.f32 %v520, %v521
        %v523 = vsel %vm324, %v219, 0.0
        %v524 = vadd.f32 %v522, %v523
        %v525 = vsel %vm324, %v223, 0.0
        %v526 = vadd.f32 %v524, %v525
        %v527 = vsel %vm324, %v227, 0.0
        %v528 = vadd.f32 %v526, %v527
        %v529 = vsel %vm324, %v231, 0.0
        %v530 = vadd.f32 %v528, %v529
        %v531 = vsel %vm324, %v235, 0.0
        %v532 = vadd.f32 %v530, %v531
        %v533 = vsel %vm324, %v239, 0.0
        %v534 = vadd.f32 %v532, %v533
        %v535 = vsel %vm324, %v243, 0.0
        %v536 = vadd.f32 %v534, %v535
        %v537 = vsel %vm324, %v247, 0.0
        %v538 = vadd.f32 %v536, %v537
        %v539 = vsel %vm324, %v251, 0.0
        %v540 = vadd.f32 %v538, %v539
        %v541 = vsel %vm324, %v255, 0.0
        %v542 = vadd.f32 %v540, %v541
        %v543 = vsel %vm324, %v259, 0.0
        %v544 = vadd.f32 %v542, %v543
        %v545 = vsel %vm324, %v263, 0.0
        %v546 = vadd.f32 %v544, %v545
        %v547 = vsel %vm324, %v267, 0.0
        %v548 = vadd.f32 %v546, %v547
        %v549 = vsel %vm324, %v271, 0.0
        %v550 = vadd.f32 %v548, %v549
        %v551 = vsel %vm324, %v275, 0.0
        %v552 = vadd.f32 %v550, %v551
        %v553 = vsel %vm324, %v279, 0.0
        %v554 = vadd.f32 %v552, %v553
        %v555 = vsel %vm324, %v283, 0.0
        %v556 = vadd.f32 %v554, %v555
        %v557 = vsel %vm324, %v287, 0.0
        %v558 = vadd.f32 %v556, %v557
        %v559 = vsel %vm324, %v291, 0.0
        %v560 = vadd.f32 %v558, %v559
        %v561 = vsel %vm324, %v295, 0.0
        %v562 = vadd.f32 %v560, %v561
        %v563 = vsel %vm324, %v299, 0.0
        %v564 = vadd.f32 %v562, %v563
        %v565 = vsel %vm324, %v303, 0.0
        %v566 = vadd.f32 %v564, %v565
        %v567 = vsel %vm324, %v307, 0.0
        %v568 = vadd.f32 %v566, %v567
        %v569 = vsel %vm324, %v311, 0.0
        %v570 = vadd.f32 %v568, %v569
        %v571 = vsel %vm324, %v315, 0.0
        %v572 = vadd.f32 %v570, %v571
        %v573 = vsel %vm324, %v319, 0.0
        %v574 = vadd.f32 %v572, %v573
        %v575 = vsel %vm324, %v323, 0.0
        %v576 = vadd.f32 %v574, %v575
        %v577 = vrcp.pop 32.0
        %v578 = vmul.f32 %v387, %v577
        %v579 = vmul.f32 %v450, %v577
        %v580 = vmul.f32 %v513, %v577
        %v581 = vmul.f32 %v576, %v577
        %v582 = vsel %vm324, %v578, 0.0
        %v583 = vsel %vm324, %v579, 0.0
        %v584 = vadd.f32 %v582, %v583
        %v585 = vsel %vm324, %v580, 0.0
        %v586 = vadd.f32 %v584, %v585
        %v587 = vsel %vm324, %v581, 0.0
        %v588 = vadd.f32 %v586, %v587
        %v589 = vrot.slane %v588, 4
        %v590 = vadd.f32 %v588, %v589
        %v591 = vrot.slane %v590, 2
        %v592 = vadd.f32 %v590, %v591
        %v593 = vrot.slane %v592, 1
        %v594 = vadd.f32 %v592, %v593
        %v595 = vmul.f32 %v594, %v577
        %v596 = vsel %vm324, %v196, -inf
        %v597 = vsel %vm324, %v200, -inf
        %v598 = vmax.f32 %v596, %v597
        %v599 = vsel %vm324, %v204, -inf
        %v600 = vmax.f32 %v598, %v599
        %v601 = vsel %vm324, %v208, -inf
        %v602 = vmax.f32 %v600, %v601
        %v603 = vsel %vm324, %v212, -inf
        %v604 = vmax.f32 %v602, %v603
        %v605 = vsel %vm324, %v216, -inf
        %v606 = vmax.f32 %v604, %v605
        %v607 = vsel %vm324, %v220, -inf
        %v608 = vmax.f32 %v606, %v607
        %v609 = vsel %vm324, %v224, -inf
        %v610 = vmax.f32 %v608, %v609
        %v611 = vsel %vm324, %v228, -inf
        %v612 = vmax.f32 %v610, %v611
        %v613 = vsel %vm324, %v232, -inf
        %v614 = vmax.f32 %v612, %v613
        %v615 = vsel %vm324, %v236, -inf
        %v616 = vmax.f32 %v614, %v615
        %v617 = vsel %vm324, %v240, -inf
        %v618 = vmax.f32 %v616, %v617
        %v619 = vsel %vm324, %v244, -inf
        %v620 = vmax.f32 %v618, %v619
        %v621 = vsel %vm324, %v248, -inf
        %v622 = vmax.f32 %v620, %v621
        %v623 = vsel %vm324, %v252, -inf
        %v624 = vmax.f32 %v622, %v623
        %v625 = vsel %vm324, %v256, -inf
        %v626 = vmax.f32 %v624, %v625
        %v627 = vsel %vm324, %v260, -inf
        %v628 = vmax.f32 %v626, %v627
        %v629 = vsel %vm324, %v264, -inf
        %v630 = vmax.f32 %v628, %v629
        %v631 = vsel %vm324, %v268, -inf
        %v632 = vmax.f32 %v630, %v631
        %v633 = vsel %vm324, %v272, -inf
        %v634 = vmax.f32 %v632, %v633
        %v635 = vsel %vm324, %v276, -inf
        %v636 = vmax.f32 %v634, %v635
        %v637 = vsel %vm324, %v280, -inf
        %v638 = vmax.f32 %v636, %v637
        %v639 = vsel %vm324, %v284, -inf
        %v640 = vmax.f32 %v638, %v639
        %v641 = vsel %vm324, %v288, -inf
        %v642 = vmax.f32 %v640, %v641
        %v643 = vsel %vm324, %v292, -inf
        %v644 = vmax.f32 %v642, %v643
        %v645 = vsel %vm324, %v296, -inf
        %v646 = vmax.f32 %v644, %v645
        %v647 = vsel %vm324, %v300, -inf
        %v648 = vmax.f32 %v646, %v647
        %v649 = vsel %vm324, %v304, -inf
        %v650 = vmax.f32 %v648, %v649
        %v651 = vsel %vm324, %v308, -inf
        %v652 = vmax.f32 %v650, %v651
        %v653 = vsel %vm324, %v312, -inf
        %v654 = vmax.f32 %v652, %v653
        %v655 = vsel %vm324, %v316, -inf
        %v656 = vmax.f32 %v654, %v655
        %v657 = vsel %vm324, %v320, -inf
        %v658 = vmax.f32 %v656, %v657
        %v659 = vsel %vm324, %v197, -inf
        %v660 = vsel %vm324, %v201, -inf
        %v661 = vmax.f32 %v659, %v660
        %v662 = vsel %vm324, %v205, -inf
        %v663 = vmax.f32 %v661, %v662
        %v664 = vsel %vm324, %v209, -inf
        %v665 = vmax.f32 %v663, %v664
        %v666 = vsel %vm324, %v213, -inf
        %v667 = vmax.f32 %v665, %v666
        %v668 = vsel %vm324, %v217, -inf
        %v669 = vmax.f32 %v667, %v668
        %v670 = vsel %vm324, %v221, -inf
        %v671 = vmax.f32 %v669, %v670
        %v672 = vsel %vm324, %v225, -inf
        %v673 = vmax.f32 %v671, %v672
        %v674 = vsel %vm324, %v229, -inf
        %v675 = vmax.f32 %v673, %v674
        %v676 = vsel %vm324, %v233, -inf
        %v677 = vmax.f32 %v675, %v676
        %v678 = vsel %vm324, %v237, -inf
        %v679 = vmax.f32 %v677, %v678
        %v680 = vsel %vm324, %v241, -inf
        %v681 = vmax.f32 %v679, %v680
        %v682 = vsel %vm324, %v245, -inf
        %v683 = vmax.f32 %v681, %v682
        %v684 = vsel %vm324, %v249, -inf
        %v685 = vmax.f32 %v683, %v684
        %v686 = vsel %vm324, %v253, -inf
        %v687 = vmax.f32 %v685, %v686
        %v688 = vsel %vm324, %v257, -inf
        %v689 = vmax.f32 %v687, %v688
        %v690 = vsel %vm324, %v261, -inf
        %v691 = vmax.f32 %v689, %v690
        %v692 = vsel %vm324, %v265, -inf
        %v693 = vmax.f32 %v691, %v692
        %v694 = vsel %vm324, %v269, -inf
        %v695 = vmax.f32 %v693, %v694
        %v696 = vsel %vm324, %v273, -inf
        %v697 = vmax.f32 %v695, %v696
        %v698 = vsel %vm324, %v277, -inf
        %v699 = vmax.f32 %v697, %v698
        %v700 = vsel %vm324, %v281, -inf
        %v701 = vmax.f32 %v699, %v700
        %v702 = vsel %vm324, %v285, -inf
        %v703 = vmax.f32 %v701, %v702
        %v704 = vsel %vm324, %v289, -inf
        %v705 = vmax.f32 %v703, %v704
        %v706 = vsel %vm324, %v293, -inf
        %v707 = vmax.f32 %v705, %v706
        %v708 = vsel %vm324, %v297, -inf
        %v709 = vmax.f32 %v707, %v708
        %v710 = vsel %vm324, %v301, -inf
        %v711 = vmax.f32 %v709, %v710
        %v712 = vsel %vm324, %v305, -inf
        %v713 = vmax.f32 %v711, %v712
        %v714 = vsel %vm324, %v309, -inf
        %v715 = vmax.f32 %v713, %v714
        %v716 = vsel %vm324, %v313, -inf
        %v717 = vmax.f32 %v715, %v716
        %v718 = vsel %vm324, %v317, -inf
        %v719 = vmax.f32 %v717, %v718
        %v720 = vsel %vm324, %v321, -inf
        %v721 = vmax.f32 %v719, %v720
        %v722 = vsel %vm324, %v198, -inf
        %v723 = vsel %vm324, %v202, -inf
        %v724 = vmax.f32 %v722, %v723
        %v725 = vsel %vm324, %v206, -inf
        %v726 = vmax.f32 %v724, %v725
        %v727 = vsel %vm324, %v210, -inf
        %v728 = vmax.f32 %v726, %v727
        %v729 = vsel %vm324, %v214, -inf
        %v730 = vmax.f32 %v728, %v729
        %v731 = vsel %vm324, %v218, -inf
        %v732 = vmax.f32 %v730, %v731
        %v733 = vsel %vm324, %v222, -inf
        %v734 = vmax.f32 %v732, %v733
        %v735 = vsel %vm324, %v226, -inf
        %v736 = vmax.f32 %v734, %v735
        %v737 = vsel %vm324, %v230, -inf
        %v738 = vmax.f32 %v736, %v737
        %v739 = vsel %vm324, %v234, -inf
        %v740 = vmax.f32 %v738, %v739
        %v741 = vsel %vm324, %v238, -inf
        %v742 = vmax.f32 %v740, %v741
        %v743 = vsel %vm324, %v242, -inf
        %v744 = vmax.f32 %v742, %v743
        %v745 = vsel %vm324, %v246, -inf
        %v746 = vmax.f32 %v744, %v745
        %v747 = vsel %vm324, %v250, -inf
        %v748 = vmax.f32 %v746, %v747
        %v749 = vsel %vm324, %v254, -inf
        %v750 = vmax.f32 %v748, %v749
        %v751 = vsel %vm324, %v258, -inf
        %v752 = vmax.f32 %v750, %v751
        %v753 = vsel %vm324, %v262, -inf
        %v754 = vmax.f32 %v752, %v753
        %v755 = vsel %vm324, %v266, -inf
        %v756 = vmax.f32 %v754, %v755
        %v757 = vsel %vm324, %v270, -inf
        %v758 = vmax.f32 %v756, %v757
        %v759 = vsel %vm324, %v274, -inf
        %v760 = vmax.f32 %v758, %v759
        %v761 = vsel %vm324, %v278, -inf
        %v762 = vmax.f32 %v760, %v761
        %v763 = vsel %vm324, %v282, -inf
        %v764 = vmax.f32 %v762, %v763
        %v765 = vsel %vm324, %v286, -inf
        %v766 = vmax.f32 %v764, %v765
        %v767 = vsel %vm324, %v290, -inf
        %v768 = vmax.f32 %v766, %v767
        %v769 = vsel %vm324, %v294, -inf
        %v770 = vmax.f32 %v768, %v769
        %v771 = vsel %vm324, %v298, -inf
        %v772 = vmax.f32 %v770, %v771
        %v773 = vsel %vm324, %v302, -inf
        %v774 = vmax.f32 %v772, %v773
        %v775 = vsel %vm324, %v306, -inf
        %v776 = vmax.f32 %v774, %v775
        %v777 = vsel %vm324, %v310, -inf
        %v778 = vmax.f32 %v776, %v777
        %v779 = vsel %vm324, %v314, -inf
        %v780 = vmax.f32 %v778, %v779
        %v781 = vsel %vm324, %v318, -inf
        %v782 = vmax.f32 %v780, %v781
        %v783 = vsel %vm324, %v322, -inf
        %v784 = vmax.f32 %v782, %v783
        %v785 = vsel %vm324, %v199, -inf
        %v786 = vsel %vm324, %v203, -inf
        %v787 = vmax.f32 %v785, %v786
        %v788 = vsel %vm324, %v207, -inf
        %v789 = vmax.f32 %v787, %v788
        %v790 = vsel %vm324, %v211, -inf
        %v791 = vmax.f32 %v789, %v790
        %v792 = vsel %vm324, %v215, -inf
        %v793 = vmax.f32 %v791, %v792
        %v794 = vsel %vm324, %v219, -inf
        %v795 = vmax.f32 %v793, %v794
        %v796 = vsel %vm324, %v223, -inf
        %v797 = vmax.f32 %v795, %v796
        %v798 = vsel %vm324, %v227, -inf
        %v799 = vmax.f32 %v797, %v798
        %v800 = vsel %vm324, %v231, -inf
        %v801 = vmax.f32 %v799, %v800
        %v802 = vsel %vm324, %v235, -inf
        %v803 = vmax.f32 %v801, %v802
        %v804 = vsel %vm324, %v239, -inf
        %v805 = vmax.f32 %v803, %v804
        %v806 = vsel %vm324, %v243, -inf
        %v807 = vmax.f32 %v805, %v806
        %v808 = vsel %vm324, %v247, -inf
        %v809 = vmax.f32 %v807, %v808
        %v810 = vsel %vm324, %v251, -inf
        %v811 = vmax.f32 %v809, %v810
        %v812 = vsel %vm324, %v255, -inf
        %v813 = vmax.f32 %v811, %v812
        %v814 = vsel %vm324, %v259, -inf
        %v815 = vmax.f32 %v813, %v814
        %v816 = vsel %vm324, %v263, -inf
        %v817 = vmax.f32 %v815, %v816
        %v818 = vsel %vm324, %v267, -inf
        %v819 = vmax.f32 %v817, %v818
        %v820 = vsel %vm324, %v271, -inf
        %v821 = vmax.f32 %v819, %v820
        %v822 = vsel %vm324, %v275, -inf
        %v823 = vmax.f32 %v821, %v822
        %v824 = vsel %vm324, %v279, -inf
        %v825 = vmax.f32 %v823, %v824
        %v826 = vsel %vm324, %v283, -inf
        %v827 = vmax.f32 %v825, %v826
        %v828 = vsel %vm324, %v287, -inf
        %v829 = vmax.f32 %v827, %v828
        %v830 = vsel %vm324, %v291, -inf
        %v831 = vmax.f32 %v829, %v830
        %v832 = vsel %vm324, %v295, -inf
        %v833 = vmax.f32 %v831, %v832
        %v834 = vsel %vm324, %v299, -inf
        %v835 = vmax.f32 %v833, %v834
        %v836 = vsel %vm324, %v303, -inf
        %v837 = vmax.f32 %v835, %v836
        %v838 = vsel %vm324, %v307, -inf
        %v839 = vmax.f32 %v837, %v838
        %v840 = vsel %vm324, %v311, -inf
        %v841 = vmax.f32 %v839, %v840
        %v842 = vsel %vm324, %v315, -inf
        %v843 = vmax.f32 %v841, %v842
        %v844 = vsel %vm324, %v319, -inf
        %v845 = vmax.f32 %v843, %v844
        %v846 = vsel %vm324, %v323, -inf
        %v847 = vmax.f32 %v845, %v846
        %v848 = vsel %vm324, %v658, -inf
        %v849 = vsel %vm324, %v721, -inf
        %v850 = vsel %vm324, %v784, -inf
        %v851 = vsel %vm324, %v847, -inf
        %v852 = vmax.f32 %v848, %v849
        %v853 = vmax.f32 %v850, %v851
        %v854 = vmax.f32 %v852, %v853
        %v855 = vrot.slane %v854, 4
        %v856 = vmax.f32 %v854, %v855
        %v857 = vrot.slane %v856, 2
        %v858 = vmax.f32 %v856, %v857
        %v859 = vrot.slane %v858, 1
        %v860 = vmax.f32 %v858, %v859
        %vm861 = vcmask 1040384
        %v862 = vsel %vm861, %v595, %v860
        %v863 = vld [vmem:[%s1] sm:$0xff]
        %v864 = vld [vmem:[%s1 + $0x8] sm:$0xff]
        %v865 = vld [vmem:[%s1 + $0x10] sm:$0xff]
        %v866 = vld [vmem:[%s1 + $0x18] sm:$0xff]
        %v867 = vld [vmem:[%s1 + $0x20] sm:$0xff]
        %v868 = vld [vmem:[%s1 + $0x28] sm:$0xff]
        %v869 = vld [vmem:[%s1 + $0x30] sm:$0xff]
        %v870 = vld [vmem:[%s1 + $0x38] sm:$0xff]
        %v872 = vsel %vm324, %v862, 0
        %874 = vmatprep.subr.mxu0 0.0
        %875 = vmatpush1.msra.mxu0 %v863
        %876 = vmatprep.subr.mxu0 0.0
        %877 = vmatpush1.msra.mxu0 %v864
        %878 = vmatprep.subr.mxu0 0.0
        %879 = vmatpush1.msra.mxu0 %v865
        %880 = vmatprep.subr.mxu0 0.0
        %881 = vmatpush1.msra.mxu0 %v866
        %882 = vmatprep.subr.mxu0 0.0
        %883 = vmatpush1.msra.mxu0 %v867
        %884 = vmatprep.subr.mxu0 0.0
        %885 = vmatpush1.msra.mxu0 %v868
        %886 = vmatprep.subr.mxu0 0.0
        %887 = vmatpush1.msra.mxu0 %v869
        %888 = vmatprep.subr.mxu0 0.0
        %889 = vmatpush1.msra.mxu0 %v870
        %890 = vmatprep.subr.mxu0 0.0
        %891 = vmatpush1.msra.mxu0 0.0
        %892 = vmatprep.subr.mxu0 0.0
        %893 = vmatpush1.msra.mxu0 0.0
        %894 = vmatprep.subr.mxu0 0.0
        %895 = vmatpush1.msra.mxu0 0.0
        %896 = vmatprep.subr.mxu0 0.0
        %897 = vmatpush1.msra.mxu0 0.0
        %898 = vmatprep.subr.mxu0 0.0
        %899 = vmatpush1.msra.mxu0 0.0
        %900 = vmatprep.subr.mxu0 0.0
        %901 = vmatpush1.msra.mxu0 0.0
        %902 = vmatprep.subr.mxu0 0.0
        %903 = vmatpush1.msra.mxu0 0.0
        %904 = vmatprep.subr.mxu0 0.0
        %905 = vmatpush1.msra.mxu0 0.0
        %906 = vmatprep.subr.mxu0 0.0
        %907 = vmatpush1.msra.mxu0 0.0
        %908 = vmatprep.subr.mxu0 0.0
        %909 = vmatpush1.msra.mxu0 0.0
        %910 = vmatprep.subr.mxu0 0.0
        %911 = vmatpush1.msra.mxu0 0.0
        %912 = vmatprep.subr.mxu0 0.0
        %913 = vmatpush1.msra.mxu0 0.0
        %914 = vmatprep.subr.mxu0 0.0
        %915 = vmatpush1.msra.mxu0 0.0
        %916 = vmatprep.subr.mxu0 0.0
        %917 = vmatpush1.msra.mxu0 0.0
        %918 = vmatprep.subr.mxu0 0.0
        %919 = vmatpush1.msra.mxu0 0.0
        %920 = vmatprep.subr.mxu0 0.0
        %921 = vmatpush1.msra.mxu0 0.0
        %922 = vmatprep.subr.mxu0 0.0
        %923 = vmatpush1.msra.mxu0 0.0
        %924 = vmatprep.subr.mxu0 0.0
        %925 = vmatpush1.msra.mxu0 0.0
        %926 = vmatprep.subr.mxu0 0.0
        %927 = vmatpush1.msra.mxu0 0.0
        %928 = vmatprep.subr.mxu0 0.0
        %929 = vmatpush1.msra.mxu0 0.0
        %930 = vmatprep.subr.mxu0 0.0
        %931 = vmatpush1.msra.mxu0 0.0
        %932 = vmatprep.subr.mxu0 0.0
        %933 = vmatpush1.msra.mxu0 0.0
        %934 = vmatprep.subr.mxu0 0.0
        %935 = vmatpush1.msra.mxu0 0.0
        %936 = vmatprep.subr.mxu0 0.0
        %937 = vmatpush1.msra.mxu0 0.0
        %938 = vmatprep.mubr.f32.mxu0 0.0
        %939 = vmatmul.mubr.f32.gmra.mrb[0].mxu0 %v872
        %v940 = vpop.f32.mrb[0].mxu0
        %v941 = vadd.f32 0.0, %v940
        %v942 = vpop.f32.mrb[0].mxu0
        %943 = vdwg.mxu0
        %v944 = vmax.f32 %v941, 0.0
        %v945 = vld [vmem:[%s2] sm:$0xf]
        %vm946 = vcmask 31744
        %v948 = vsel %vm946, %v944, 0
        %vm950 = vcmask 1043456
        %v952 = vsel %vm950, %v945, 0
        %954 = vmatprep.subr.mxu0 0.0
        %955 = vmatpush1.msra.mxu0 %v952
        %956 = vmatprep.subr.mxu0 0.0
        %957 = vmatpush1.msra.mxu0 0.0
        %958 = vmatprep.subr.mxu0 0.0
        %959 = vmatpush1.msra.mxu0 0.0
        %960 = vmatprep.subr.mxu0 0.0
        %961 = vmatpush1.msra.mxu0 0.0
        %962 = vmatprep.subr.mxu0 0.0
        %963 = vmatpush1.msra.mxu0 0.0
        %964 = vmatprep.subr.mxu0 0.0
        %965 = vmatpush1.msra.mxu0 0.0
        %966 = vmatprep.subr.mxu0 0.0
        %967 = vmatpush1.msra.mxu0 0.0
        %968 = vmatprep.subr.mxu0 0.0
        %969 = vmatpush1.msra.mxu0 0.0
        %970 = vmatprep.subr.mxu0 0.0
        %971 = vmatpush1.msra.mxu0 0.0
        %972 = vmatprep.subr.mxu0 0.0
        %973 = vmatpush1.msra.mxu0 0.0
        %974 = vmatprep.subr.mxu0 0.0
        %975 = vmatpush1.msra.mxu0 0.0
        %976 = vmatprep.subr.mxu0 0.0
        %977 = vmatpush1.msra.mxu0 0.0
        %978 = vmatprep.subr.mxu0 0.0
        %979 = vmatpush1.msra.mxu0 0.0
        %980 = vmatprep.subr.mxu0 0.0
        %981 = vmatpush1.msra.mxu0 0.0
        %982 = vmatprep.subr.mxu0 0.0
        %983 = vmatpush1.msra.mxu0 0.0
        %984 = vmatprep.subr.mxu0 0.0
        %985 = vmatpush1.msra.mxu0 0.0
        %986 = vmatprep.subr.mxu0 0.0
        %987 = vmatpush1.msra.mxu0 0.0
        %988 = vmatprep.subr.mxu0 0.0
        %989 = vmatpush1.msra.mxu0 0.0
        %990 = vmatprep.subr.mxu0 0.0
        %991 = vmatpush1.msra.mxu0 0.0
        %992 = vmatprep.subr.mxu0 0.0
        %993 = vmatpush1.msra.mxu0 0.0
        %994 = vmatprep.subr.mxu0 0.0
        %995 = vmatpush1.msra.mxu0 0.0
        %996 = vmatprep.subr.mxu0 0.0
        %997 = vmatpush1.msra.mxu0 0.0
        %998 = vmatprep.subr.mxu0 0.0
        %999 = vmatpush1.msra.mxu0 0.0
        %1000 = vmatprep.subr.mxu0 0.0
        %1001 = vmatpush1.msra.mxu0 0.0
        %1002 = vmatprep.subr.mxu0 0.0
        %1003 = vmatpush1.msra.mxu0 0.0
        %1004 = vmatprep.subr.mxu0 0.0
        %1005 = vmatpush1.msra.mxu0 0.0
        %1006 = vmatprep.subr.mxu0 0.0
        %1007 = vmatpush1.msra.mxu0 0.0
        %1008 = vmatprep.subr.mxu0 0.0
        %1009 = vmatpush1.msra.mxu0 0.0
        %1010 = vmatprep.subr.mxu0 0.0
        %1011 = vmatpush1.msra.mxu0 0.0
        %1012 = vmatprep.subr.mxu0 0.0
        %1013 = vmatpush1.msra.mxu0 0.0
        %1014 = vmatprep.subr.mxu0 0.0
        %1015 = vmatpush1.msra.mxu0 0.0
        %1016 = vmatprep.subr.mxu0 0.0
        %1017 = vmatpush1.msra.mxu0 0.0
        %1018 = vmatprep.mubr.f32.mxu0 0.0
        %1019 = vmatmul.mubr.f32.gmra.mrb[0].mxu0 %v948
        %v1020 = vpop.f32.mrb[0].mxu0
        %v1021 = vadd.f32 0.0, %v1020
        %v1022 = vpop.f32.mrb[0].mxu0
        %1023 = vdwg.mxu0
        %v1025 = vrot.slane %v1021, 1
        %v1027 = vadd.f32 %v1021, %v1025
        %v1028 = vxor.u32 %v1027, 2147483648
        %v1029 = vmul.f32 %v1028, 1.442695
        %v1030 = vpow.pop %v1029
        %v1031 = vadd.f32 %v1030, 1.0
        %v1032 = vrcp.pop %v1031
        %v1033 = vmul.f32 1.0, %v1032
        %v1034 = vlaneseq
        %v1035 = vshrl.u32 %v1034, 7
        %v1036 = vsub.s32 0, %v1035
        %v1037 = vrot.slane %v1033, %v1036
        %v1038 = vmul.f32 %v196, %v1037
        %v1039 = vmul.f32 %v197, %v1037
        %v1040 = vmul.f32 %v198, %v1037
        %v1041 = vmul.f32 %v199, %v1037
        %v1042 = vmul.f32 %v200, %v1037
        %v1043 = vmul.f32 %v201, %v1037
        %v1044 = vmul.f32 %v202, %v1037
        %v1045 = vmul.f32 %v203, %v1037
        %v1046 = vmul.f32 %v204, %v1037
        %v1047 = vmul.f32 %v205, %v1037
        %v1048 = vmul.f32 %v206, %v1037
        %v1049 = vmul.f32 %v207, %v1037
        %v1050 = vmul.f32 %v208, %v1037
        %v1051 = vmul.f32 %v209, %v1037
        %v1052 = vmul.f32 %v210, %v1037
        %v1053 = vmul.f32 %v211, %v1037
        %v1054 = vmul.f32 %v212, %v1037
        %v1055 = vmul.f32 %v213, %v1037
        %v1056 = vmul.f32 %v214, %v1037
        %v1057 = vmul.f32 %v215, %v1037
        %v1058 = vmul.f32 %v216, %v1037
        %v1059 = vmul.f32 %v217, %v1037
        %v1060 = vmul.f32 %v218, %v1037
        %v1061 = vmul.f32 %v219, %v1037
        %v1062 = vmul.f32 %v220, %v1037
        %v1063 = vmul.f32 %v221, %v1037
        %v1064 = vmul.f32 %v222, %v1037
        %v1065 = vmul.f32 %v223, %v1037
        %v1066 = vmul.f32 %v224, %v1037
        %v1067 = vmul.f32 %v225, %v1037
        %v1068 = vmul.f32 %v226, %v1037
        %v1069 = vmul.f32 %v227, %v1037
        %v1070 = vmul.f32 %v228, %v1037
        %v1071 = vmul.f32 %v229, %v1037
        %v1072 = vmul.f32 %v230, %v1037
        %v1073 = vmul.f32 %v231, %v1037
        %v1074 = vmul.f32 %v232, %v1037
        %v1075 = vmul.f32 %v233, %v1037
        %v1076 = vmul.f32 %v234, %v1037
        %v1077 = vmul.f32 %v235, %v1037
        %v1078 = vmul.f32 %v236, %v1037
        %v1079 = vmul.f32 %v237, %v1037
        %v1080 = vmul.f32 %v238, %v1037
        %v1081 = vmul.f32 %v239, %v1037
        %v1082 = vmul.f32 %v240, %v1037
        %v1083 = vmul.f32 %v241, %v1037
        %v1084 = vmul.f32 %v242, %v1037
        %v1085 = vmul.f32 %v243, %v1037
        %v1086 = vmul.f32 %v244, %v1037
        %v1087 = vmul.f32 %v245, %v1037
        %v1088 = vmul.f32 %v246, %v1037
        %v1089 = vmul.f32 %v247, %v1037
        %v1090 = vmul.f32 %v248, %v1037
        %v1091 = vmul.f32 %v249, %v1037
        %v1092 = vmul.f32 %v250, %v1037
        %v1093 = vmul.f32 %v251, %v1037
        %v1094 = vmul.f32 %v252, %v1037
        %v1095 = vmul.f32 %v253, %v1037
        %v1096 = vmul.f32 %v254, %v1037
        %v1097 = vmul.f32 %v255, %v1037
        %v1098 = vmul.f32 %v256, %v1037
        %v1099 = vmul.f32 %v257, %v1037
        %v1100 = vmul.f32 %v258, %v1037
        %v1101 = vmul.f32 %v259, %v1037
        %v1102 = vmul.f32 %v260, %v1037
        %v1103 = vmul.f32 %v261, %v1037
        %v1104 = vmul.f32 %v262, %v1037
        %v1105 = vmul.f32 %v263, %v1037
        %v1106 = vmul.f32 %v264, %v1037
        %v1107 = vmul.f32 %v265, %v1037
        %v1108 = vmul.f32 %v266, %v1037
        %v1109 = vmul.f32 %v267, %v1037
        %v1110 = vmul.f32 %v268, %v1037
        %v1111 = vmul.f32 %v269, %v1037
        %v1112 = vmul.f32 %v270, %v1037
        %v1113 = vmul.f32 %v271, %v1037
        %v1114 = vmul.f32 %v272, %v1037
        %v1115 = vmul.f32 %v273, %v1037
        %v1116 = vmul.f32 %v274, %v1037
        %v1117 = vmul.f32 %v275, %v1037
        %v1118 = vmul.f32 %v276, %v1037
        %v1119 = vmul.f32 %v277, %v1037
        %v1120 = vmul.f32 %v278, %v1037
        %v1121 = vmul.f32 %v279, %v1037
        %v1122 = vmul.f32 %v280, %v1037
        %v1123 = vmul.f32 %v281, %v1037
        %v1124 = vmul.f32 %v282, %v1037
        %v1125 = vmul.f32 %v283, %v1037
        %v1126 = vmul.f32 %v284, %v1037
        %v1127 = vmul.f32 %v285, %v1037
        %v1128 = vmul.f32 %v286, %v1037
        %v1129 = vmul.f32 %v287, %v1037
        %v1130 = vmul.f32 %v288, %v1037
        %v1131 = vmul.f32 %v289, %v1037
        %v1132 = vmul.f32 %v290, %v1037
        %v1133 = vmul.f32 %v291, %v1037
        %v1134 = vmul.f32 %v292, %v1037
        %v1135 = vmul.f32 %v293, %v1037
        %v1136 = vmul.f32 %v294, %v1037
        %v1137 = vmul.f32 %v295, %v1037
        %v1138 = vmul.f32 %v296, %v1037
        %v1139 = vmul.f32 %v297, %v1037
        %v1140 = vmul.f32 %v298, %v1037
        %v1141 = vmul.f32 %v299, %v1037
        %v1142 = vmul.f32 %v300, %v1037
        %v1143 = vmul.f32 %v301, %v1037
        %v1144 = vmul.f32 %v302, %v1037
        %v1145 = vmul.f32 %v303, %v1037
        %v1146 = vmul.f32 %v304, %v1037
        %v1147 = vmul.f32 %v305, %v1037
        %v1148 = vmul.f32 %v306, %v1037
        %v1149 = vmul.f32 %v307, %v1037
        %v1150 = vmul.f32 %v308, %v1037
        %v1151 = vmul.f32 %v309, %v1037
        %v1152 = vmul.f32 %v310, %v1037
        %v1153 = vmul.f32 %v311, %v1037
        %v1154 = vmul.f32 %v312, %v1037
        %v1155 = vmul.f32 %v313, %v1037
        %v1156 = vmul.f32 %v314, %v1037
        %v1157 = vmul.f32 %v315, %v1037
        %v1158 = vmul.f32 %v316, %v1037
        %v1159 = vmul.f32 %v317, %v1037
        %v1160 = vmul.f32 %v318, %v1037
        %v1161 = vmul.f32 %v319, %v1037
        %v1162 = vmul.f32 %v320, %v1037
        %v1163 = vmul.f32 %v321, %v1037
        %v1164 = vmul.f32 %v322, %v1037
        %v1165 = vmul.f32 %v323, %v1037
        %v1166 = vsel %vm324, %v1038, 0.0
        %1167 = vadd.xlane.f32.xlu0 %v1166
        %v1168 = vpop.xlane.xlu0 %1167
        %v1169 = vsel %vm324, %v1039, 0.0
        %1170 = vadd.xlane.f32.xlu0 %v1169
        %v1171 = vpop.xlane.xlu0 %1170
        %v1172 = vsel %vm324, %v1040, 0.0
        %1173 = vadd.xlane.f32.xlu0 %v1172
        %v1174 = vpop.xlane.xlu0 %1173
        %v1175 = vsel %vm324, %v1041, 0.0
        %1176 = vadd.xlane.f32.xlu0 %v1175
        %v1177 = vpop.xlane.xlu0 %1176
        %v1178 = vsel %vm324, %v1042, 0.0
        %1179 = vadd.xlane.f32.xlu0 %v1178
        %v1180 = vpop.xlane.xlu0 %1179
        %v1181 = vsel %vm324, %v1043, 0.0
        %1182 = vadd.xlane.f32.xlu0 %v1181
        %v1183 = vpop.xlane.xlu0 %1182
        %v1184 = vsel %vm324, %v1044, 0.0
        %1185 = vadd.xlane.f32.xlu0 %v1184
        %v1186 = vpop.xlane.xlu0 %1185
        %v1187 = vsel %vm324, %v1045, 0.0
        %1188 = vadd.xlane.f32.xlu0 %v1187
        %v1189 = vpop.xlane.xlu0 %1188
        %v1190 = vsel %vm324, %v1046, 0.0
        %1191 = vadd.xlane.f32.xlu0 %v1190
        %v1192 = vpop.xlane.xlu0 %1191
        %v1193 = vsel %vm324, %v1047, 0.0
        %1194 = vadd.xlane.f32.xlu0 %v1193
        %v1195 = vpop.xlane.xlu0 %1194
        %v1196 = vsel %vm324, %v1048, 0.0
        %1197 = vadd.xlane.f32.xlu0 %v1196
        %v1198 = vpop.xlane.xlu0 %1197
        %v1199 = vsel %vm324, %v1049, 0.0
        %1200 = vadd.xlane.f32.xlu0 %v1199
        %v1201 = vpop.xlane.xlu0 %1200
        %v1202 = vsel %vm324, %v1050, 0.0
        %1203 = vadd.xlane.f32.xlu0 %v1202
        %v1204 = vpop.xlane.xlu0 %1203
        %v1205 = vsel %vm324, %v1051, 0.0
        %1206 = vadd.xlane.f32.xlu0 %v1205
        %v1207 = vpop.xlane.xlu0 %1206
        %v1208 = vsel %vm324, %v1052, 0.0
        %1209 = vadd.xlane.f32.xlu0 %v1208
        %v1210 = vpop.xlane.xlu0 %1209
        %v1211 = vsel %vm324, %v1053, 0.0
        %1212 = vadd.xlane.f32.xlu0 %v1211
        %v1213 = vpop.xlane.xlu0 %1212
        %v1214 = vsel %vm324, %v1054, 0.0
        %1215 = vadd.xlane.f32.xlu0 %v1214
        %v1216 = vpop.xlane.xlu0 %1215
        %v1217 = vsel %vm324, %v1055, 0.0
        %1218 = vadd.xlane.f32.xlu0 %v1217
        %v1219 = vpop.xlane.xlu0 %1218
        %v1220 = vsel %vm324, %v1056, 0.0
        %1221 = vadd.xlane.f32.xlu0 %v1220
        %v1222 = vpop.xlane.xlu0 %1221
        %v1223 = vsel %vm324, %v1057, 0.0
        %1224 = vadd.xlane.f32.xlu0 %v1223
        %v1225 = vpop.xlane.xlu0 %1224
        %v1226 = vsel %vm324, %v1058, 0.0
        %1227 = vadd.xlane.f32.xlu0 %v1226
        %v1228 = vpop.xlane.xlu0 %1227
        %v1229 = vsel %vm324, %v1059, 0.0
        %1230 = vadd.xlane.f32.xlu0 %v1229
        %v1231 = vpop.xlane.xlu0 %1230
        %v1232 = vsel %vm324, %v1060, 0.0
        %1233 = vadd.xlane.f32.xlu0 %v1232
        %v1234 = vpop.xlane.xlu0 %1233
        %v1235 = vsel %vm324, %v1061, 0.0
        %1236 = vadd.xlane.f32.xlu0 %v1235
        %v1237 = vpop.xlane.xlu0 %1236
        %v1238 = vsel %vm324, %v1062, 0.0
        %1239 = vadd.xlane.f32.xlu0 %v1238
        %v1240 = vpop.xlane.xlu0 %1239
        %v1241 = vsel %vm324, %v1063, 0.0
        %1242 = vadd.xlane.f32.xlu0 %v1241
        %v1243 = vpop.xlane.xlu0 %1242
        %v1244 = vsel %vm324, %v1064, 0.0
        %1245 = vadd.xlane.f32.xlu0 %v1244
        %v1246 = vpop.xlane.xlu0 %1245
        %v1247 = vsel %vm324, %v1065, 0.0
        %1248 = vadd.xlane.f32.xlu0 %v1247
        %v1249 = vpop.xlane.xlu0 %1248
        %v1250 = vsel %vm324, %v1066, 0.0
        %1251 = vadd.xlane.f32.xlu0 %v1250
        %v1252 = vpop.xlane.xlu0 %1251
        %v1253 = vsel %vm324, %v1067, 0.0
        %1254 = vadd.xlane.f32.xlu0 %v1253
        %v1255 = vpop.xlane.xlu0 %1254
        %v1256 = vsel %vm324, %v1068, 0.0
        %1257 = vadd.xlane.f32.xlu0 %v1256
        %v1258 = vpop.xlane.xlu0 %1257
        %v1259 = vsel %vm324, %v1069, 0.0
        %1260 = vadd.xlane.f32.xlu0 %v1259
        %v1261 = vpop.xlane.xlu0 %1260
        %v1262 = vsel %vm324, %v1070, 0.0
        %1263 = vadd.xlane.f32.xlu0 %v1262
        %v1264 = vpop.xlane.xlu0 %1263
        %v1265 = vsel %vm324, %v1071, 0.0
        %1266 = vadd.xlane.f32.xlu0 %v1265
        %v1267 = vpop.xlane.xlu0 %1266
        %v1268 = vsel %vm324, %v1072, 0.0
        %1269 = vadd.xlane.f32.xlu0 %v1268
        %v1270 = vpop.xlane.xlu0 %1269
        %v1271 = vsel %vm324, %v1073, 0.0
        %1272 = vadd.xlane.f32.xlu0 %v1271
        %v1273 = vpop.xlane.xlu0 %1272
        %v1274 = vsel %vm324, %v1074, 0.0
        %1275 = vadd.xlane.f32.xlu0 %v1274
        %v1276 = vpop.xlane.xlu0 %1275
        %v1277 = vsel %vm324, %v1075, 0.0
        %1278 = vadd.xlane.f32.xlu0 %v1277
        %v1279 = vpop.xlane.xlu0 %1278
        %v1280 = vsel %vm324, %v1076, 0.0
        %1281 = vadd.xlane.f32.xlu0 %v1280
        %v1282 = vpop.xlane.xlu0 %1281
        %v1283 = vsel %vm324, %v1077, 0.0
        %1284 = vadd.xlane.f32.xlu0 %v1283
        %v1285 = vpop.xlane.xlu0 %1284
        %v1286 = vsel %vm324, %v1078, 0.0
        %1287 = vadd.xlane.f32.xlu0 %v1286
        %v1288 = vpop.xlane.xlu0 %1287
        %v1289 = vsel %vm324, %v1079, 0.0
        %1290 = vadd.xlane.f32.xlu0 %v1289
        %v1291 = vpop.xlane.xlu0 %1290
        %v1292 = vsel %vm324, %v1080, 0.0
        %1293 = vadd.xlane.f32.xlu0 %v1292
        %v1294 = vpop.xlane.xlu0 %1293
        %v1295 = vsel %vm324, %v1081, 0.0
        %1296 = vadd.xlane.f32.xlu0 %v1295
        %v1297 = vpop.xlane.xlu0 %1296
        %v1298 = vsel %vm324, %v1082, 0.0
        %1299 = vadd.xlane.f32.xlu0 %v1298
        %v1300 = vpop.xlane.xlu0 %1299
        %v1301 = vsel %vm324, %v1083, 0.0
        %1302 = vadd.xlane.f32.xlu0 %v1301
        %v1303 = vpop.xlane.xlu0 %1302
        %v1304 = vsel %vm324, %v1084, 0.0
        %1305 = vadd.xlane.f32.xlu0 %v1304
        %v1306 = vpop.xlane.xlu0 %1305
        %v1307 = vsel %vm324, %v1085, 0.0
        %1308 = vadd.xlane.f32.xlu0 %v1307
        %v1309 = vpop.xlane.xlu0 %1308
        %v1310 = vsel %vm324, %v1086, 0.0
        %1311 = vadd.xlane.f32.xlu0 %v1310
        %v1312 = vpop.xlane.xlu0 %1311
        %v1313 = vsel %vm324, %v1087, 0.0
        %1314 = vadd.xlane.f32.xlu0 %v1313
        %v1315 = vpop.xlane.xlu0 %1314
        %v1316 = vsel %vm324, %v1088, 0.0
        %1317 = vadd.xlane.f32.xlu0 %v1316
        %v1318 = vpop.xlane.xlu0 %1317
        %v1319 = vsel %vm324, %v1089, 0.0
        %1320 = vadd.xlane.f32.xlu0 %v1319
        %v1321 = vpop.xlane.xlu0 %1320
        %v1322 = vsel %vm324, %v1090, 0.0
        %1323 = vadd.xlane.f32.xlu0 %v1322
        %v1324 = vpop.xlane.xlu0 %1323
        %v1325 = vsel %vm324, %v1091, 0.0
        %1326 = vadd.xlane.f32.xlu0 %v1325
        %v1327 = vpop.xlane.xlu0 %1326
        %v1328 = vsel %vm324, %v1092, 0.0
        %1329 = vadd.xlane.f32.xlu0 %v1328
        %v1330 = vpop.xlane.xlu0 %1329
        %v1331 = vsel %vm324, %v1093, 0.0
        %1332 = vadd.xlane.f32.xlu0 %v1331
        %v1333 = vpop.xlane.xlu0 %1332
        %v1334 = vsel %vm324, %v1094, 0.0
        %1335 = vadd.xlane.f32.xlu0 %v1334
        %v1336 = vpop.xlane.xlu0 %1335
        %v1337 = vsel %vm324, %v1095, 0.0
        %1338 = vadd.xlane.f32.xlu0 %v1337
        %v1339 = vpop.xlane.xlu0 %1338
        %v1340 = vsel %vm324, %v1096, 0.0
        %1341 = vadd.xlane.f32.xlu0 %v1340
        %v1342 = vpop.xlane.xlu0 %1341
        %v1343 = vsel %vm324, %v1097, 0.0
        %1344 = vadd.xlane.f32.xlu0 %v1343
        %v1345 = vpop.xlane.xlu0 %1344
        %v1346 = vsel %vm324, %v1098, 0.0
        %1347 = vadd.xlane.f32.xlu0 %v1346
        %v1348 = vpop.xlane.xlu0 %1347
        %v1349 = vsel %vm324, %v1099, 0.0
        %1350 = vadd.xlane.f32.xlu0 %v1349
        %v1351 = vpop.xlane.xlu0 %1350
        %v1352 = vsel %vm324, %v1100, 0.0
        %1353 = vadd.xlane.f32.xlu0 %v1352
        %v1354 = vpop.xlane.xlu0 %1353
        %v1355 = vsel %vm324, %v1101, 0.0
        %1356 = vadd.xlane.f32.xlu0 %v1355
        %v1357 = vpop.xlane.xlu0 %1356
        %v1358 = vsel %vm324, %v1102, 0.0
        %1359 = vadd.xlane.f32.xlu0 %v1358
        %v1360 = vpop.xlane.xlu0 %1359
        %v1361 = vsel %vm324, %v1103, 0.0
        %1362 = vadd.xlane.f32.xlu0 %v1361
        %v1363 = vpop.xlane.xlu0 %1362
        %v1364 = vsel %vm324, %v1104, 0.0
        %1365 = vadd.xlane.f32.xlu0 %v1364
        %v1366 = vpop.xlane.xlu0 %1365
        %v1367 = vsel %vm324, %v1105, 0.0
        %1368 = vadd.xlane.f32.xlu0 %v1367
        %v1369 = vpop.xlane.xlu0 %1368
        %v1370 = vsel %vm324, %v1106, 0.0
        %1371 = vadd.xlane.f32.xlu0 %v1370
        %v1372 = vpop.xlane.xlu0 %1371
        %v1373 = vsel %vm324, %v1107, 0.0
        %1374 = vadd.xlane.f32.xlu0 %v1373
        %v1375 = vpop.xlane.xlu0 %1374
        %v1376 = vsel %vm324, %v1108, 0.0
        %1377 = vadd.xlane.f32.xlu0 %v1376
        %v1378 = vpop.xlane.xlu0 %1377
        %v1379 = vsel %vm324, %v1109, 0.0
        %1380 = vadd.xlane.f32.xlu0 %v1379
        %v1381 = vpop.xlane.xlu0 %1380
        %v1382 = vsel %vm324, %v1110, 0.0
        %1383 = vadd.xlane.f32.xlu0 %v1382
        %v1384 = vpop.xlane.xlu0 %1383
        %v1385 = vsel %vm324, %v1111, 0.0
        %1386 = vadd.xlane.f32.xlu0 %v1385
        %v1387 = vpop.xlane.xlu0 %1386
        %v1388 = vsel %vm324, %v1112, 0.0
        %1389 = vadd.xlane.f32.xlu0 %v1388
        %v1390 = vpop.xlane.xlu0 %1389
        %v1391 = vsel %vm324, %v1113, 0.0
        %1392 = vadd.xlane.f32.xlu0 %v1391
        %v1393 = vpop.xlane.xlu0 %1392
        %v1394 = vsel %vm324, %v1114, 0.0
        %1395 = vadd.xlane.f32.xlu0 %v1394
        %v1396 = vpop.xlane.xlu0 %1395
        %v1397 = vsel %vm324, %v1115, 0.0
        %1398 = vadd.xlane.f32.xlu0 %v1397
        %v1399 = vpop.xlane.xlu0 %1398
        %v1400 = vsel %vm324, %v1116, 0.0
        %1401 = vadd.xlane.f32.xlu0 %v1400
        %v1402 = vpop.xlane.xlu0 %1401
        %v1403 = vsel %vm324, %v1117, 0.0
        %1404 = vadd.xlane.f32.xlu0 %v1403
        %v1405 = vpop.xlane.xlu0 %1404
        %v1406 = vsel %vm324, %v1118, 0.0
        %1407 = vadd.xlane.f32.xlu0 %v1406
        %v1408 = vpop.xlane.xlu0 %1407
        %v1409 = vsel %vm324, %v1119, 0.0
        %1410 = vadd.xlane.f32.xlu0 %v1409
        %v1411 = vpop.xlane.xlu0 %1410
        %v1412 = vsel %vm324, %v1120, 0.0
        %1413 = vadd.xlane.f32.xlu0 %v1412
        %v1414 = vpop.xlane.xlu0 %1413
        %v1415 = vsel %vm324, %v1121, 0.0
        %1416 = vadd.xlane.f32.xlu0 %v1415
        %v1417 = vpop.xlane.xlu0 %1416
        %v1418 = vsel %vm324, %v1122, 0.0
        %1419 = vadd.xlane.f32.xlu0 %v1418
        %v1420 = vpop.xlane.xlu0 %1419
        %v1421 = vsel %vm324, %v1123, 0.0
        %1422 = vadd.xlane.f32.xlu0 %v1421
        %v1423 = vpop.xlane.xlu0 %1422
        %v1424 = vsel %vm324, %v1124, 0.0
        %1425 = vadd.xlane.f32.xlu0 %v1424
        %v1426 = vpop.xlane.xlu0 %1425
        %v1427 = vsel %vm324, %v1125, 0.0
        %1428 = vadd.xlane.f32.xlu0 %v1427
        %v1429 = vpop.xlane.xlu0 %1428
        %v1430 = vsel %vm324, %v1126, 0.0
        %1431 = vadd.xlane.f32.xlu0 %v1430
        %v1432 = vpop.xlane.xlu0 %1431
        %v1433 = vsel %vm324, %v1127, 0.0
        %1434 = vadd.xlane.f32.xlu0 %v1433
        %v1435 = vpop.xlane.xlu0 %1434
        %v1436 = vsel %vm324, %v1128, 0.0
        %1437 = vadd.xlane.f32.xlu0 %v1436
        %v1438 = vpop.xlane.xlu0 %1437
        %v1439 = vsel %vm324, %v1129, 0.0
        %1440 = vadd.xlane.f32.xlu0 %v1439
        %v1441 = vpop.xlane.xlu0 %1440
        %v1442 = vsel %vm324, %v1130, 0.0
        %1443 = vadd.xlane.f32.xlu0 %v1442
        %v1444 = vpop.xlane.xlu0 %1443
        %v1445 = vsel %vm324, %v1131, 0.0
        %1446 = vadd.xlane.f32.xlu0 %v1445
        %v1447 = vpop.xlane.xlu0 %1446
        %v1448 = vsel %vm324, %v1132, 0.0
        %1449 = vadd.xlane.f32.xlu0 %v1448
        %v1450 = vpop.xlane.xlu0 %1449
        %v1451 = vsel %vm324, %v1133, 0.0
        %1452 = vadd.xlane.f32.xlu0 %v1451
        %v1453 = vpop.xlane.xlu0 %1452
        %v1454 = vsel %vm324, %v1134, 0.0
        %1455 = vadd.xlane.f32.xlu0 %v1454
        %v1456 = vpop.xlane.xlu0 %1455
        %v1457 = vsel %vm324, %v1135, 0.0
        %1458 = vadd.xlane.f32.xlu0 %v1457
        %v1459 = vpop.xlane.xlu0 %1458
        %v1460 = vsel %vm324, %v1136, 0.0
        %1461 = vadd.xlane.f32.xlu0 %v1460
        %v1462 = vpop.xlane.xlu0 %1461
        %v1463 = vsel %vm324, %v1137, 0.0
        %1464 = vadd.xlane.f32.xlu0 %v1463
        %v1465 = vpop.xlane.xlu0 %1464
        %v1466 = vsel %vm324, %v1138, 0.0
        %1467 = vadd.xlane.f32.xlu0 %v1466
        %v1468 = vpop.xlane.xlu0 %1467
        %v1469 = vsel %vm324, %v1139, 0.0
        %1470 = vadd.xlane.f32.xlu0 %v1469
        %v1471 = vpop.xlane.xlu0 %1470
        %v1472 = vsel %vm324, %v1140, 0.0
        %1473 = vadd.xlane.f32.xlu0 %v1472
        %v1474 = vpop.xlane.xlu0 %1473
        %v1475 = vsel %vm324, %v1141, 0.0
        %1476 = vadd.xlane.f32.xlu0 %v1475
        %v1477 = vpop.xlane.xlu0 %1476
        %v1478 = vsel %vm324, %v1142, 0.0
        %1479 = vadd.xlane.f32.xlu0 %v1478
        %v1480 = vpop.xlane.xlu0 %1479
        %v1481 = vsel %vm324, %v1143, 0.0
        %1482 = vadd.xlane.f32.xlu0 %v1481
        %v1483 = vpop.xlane.xlu0 %1482
        %v1484 = vsel %vm324, %v1144, 0.0
        %1485 = vadd.xlane.f32.xlu0 %v1484
        %v1486 = vpop.xlane.xlu0 %1485
        %v1487 = vsel %vm324, %v1145, 0.0
        %1488 = vadd.xlane.f32.xlu0 %v1487
        %v1489 = vpop.xlane.xlu0 %1488
        %v1490 = vsel %vm324, %v1146, 0.0
        %1491 = vadd.xlane.f32.xlu0 %v1490
        %v1492 = vpop.xlane.xlu0 %1491
        %v1493 = vsel %vm324, %v1147, 0.0
        %1494 = vadd.xlane.f32.xlu0 %v1493
        %v1495 = vpop.xlane.xlu0 %1494
        %v1496 = vsel %vm324, %v1148, 0.0
        %1497 = vadd.xlane.f32.xlu0 %v1496
        %v1498 = vpop.xlane.xlu0 %1497
        %v1499 = vsel %vm324, %v1149, 0.0
        %1500 = vadd.xlane.f32.xlu0 %v1499
        %v1501 = vpop.xlane.xlu0 %1500
        %v1502 = vsel %vm324, %v1150, 0.0
        %1503 = vadd.xlane.f32.xlu0 %v1502
        %v1504 = vpop.xlane.xlu0 %1503
        %v1505 = vsel %vm324, %v1151, 0.0
        %1506 = vadd.xlane.f32.xlu0 %v1505
        %v1507 = vpop.xlane.xlu0 %1506
        %v1508 = vsel %vm324, %v1152, 0.0
        %1509 = vadd.xlane.f32.xlu0 %v1508
        %v1510 = vpop.xlane.xlu0 %1509
        %v1511 = vsel %vm324, %v1153, 0.0
        %1512 = vadd.xlane.f32.xlu0 %v1511
        %v1513 = vpop.xlane.xlu0 %1512
        %v1514 = vsel %vm324, %v1154, 0.0
        %1515 = vadd.xlane.f32.xlu0 %v1514
        %v1516 = vpop.xlane.xlu0 %1515
        %v1517 = vsel %vm324, %v1155, 0.0
        %1518 = vadd.xlane.f32.xlu0 %v1517
        %v1519 = vpop.xlane.xlu0 %1518
        %v1520 = vsel %vm324, %v1156, 0.0
        %1521 = vadd.xlane.f32.xlu0 %v1520
        %v1522 = vpop.xlane.xlu0 %1521
        %v1523 = vsel %vm324, %v1157, 0.0
        %1524 = vadd.xlane.f32.xlu0 %v1523
        %v1525 = vpop.xlane.xlu0 %1524
        %v1526 = vsel %vm324, %v1158, 0.0
        %1527 = vadd.xlane.f32.xlu0 %v1526
        %v1528 = vpop.xlane.xlu0 %1527
        %v1529 = vsel %vm324, %v1159, 0.0
        %1530 = vadd.xlane.f32.xlu0 %v1529
        %v1531 = vpop.xlane.xlu0 %1530
        %v1532 = vsel %vm324, %v1160, 0.0
        %1533 = vadd.xlane.f32.xlu0 %v1532
        %v1534 = vpop.xlane.xlu0 %1533
        %v1535 = vsel %vm324, %v1161, 0.0
        %1536 = vadd.xlane.f32.xlu0 %v1535
        %v1537 = vpop.xlane.xlu0 %1536
        %v1538 = vsel %vm324, %v1162, 0.0
        %1539 = vadd.xlane.f32.xlu0 %v1538
        %v1540 = vpop.xlane.xlu0 %1539
        %v1541 = vsel %vm324, %v1163, 0.0
        %1542 = vadd.xlane.f32.xlu0 %v1541
        %v1543 = vpop.xlane.xlu0 %1542
        %v1544 = vsel %vm324, %v1164, 0.0
        %1545 = vadd.xlane.f32.xlu0 %v1544
        %v1546 = vpop.xlane.xlu0 %1545
        %v1547 = vsel %vm324, %v1165, 0.0
        %1548 = vadd.xlane.f32.xlu0 %v1547
        %v1549 = vpop.xlane.xlu0 %1548
        %v1550 = vrcp.pop 64.0
        %v1551 = vmul.f32 %v1168, %v1550
        %v1552 = vmul.f32 %v1171, %v1550
        %v1553 = vmul.f32 %v1174, %v1550
        %v1554 = vmul.f32 %v1177, %v1550
        %v1555 = vmul.f32 %v1180, %v1550
        %v1556 = vmul.f32 %v1183, %v1550
        %v1557 = vmul.f32 %v1186, %v1550
        %v1558 = vmul.f32 %v1189, %v1550
        %v1559 = vmul.f32 %v1192, %v1550
        %v1560 = vmul.f32 %v1195, %v1550
        %v1561 = vmul.f32 %v1198, %v1550
        %v1562 = vmul.f32 %v1201, %v1550
        %v1563 = vmul.f32 %v1204, %v1550
        %v1564 = vmul.f32 %v1207, %v1550
        %v1565 = vmul.f32 %v1210, %v1550
        %v1566 = vmul.f32 %v1213, %v1550
        %v1567 = vmul.f32 %v1216, %v1550
        %v1568 = vmul.f32 %v1219, %v1550
        %v1569 = vmul.f32 %v1222, %v1550
        %v1570 = vmul.f32 %v1225, %v1550
        %v1571 = vmul.f32 %v1228, %v1550
        %v1572 = vmul.f32 %v1231, %v1550
        %v1573 = vmul.f32 %v1234, %v1550
        %v1574 = vmul.f32 %v1237, %v1550
        %v1575 = vmul.f32 %v1240, %v1550
        %v1576 = vmul.f32 %v1243, %v1550
        %v1577 = vmul.f32 %v1246, %v1550
        %v1578 = vmul.f32 %v1249, %v1550
        %v1579 = vmul.f32 %v1252, %v1550
        %v1580 = vmul.f32 %v1255, %v1550
        %v1581 = vmul.f32 %v1258, %v1550
        %v1582 = vmul.f32 %v1261, %v1550
        %v1583 = vmul.f32 %v1264, %v1550
        %v1584 = vmul.f32 %v1267, %v1550
        %v1585 = vmul.f32 %v1270, %v1550
        %v1586 = vmul.f32 %v1273, %v1550
        %v1587 = vmul.f32 %v1276, %v1550
        %v1588 = vmul.f32 %v1279, %v1550
        %v1589 = vmul.f32 %v1282, %v1550
        %v1590 = vmul.f32 %v1285, %v1550
        %v1591 = vmul.f32 %v1288, %v1550
        %v1592 = vmul.f32 %v1291, %v1550
        %v1593 = vmul.f32 %v1294, %v1550
        %v1594 = vmul.f32 %v1297, %v1550
        %v1595 = vmul.f32 %v1300, %v1550
        %v1596 = vmul.f32 %v1303, %v1550
        %v1597 = vmul.f32 %v1306, %v1550
        %v1598 = vmul.f32 %v1309, %v1550
        %v1599 = vmul.f32 %v1312, %v1550
        %v1600 = vmul.f32 %v1315, %v1550
        %v1601 = vmul.f32 %v1318, %v1550
        %v1602 = vmul.f32 %v1321, %v1550
        %v1603 = vmul.f32 %v1324, %v1550
        %v1604 = vmul.f32 %v1327, %v1550
        %v1605 = vmul.f32 %v1330, %v1550
        %v1606 = vmul.f32 %v1333, %v1550
        %v1607 = vmul.f32 %v1336, %v1550
        %v1608 = vmul.f32 %v1339, %v1550
        %v1609 = vmul.f32 %v1342, %v1550
        %v1610 = vmul.f32 %v1345, %v1550
        %v1611 = vmul.f32 %v1348, %v1550
        %v1612 = vmul.f32 %v1351, %v1550
        %v1613 = vmul.f32 %v1354, %v1550
        %v1614 = vmul.f32 %v1357, %v1550
        %v1615 = vmul.f32 %v1360, %v1550
        %v1616 = vmul.f32 %v1363, %v1550
        %v1617 = vmul.f32 %v1366, %v1550
        %v1618 = vmul.f32 %v1369, %v1550
        %v1619 = vmul.f32 %v1372, %v1550
        %v1620 = vmul.f32 %v1375, %v1550
        %v1621 = vmul.f32 %v1378, %v1550
        %v1622 = vmul.f32 %v1381, %v1550
        %v1623 = vmul.f32 %v1384, %v1550
        %v1624 = vmul.f32 %v1387, %v1550
        %v1625 = vmul.f32 %v1390, %v1550
        %v1626 = vmul.f32 %v1393, %v1550
        %v1627 = vmul.f32 %v1396, %v1550
        %v1628 = vmul.f32 %v1399, %v1550
        %v1629 = vmul.f32 %v1402, %v1550
        %v1630 = vmul.f32 %v1405, %v1550
        %v1631 = vmul.f32 %v1408, %v1550
        %v1632 = vmul.f32 %v1411, %v1550
        %v1633 = vmul.f32 %v1414, %v1550
        %v1634 = vmul.f32 %v1417, %v1550
        %v1635 = vmul.f32 %v1420, %v1550
        %v1636 = vmul.f32 %v1423, %v1550
        %v1637 = vmul.f32 %v1426, %v1550
        %v1638 = vmul.f32 %v1429, %v1550
        %v1639 = vmul.f32 %v1432, %v1550
        %v1640 = vmul.f32 %v1435, %v1550
        %v1641 = vmul.f32 %v1438, %v1550
        %v1642 = vmul.f32 %v1441, %v1550
        %v1643 = vmul.f32 %v1444, %v1550
        %v1644 = vmul.f32 %v1447, %v1550
        %v1645 = vmul.f32 %v1450, %v1550
        %v1646 = vmul.f32 %v1453, %v1550
        %v1647 = vmul.f32 %v1456, %v1550
        %v1648 = vmul.f32 %v1459, %v1550
        %v1649 = vmul.f32 %v1462, %v1550
        %v1650 = vmul.f32 %v1465, %v1550
        %v1651 = vmul.f32 %v1468, %v1550
        %v1652 = vmul.f32 %v1471, %v1550
        %v1653 = vmul.f32 %v1474, %v1550
        %v1654 = vmul.f32 %v1477, %v1550
        %v1655 = vmul.f32 %v1480, %v1550
        %v1656 = vmul.f32 %v1483, %v1550
        %v1657 = vmul.f32 %v1486, %v1550
        %v1658 = vmul.f32 %v1489, %v1550
        %v1659 = vmul.f32 %v1492, %v1550
        %v1660 = vmul.f32 %v1495, %v1550
        %v1661 = vmul.f32 %v1498, %v1550
        %v1662 = vmul.f32 %v1501, %v1550
        %v1663 = vmul.f32 %v1504, %v1550
        %v1664 = vmul.f32 %v1507, %v1550
        %v1665 = vmul.f32 %v1510, %v1550
        %v1666 = vmul.f32 %v1513, %v1550
        %v1667 = vmul.f32 %v1516, %v1550
        %v1668 = vmul.f32 %v1519, %v1550
        %v1669 = vmul.f32 %v1522, %v1550
        %v1670 = vmul.f32 %v1525, %v1550
        %v1671 = vmul.f32 %v1528, %v1550
        %v1672 = vmul.f32 %v1531, %v1550
        %v1673 = vmul.f32 %v1534, %v1550
        %v1674 = vmul.f32 %v1537, %v1550
        %v1675 = vmul.f32 %v1540, %v1550
        %v1676 = vmul.f32 %v1543, %v1550
        %v1677 = vmul.f32 %v1546, %v1550
        %v1678 = vmul.f32 %v1549, %v1550
        %v1679 = vsel %vm324, %v1038, -inf
        %1680 = vmax.xlane.f32.xlu0 %v1679
        %v1681 = vpop.xlane.xlu0 %1680
        %v1682 = vsel %vm324, %v1039, -inf
        %1683 = vmax.xlane.f32.xlu0 %v1682
        %v1684 = vpop.xlane.xlu0 %1683
        %v1685 = vsel %vm324, %v1040, -inf
        %1686 = vmax.xlane.f32.xlu0 %v1685
        %v1687 = vpop.xlane.xlu0 %1686
        %v1688 = vsel %vm324, %v1041, -inf
        %1689 = vmax.xlane.f32.xlu0 %v1688
        %v1690 = vpop.xlane.xlu0 %1689
        %v1691 = vsel %vm324, %v1042, -inf
        %1692 = vmax.xlane.f32.xlu0 %v1691
        %v1693 = vpop.xlane.xlu0 %1692
        %v1694 = vsel %vm324, %v1043, -inf
        %1695 = vmax.xlane.f32.xlu0 %v1694
        %v1696 = vpop.xlane.xlu0 %1695
        %v1697 = vsel %vm324, %v1044, -inf
        %1698 = vmax.xlane.f32.xlu0 %v1697
        %v1699 = vpop.xlane.xlu0 %1698
        %v1700 = vsel %vm324, %v1045, -inf
        %1701 = vmax.xlane.f32.xlu0 %v1700
        %v1702 = vpop.xlane.xlu0 %1701
        %v1703 = vsel %vm324, %v1046, -inf
        %1704 = vmax.xlane.f32.xlu0 %v1703
        %v1705 = vpop.xlane.xlu0 %1704
        %v1706 = vsel %vm324, %v1047, -inf
        %1707 = vmax.xlane.f32.xlu0 %v1706
        %v1708 = vpop.xlane.xlu0 %1707
        %v1709 = vsel %vm324, %v1048, -inf
        %1710 = vmax.xlane.f32.xlu0 %v1709
        %v1711 = vpop.xlane.xlu0 %1710
        %v1712 = vsel %vm324, %v1049, -inf
        %1713 = vmax.xlane.f32.xlu0 %v1712
        %v1714 = vpop.xlane.xlu0 %1713
        %v1715 = vsel %vm324, %v1050, -inf
        %1716 = vmax.xlane.f32.xlu0 %v1715
        %v1717 = vpop.xlane.xlu0 %1716
        %v1718 = vsel %vm324, %v1051, -inf
        %1719 = vmax.xlane.f32.xlu0 %v1718
        %v1720 = vpop.xlane.xlu0 %1719
        %v1721 = vsel %vm324, %v1052, -inf
        %1722 = vmax.xlane.f32.xlu0 %v1721
        %v1723 = vpop.xlane.xlu0 %1722
        %v1724 = vsel %vm324, %v1053, -inf
        %1725 = vmax.xlane.f32.xlu0 %v1724
        %v1726 = vpop.xlane.xlu0 %1725
        %v1727 = vsel %vm324, %v1054, -inf
        %1728 = vmax.xlane.f32.xlu0 %v1727
        %v1729 = vpop.xlane.xlu0 %1728
        %v1730 = vsel %vm324, %v1055, -inf
        %1731 = vmax.xlane.f32.xlu0 %v1730
        %v1732 = vpop.xlane.xlu0 %1731
        %v1733 = vsel %vm324, %v1056, -inf
        %1734 = vmax.xlane.f32.xlu0 %v1733
        %v1735 = vpop.xlane.xlu0 %1734
        %v1736 = vsel %vm324, %v1057, -inf
        %1737 = vmax.xlane.f32.xlu0 %v1736
        %v1738 = vpop.xlane.xlu0 %1737
        %v1739 = vsel %vm324, %v1058, -inf
        %1740 = vmax.xlane.f32.xlu0 %v1739
        %v1741 = vpop.xlane.xlu0 %1740
        %v1742 = vsel %vm324, %v1059, -inf
        %1743 = vmax.xlane.f32.xlu0 %v1742
        %v1744 = vpop.xlane.xlu0 %1743
        %v1745 = vsel %vm324, %v1060, -inf
        %1746 = vmax.xlane.f32.xlu0 %v1745
        %v1747 = vpop.xlane.xlu0 %1746
        %v1748 = vsel %vm324, %v1061, -inf
        %1749 = vmax.xlane.f32.xlu0 %v1748
        %v1750 = vpop.xlane.xlu0 %1749
        %v1751 = vsel %vm324, %v1062, -inf
        %1752 = vmax.xlane.f32.xlu0 %v1751
        %v1753 = vpop.xlane.xlu0 %1752
        %v1754 = vsel %vm324, %v1063, -inf
        %1755 = vmax.xlane.f32.xlu0 %v1754
        %v1756 = vpop.xlane.xlu0 %1755
        %v1757 = vsel %vm324, %v1064, -inf
        %1758 = vmax.xlane.f32.xlu0 %v1757
        %v1759 = vpop.xlane.xlu0 %1758
        %v1760 = vsel %vm324, %v1065, -inf
        %1761 = vmax.xlane.f32.xlu0 %v1760
        %v1762 = vpop.xlane.xlu0 %1761
        %v1763 = vsel %vm324, %v1066, -inf
        %1764 = vmax.xlane.f32.xlu0 %v1763
        %v1765 = vpop.xlane.xlu0 %1764
        %v1766 = vsel %vm324, %v1067, -inf
        %1767 = vmax.xlane.f32.xlu0 %v1766
        %v1768 = vpop.xlane.xlu0 %1767
        %v1769 = vsel %vm324, %v1068, -inf
        %1770 = vmax.xlane.f32.xlu0 %v1769
        %v1771 = vpop.xlane.xlu0 %1770
        %v1772 = vsel %vm324, %v1069, -inf
        %1773 = vmax.xlane.f32.xlu0 %v1772
        %v1774 = vpop.xlane.xlu0 %1773
        %v1775 = vsel %vm324, %v1070, -inf
        %1776 = vmax.xlane.f32.xlu0 %v1775
        %v1777 = vpop.xlane.xlu0 %1776
        %v1778 = vsel %vm324, %v1071, -inf
        %1779 = vmax.xlane.f32.xlu0 %v1778
        %v1780 = vpop.xlane.xlu0 %1779
        %v1781 = vsel %vm324, %v1072, -inf
        %1782 = vmax.xlane.f32.xlu0 %v1781
        %v1783 = vpop.xlane.xlu0 %1782
        %v1784 = vsel %vm324, %v1073, -inf
        %1785 = vmax.xlane.f32.xlu0 %v1784
        %v1786 = vpop.xlane.xlu0 %1785
        %v1787 = vsel %vm324, %v1074, -inf
        %1788 = vmax.xlane.f32.xlu0 %v1787
        %v1789 = vpop.xlane.xlu0 %1788
        %v1790 = vsel %vm324, %v1075, -inf
        %1791 = vmax.xlane.f32.xlu0 %v1790
        %v1792 = vpop.xlane.xlu0 %1791
        %v1793 = vsel %vm324, %v1076, -inf
        %1794 = vmax.xlane.f32.xlu0 %v1793
        %v1795 = vpop.xlane.xlu0 %1794
        %v1796 = vsel %vm324, %v1077, -inf
        %1797 = vmax.xlane.f32.xlu0 %v1796
        %v1798 = vpop.xlane.xlu0 %1797
        %v1799 = vsel %vm324, %v1078, -inf
        %1800 = vmax.xlane.f32.xlu0 %v1799
        %v1801 = vpop.xlane.xlu0 %1800
        %v1802 = vsel %vm324, %v1079, -inf
        %1803 = vmax.xlane.f32.xlu0 %v1802
        %v1804 = vpop.xlane.xlu0 %1803
        %v1805 = vsel %vm324, %v1080, -inf
        %1806 = vmax.xlane.f32.xlu0 %v1805
        %v1807 = vpop.xlane.xlu0 %1806
        %v1808 = vsel %vm324, %v1081, -inf
        %1809 = vmax.xlane.f32.xlu0 %v1808
        %v1810 = vpop.xlane.xlu0 %1809
        %v1811 = vsel %vm324, %v1082, -inf
        %1812 = vmax.xlane.f32.xlu0 %v1811
        %v1813 = vpop.xlane.xlu0 %1812
        %v1814 = vsel %vm324, %v1083, -inf
        %1815 = vmax.xlane.f32.xlu0 %v1814
        %v1816 = vpop.xlane.xlu0 %1815
        %v1817 = vsel %vm324, %v1084, -inf
        %1818 = vmax.xlane.f32.xlu0 %v1817
        %v1819 = vpop.xlane.xlu0 %1818
        %v1820 = vsel %vm324, %v1085, -inf
        %1821 = vmax.xlane.f32.xlu0 %v1820
        %v1822 = vpop.xlane.xlu0 %1821
        %v1823 = vsel %vm324, %v1086, -inf
        %1824 = vmax.xlane.f32.xlu0 %v1823
        %v1825 = vpop.xlane.xlu0 %1824
        %v1826 = vsel %vm324, %v1087, -inf
        %1827 = vmax.xlane.f32.xlu0 %v1826
        %v1828 = vpop.xlane.xlu0 %1827
        %v1829 = vsel %vm324, %v1088, -inf
        %1830 = vmax.xlane.f32.xlu0 %v1829
        %v1831 = vpop.xlane.xlu0 %1830
        %v1832 = vsel %vm324, %v1089, -inf
        %1833 = vmax.xlane.f32.xlu0 %v1832
        %v1834 = vpop.xlane.xlu0 %1833
        %v1835 = vsel %vm324, %v1090, -inf
        %1836 = vmax.xlane.f32.xlu0 %v1835
        %v1837 = vpop.xlane.xlu0 %1836
        %v1838 = vsel %vm324, %v1091, -inf
        %1839 = vmax.xlane.f32.xlu0 %v1838
        %v1840 = vpop.xlane.xlu0 %1839
        %v1841 = vsel %vm324, %v1092, -inf
        %1842 = vmax.xlane.f32.xlu0 %v1841
        %v1843 = vpop.xlane.xlu0 %1842
        %v1844 = vsel %vm324, %v1093, -inf
        %1845 = vmax.xlane.f32.xlu0 %v1844
        %v1846 = vpop.xlane.xlu0 %1845
        %v1847 = vsel %vm324, %v1094, -inf
        %1848 = vmax.xlane.f32.xlu0 %v1847
        %v1849 = vpop.xlane.xlu0 %1848
        %v1850 = vsel %vm324, %v1095, -inf
        %1851 = vmax.xlane.f32.xlu0 %v1850
        %v1852 = vpop.xlane.xlu0 %1851
        %v1853 = vsel %vm324, %v1096, -inf
        %1854 = vmax.xlane.f32.xlu0 %v1853
        %v1855 = vpop.xlane.xlu0 %1854
        %v1856 = vsel %vm324, %v1097, -inf
        %1857 = vmax.xlane.f32.xlu0 %v1856
        %v1858 = vpop.xlane.xlu0 %1857
        %v1859 = vsel %vm324, %v1098, -inf
        %1860 = vmax.xlane.f32.xlu0 %v1859
        %v1861 = vpop.xlane.xlu0 %1860
        %v1862 = vsel %vm324, %v1099, -inf
        %1863 = vmax.xlane.f32.xlu0 %v1862
        %v1864 = vpop.xlane.xlu0 %1863
        %v1865 = vsel %vm324, %v1100, -inf
        %1866 = vmax.xlane.f32.xlu0 %v1865
        %v1867 = vpop.xlane.xlu0 %1866
        %v1868 = vsel %vm324, %v1101, -inf
        %1869 = vmax.xlane.f32.xlu0 %v1868
        %v1870 = vpop.xlane.xlu0 %1869
        %v1871 = vsel %vm324, %v1102, -inf
        %1872 = vmax.xlane.f32.xlu0 %v1871
        %v1873 = vpop.xlane.xlu0 %1872
        %v1874 = vsel %vm324, %v1103, -inf
        %1875 = vmax.xlane.f32.xlu0 %v1874
        %v1876 = vpop.xlane.xlu0 %1875
        %v1877 = vsel %vm324, %v1104, -inf
        %1878 = vmax.xlane.f32.xlu0 %v1877
        %v1879 = vpop.xlane.xlu0 %1878
        %v1880 = vsel %vm324, %v1105, -inf
        %1881 = vmax.xlane.f32.xlu0 %v1880
        %v1882 = vpop.xlane.xlu0 %1881
        %v1883 = vsel %vm324, %v1106, -inf
        %1884 = vmax.xlane.f32.xlu0 %v1883
        %v1885 = vpop.xlane.xlu0 %1884
        %v1886 = vsel %vm324, %v1107, -inf
        %1887 = vmax.xlane.f32.xlu0 %v1886
        %v1888 = vpop.xlane.xlu0 %1887
        %v1889 = vsel %vm324, %v1108, -inf
        %1890 = vmax.xlane.f32.xlu0 %v1889
        %v1891 = vpop.xlane.xlu0 %1890
        %v1892 = vsel %vm324, %v1109, -inf
        %1893 = vmax.xlane.f32.xlu0 %v1892
        %v1894 = vpop.xlane.xlu0 %1893
        %v1895 = vsel %vm324, %v1110, -inf
        %1896 = vmax.xlane.f32.xlu0 %v1895
        %v1897 = vpop.xlane.xlu0 %1896
        %v1898 = vsel %vm324, %v1111, -inf
        %1899 = vmax.xlane.f32.xlu0 %v1898
        %v1900 = vpop.xlane.xlu0 %1899
        %v1901 = vsel %vm324, %v1112, -inf
        %1902 = vmax.xlane.f32.xlu0 %v1901
        %v1903 = vpop.xlane.xlu0 %1902
        %v1904 = vsel %vm324, %v1113, -inf
        %1905 = vmax.xlane.f32.xlu0 %v1904
        %v1906 = vpop.xlane.xlu0 %1905
        %v1907 = vsel %vm324, %v1114, -inf
        %1908 = vmax.xlane.f32.xlu0 %v1907
        %v1909 = vpop.xlane.xlu0 %1908
        %v1910 = vsel %vm324, %v1115, -inf
        %1911 = vmax.xlane.f32.xlu0 %v1910
        %v1912 = vpop.xlane.xlu0 %1911
        %v1913 = vsel %vm324, %v1116, -inf
        %1914 = vmax.xlane.f32.xlu0 %v1913
        %v1915 = vpop.xlane.xlu0 %1914
        %v1916 = vsel %vm324, %v1117, -inf
        %1917 = vmax.xlane.f32.xlu0 %v1916
        %v1918 = vpop.xlane.xlu0 %1917
        %v1919 = vsel %vm324, %v1118, -inf
        %1920 = vmax.xlane.f32.xlu0 %v1919
        %v1921 = vpop.xlane.xlu0 %1920
        %v1922 = vsel %vm324, %v1119, -inf
        %1923 = vmax.xlane.f32.xlu0 %v1922
        %v1924 = vpop.xlane.xlu0 %1923
        %v1925 = vsel %vm324, %v1120, -inf
        %1926 = vmax.xlane.f32.xlu0 %v1925
        %v1927 = vpop.xlane.xlu0 %1926
        %v1928 = vsel %vm324, %v1121, -inf
        %1929 = vmax.xlane.f32.xlu0 %v1928
        %v1930 = vpop.xlane.xlu0 %1929
        %v1931 = vsel %vm324, %v1122, -inf
        %1932 = vmax.xlane.f32.xlu0 %v1931
        %v1933 = vpop.xlane.xlu0 %1932
        %v1934 = vsel %vm324, %v1123, -inf
        %1935 = vmax.xlane.f32.xlu0 %v1934
        %v1936 = vpop.xlane.xlu0 %1935
        %v1937 = vsel %vm324, %v1124, -inf
        %1938 = vmax.xlane.f32.xlu0 %v1937
        %v1939 = vpop.xlane.xlu0 %1938
        %v1940 = vsel %vm324, %v1125, -inf
        %1941 = vmax.xlane.f32.xlu0 %v1940
        %v1942 = vpop.xlane.xlu0 %1941
        %v1943 = vsel %vm324, %v1126, -inf
        %1944 = vmax.xlane.f32.xlu0 %v1943
        %v1945 = vpop.xlane.xlu0 %1944
        %v1946 = vsel %vm324, %v1127, -inf
        %1947 = vmax.xlane.f32.xlu0 %v1946
        %v1948 = vpop.xlane.xlu0 %1947
        %v1949 = vsel %vm324, %v1128, -inf
        %1950 = vmax.xlane.f32.xlu0 %v1949
        %v1951 = vpop.xlane.xlu0 %1950
        %v1952 = vsel %vm324, %v1129, -inf
        %1953 = vmax.xlane.f32.xlu0 %v1952
        %v1954 = vpop.xlane.xlu0 %1953
        %v1955 = vsel %vm324, %v1130, -inf
        %1956 = vmax.xlane.f32.xlu0 %v1955
        %v1957 = vpop.xlane.xlu0 %1956
        %v1958 = vsel %vm324, %v1131, -inf
        %1959 = vmax.xlane.f32.xlu0 %v1958
        %v1960 = vpop.xlane.xlu0 %1959
        %v1961 = vsel %vm324, %v1132, -inf
        %1962 = vmax.xlane.f32.xlu0 %v1961
        %v1963 = vpop.xlane.xlu0 %1962
        %v1964 = vsel %vm324, %v1133, -inf
        %1965 = vmax.xlane.f32.xlu0 %v1964
        %v1966 = vpop.xlane.xlu0 %1965
        %v1967 = vsel %vm324, %v1134, -inf
        %1968 = vmax.xlane.f32.xlu0 %v1967
        %v1969 = vpop.xlane.xlu0 %1968
        %v1970 = vsel %vm324, %v1135, -inf
        %1971 = vmax.xlane.f32.xlu0 %v1970
        %v1972 = vpop.xlane.xlu0 %1971
        %v1973 = vsel %vm324, %v1136, -inf
        %1974 = vmax.xlane.f32.xlu0 %v1973
        %v1975 = vpop.xlane.xlu0 %1974
        %v1976 = vsel %vm324, %v1137, -inf
        %1977 = vmax.xlane.f32.xlu0 %v1976
        %v1978 = vpop.xlane.xlu0 %1977
        %v1979 = vsel %vm324, %v1138, -inf
        %1980 = vmax.xlane.f32.xlu0 %v1979
        %v1981 = vpop.xlane.xlu0 %1980
        %v1982 = vsel %vm324, %v1139, -inf
        %1983 = vmax.xlane.f32.xlu0 %v1982
        %v1984 = vpop.xlane.xlu0 %1983
        %v1985 = vsel %vm324, %v1140, -inf
        %1986 = vmax.xlane.f32.xlu0 %v1985
        %v1987 = vpop.xlane.xlu0 %1986
        %v1988 = vsel %vm324, %v1141, -inf
        %1989 = vmax.xlane.f32.xlu0 %v1988
        %v1990 = vpop.xlane.xlu0 %1989
        %v1991 = vsel %vm324, %v1142, -inf
        %1992 = vmax.xlane.f32.xlu0 %v1991
        %v1993 = vpop.xlane.xlu0 %1992
        %v1994 = vsel %vm324, %v1143, -inf
        %1995 = vmax.xlane.f32.xlu0 %v1994
        %v1996 = vpop.xlane.xlu0 %1995
        %v1997 = vsel %vm324, %v1144, -inf
        %1998 = vmax.xlane.f32.xlu0 %v1997
        %v1999 = vpop.xlane.xlu0 %1998
        %v2000 = vsel %vm324, %v1145, -inf
        %2001 = vmax.xlane.f32.xlu0 %v2000
        %v2002 = vpop.xlane.xlu0 %2001
        %v2003 = vsel %vm324, %v1146, -inf
        %2004 = vmax.xlane.f32.xlu0 %v2003
        %v2005 = vpop.xlane.xlu0 %2004
        %v2006 = vsel %vm324, %v1147, -inf
        %2007 = vmax.xlane.f32.xlu0 %v2006
        %v2008 = vpop.xlane.xlu0 %2007
        %v2009 = vsel %vm324, %v1148, -inf
        %2010 = vmax.xlane.f32.xlu0 %v2009
        %v2011 = vpop.xlane.xlu0 %2010
        %v2012 = vsel %vm324, %v1149, -inf
        %2013 = vmax.xlane.f32.xlu0 %v2012
        %v2014 = vpop.xlane.xlu0 %2013
        %v2015 = vsel %vm324, %v1150, -inf
        %2016 = vmax.xlane.f32.xlu0 %v2015
        %v2017 = vpop.xlane.xlu0 %2016
        %v2018 = vsel %vm324, %v1151, -inf
        %2019 = vmax.xlane.f32.xlu0 %v2018
        %v2020 = vpop.xlane.xlu0 %2019
        %v2021 = vsel %vm324, %v1152, -inf
        %2022 = vmax.xlane.f32.xlu0 %v2021
        %v2023 = vpop.xlane.xlu0 %2022
        %v2024 = vsel %vm324, %v1153, -inf
        %2025 = vmax.xlane.f32.xlu0 %v2024
        %v2026 = vpop.xlane.xlu0 %2025
        %v2027 = vsel %vm324, %v1154, -inf
        %2028 = vmax.xlane.f32.xlu0 %v2027
        %v2029 = vpop.xlane.xlu0 %2028
        %v2030 = vsel %vm324, %v1155, -inf
        %2031 = vmax.xlane.f32.xlu0 %v2030
        %v2032 = vpop.xlane.xlu0 %2031
        %v2033 = vsel %vm324, %v1156, -inf
        %2034 = vmax.xlane.f32.xlu0 %v2033
        %v2035 = vpop.xlane.xlu0 %2034
        %v2036 = vsel %vm324, %v1157, -inf
        %2037 = vmax.xlane.f32.xlu0 %v2036
        %v2038 = vpop.xlane.xlu0 %2037
        %v2039 = vsel %vm324, %v1158, -inf
        %2040 = vmax.xlane.f32.xlu0 %v2039
        %v2041 = vpop.xlane.xlu0 %2040
        %v2042 = vsel %vm324, %v1159, -inf
        %2043 = vmax.xlane.f32.xlu0 %v2042
        %v2044 = vpop.xlane.xlu0 %2043
        %v2045 = vsel %vm324, %v1160, -inf
        %2046 = vmax.xlane.f32.xlu0 %v2045
        %v2047 = vpop.xlane.xlu0 %2046
        %v2048 = vsel %vm324, %v1161, -inf
        %2049 = vmax.xlane.f32.xlu0 %v2048
        %v2050 = vpop.xlane.xlu0 %2049
        %v2051 = vsel %vm324, %v1162, -inf
        %2052 = vmax.xlane.f32.xlu0 %v2051
        %v2053 = vpop.xlane.xlu0 %2052
        %v2054 = vsel %vm324, %v1163, -inf
        %2055 = vmax.xlane.f32.xlu0 %v2054
        %v2056 = vpop.xlane.xlu0 %2055
        %v2057 = vsel %vm324, %v1164, -inf
        %2058 = vmax.xlane.f32.xlu0 %v2057
        %v2059 = vpop.xlane.xlu0 %2058
        %v2060 = vsel %vm324, %v1165, -inf
        %2061 = vmax.xlane.f32.xlu0 %v2060
        %v2062 = vpop.xlane.xlu0 %2061
        %v2191 = vlaneseq
        %v2192 = vand.u32 %v2191, 127
        %v2193 = vlaneseq
        %v2194 = vshrl.u32 %v2193, 7
        %v2195 = vsub.s32 %v2192, %v2194
        %v2196 = vrot.slane %v1551, %v2195
        %v2197 = vadd.s32 %v2192, 4294967288
        %v2198 = vlaneseq
        %v2199 = vshrl.u32 %v2198, 7
        %v2200 = vsub.s32 %v2197, %v2199
        %v2201 = vrot.slane %v1552, %v2200
        %vm2202 = vcmask 130112
        %v2203 = vsel %vm2202, %v2201, %v2196
        %v2204 = vadd.s32 %v2192, 4294967280
        %v2205 = vlaneseq
        %v2206 = vshrl.u32 %v2205, 7
        %v2207 = vsub.s32 %v2204, %v2206
        %v2208 = vrot.slane %v1553, %v2207
        %vm2209 = vcmask 195712
        %v2210 = vsel %vm2209, %v2208, %v2203
        %v2211 = vadd.s32 %v2192, 4294967272
        %v2212 = vlaneseq
        %v2213 = vshrl.u32 %v2212, 7
        %v2214 = vsub.s32 %v2211, %v2213
        %v2215 = vrot.slane %v1554, %v2214
        %vm2216 = vcmask 261312
        %v2217 = vsel %vm2216, %v2215, %v2210
        %v2218 = vlaneseq
        %v2219 = vshrl.u32 %v2218, 7
        %v2220 = vsub.s32 %v2192, %v2219
        %v2221 = vrot.slane %v1555, %v2220
        %v2222 = vlaneseq
        %v2223 = vshrl.u32 %v2222, 7
        %v2224 = vsub.s32 %v2197, %v2223
        %v2225 = vrot.slane %v1556, %v2224
        %v2226 = vsel %vm2202, %v2225, %v2221
        %v2227 = vlaneseq
        %v2228 = vshrl.u32 %v2227, 7
        %v2229 = vsub.s32 %v2204, %v2228
        %v2230 = vrot.slane %v1557, %v2229
        %v2231 = vsel %vm2209, %v2230, %v2226
        %v2232 = vlaneseq
        %v2233 = vshrl.u32 %v2232, 7
        %v2234 = vsub.s32 %v2211, %v2233
        %v2235 = vrot.slane %v1558, %v2234
        %v2236 = vsel %vm2216, %v2235, %v2231
        %v2237 = vlaneseq
        %v2238 = vshrl.u32 %v2237, 7
        %v2239 = vsub.s32 %v2192, %v2238
        %v2240 = vrot.slane %v1559, %v2239
        %v2241 = vlaneseq
        %v2242 = vshrl.u32 %v2241, 7
        %v2243 = vsub.s32 %v2197, %v2242
        %v2244 = vrot.slane %v1560, %v2243
        %v2245 = vsel %vm2202, %v2244, %v2240
        %v2246 = vlaneseq
        %v2247 = vshrl.u32 %v2246, 7
        %v2248 = vsub.s32 %v2204, %v2247
        %v2249 = vrot.slane %v1561, %v2248
        %v2250 = vsel %vm2209, %v2249, %v2245
        %v2251 = vlaneseq
        %v2252 = vshrl.u32 %v2251, 7
        %v2253 = vsub.s32 %v2211, %v2252
        %v2254 = vrot.slane %v1562, %v2253
        %v2255 = vsel %vm2216, %v2254, %v2250
        %v2256 = vlaneseq
        %v2257 = vshrl.u32 %v2256, 7
        %v2258 = vsub.s32 %v2192, %v2257
        %v2259 = vrot.slane %v1563, %v2258
        %v2260 = vlaneseq
        %v2261 = vshrl.u32 %v2260, 7
        %v2262 = vsub.s32 %v2197, %v2261
        %v2263 = vrot.slane %v1564, %v2262
        %v2264 = vsel %vm2202, %v2263, %v2259
        %v2265 = vlaneseq
        %v2266 = vshrl.u32 %v2265, 7
        %v2267 = vsub.s32 %v2204, %v2266
        %v2268 = vrot.slane %v1565, %v2267
        %v2269 = vsel %vm2209, %v2268, %v2264
        %v2270 = vlaneseq
        %v2271 = vshrl.u32 %v2270, 7
        %v2272 = vsub.s32 %v2211, %v2271
        %v2273 = vrot.slane %v1566, %v2272
        %v2274 = vsel %vm2216, %v2273, %v2269
        %v2275 = vlaneseq
        %v2276 = vshrl.u32 %v2275, 7
        %v2277 = vsub.s32 %v2192, %v2276
        %v2278 = vrot.slane %v1567, %v2277
        %v2279 = vlaneseq
        %v2280 = vshrl.u32 %v2279, 7
        %v2281 = vsub.s32 %v2197, %v2280
        %v2282 = vrot.slane %v1568, %v2281
        %v2283 = vsel %vm2202, %v2282, %v2278
        %v2284 = vlaneseq
        %v2285 = vshrl.u32 %v2284, 7
        %v2286 = vsub.s32 %v2204, %v2285
        %v2287 = vrot.slane %v1569, %v2286
        %v2288 = vsel %vm2209, %v2287, %v2283
        %v2289 = vlaneseq
        %v2290 = vshrl.u32 %v2289, 7
        %v2291 = vsub.s32 %v2211, %v2290
        %v2292 = vrot.slane %v1570, %v2291
        %v2293 = vsel %vm2216, %v2292, %v2288
        %v2294 = vlaneseq
        %v2295 = vshrl.u32 %v2294, 7
        %v2296 = vsub.s32 %v2192, %v2295
        %v2297 = vrot.slane %v1571, %v2296
        %v2298 = vlaneseq
        %v2299 = vshrl.u32 %v2298, 7
        %v2300 = vsub.s32 %v2197, %v2299
        %v2301 = vrot.slane %v1572, %v2300
        %v2302 = vsel %vm2202, %v2301, %v2297
        %v2303 = vlaneseq
        %v2304 = vshrl.u32 %v2303, 7
        %v2305 = vsub.s32 %v2204, %v2304
        %v2306 = vrot.slane %v1573, %v2305
        %v2307 = vsel %vm2209, %v2306, %v2302
        %v2308 = vlaneseq
        %v2309 = vshrl.u32 %v2308, 7
        %v2310 = vsub.s32 %v2211, %v2309
        %v2311 = vrot.slane %v1574, %v2310
        %v2312 = vsel %vm2216, %v2311, %v2307
        %v2313 = vlaneseq
        %v2314 = vshrl.u32 %v2313, 7
        %v2315 = vsub.s32 %v2192, %v2314
        %v2316 = vrot.slane %v1575, %v2315
        %v2317 = vlaneseq
        %v2318 = vshrl.u32 %v2317, 7
        %v2319 = vsub.s32 %v2197, %v2318
        %v2320 = vrot.slane %v1576, %v2319
        %v2321 = vsel %vm2202, %v2320, %v2316
        %v2322 = vlaneseq
        %v2323 = vshrl.u32 %v2322, 7
        %v2324 = vsub.s32 %v2204, %v2323
        %v2325 = vrot.slane %v1577, %v2324
        %v2326 = vsel %vm2209, %v2325, %v2321
        %v2327 = vlaneseq
        %v2328 = vshrl.u32 %v2327, 7
        %v2329 = vsub.s32 %v2211, %v2328
        %v2330 = vrot.slane %v1578, %v2329
        %v2331 = vsel %vm2216, %v2330, %v2326
        %v2332 = vlaneseq
        %v2333 = vshrl.u32 %v2332, 7
        %v2334 = vsub.s32 %v2192, %v2333
        %v2335 = vrot.slane %v1579, %v2334
        %v2336 = vlaneseq
        %v2337 = vshrl.u32 %v2336, 7
        %v2338 = vsub.s32 %v2197, %v2337
        %v2339 = vrot.slane %v1580, %v2338
        %v2340 = vsel %vm2202, %v2339, %v2335
        %v2341 = vlaneseq
        %v2342 = vshrl.u32 %v2341, 7
        %v2343 = vsub.s32 %v2204, %v2342
        %v2344 = vrot.slane %v1581, %v2343
        %v2345 = vsel %vm2209, %v2344, %v2340
        %v2346 = vlaneseq
        %v2347 = vshrl.u32 %v2346, 7
        %v2348 = vsub.s32 %v2211, %v2347
        %v2349 = vrot.slane %v1582, %v2348
        %v2350 = vsel %vm2216, %v2349, %v2345
        %v2351 = vlaneseq
        %v2352 = vshrl.u32 %v2351, 7
        %v2353 = vsub.s32 %v2192, %v2352
        %v2354 = vrot.slane %v1583, %v2353
        %v2355 = vlaneseq
        %v2356 = vshrl.u32 %v2355, 7
        %v2357 = vsub.s32 %v2197, %v2356
        %v2358 = vrot.slane %v1584, %v2357
        %v2359 = vsel %vm2202, %v2358, %v2354
        %v2360 = vlaneseq
        %v2361 = vshrl.u32 %v2360, 7
        %v2362 = vsub.s32 %v2204, %v2361
        %v2363 = vrot.slane %v1585, %v2362
        %v2364 = vsel %vm2209, %v2363, %v2359
        %v2365 = vlaneseq
        %v2366 = vshrl.u32 %v2365, 7
        %v2367 = vsub.s32 %v2211, %v2366
        %v2368 = vrot.slane %v1586, %v2367
        %v2369 = vsel %vm2216, %v2368, %v2364
        %v2370 = vlaneseq
        %v2371 = vshrl.u32 %v2370, 7
        %v2372 = vsub.s32 %v2192, %v2371
        %v2373 = vrot.slane %v1587, %v2372
        %v2374 = vlaneseq
        %v2375 = vshrl.u32 %v2374, 7
        %v2376 = vsub.s32 %v2197, %v2375
        %v2377 = vrot.slane %v1588, %v2376
        %v2378 = vsel %vm2202, %v2377, %v2373
        %v2379 = vlaneseq
        %v2380 = vshrl.u32 %v2379, 7
        %v2381 = vsub.s32 %v2204, %v2380
        %v2382 = vrot.slane %v1589, %v2381
        %v2383 = vsel %vm2209, %v2382, %v2378
        %v2384 = vlaneseq
        %v2385 = vshrl.u32 %v2384, 7
        %v2386 = vsub.s32 %v2211, %v2385
        %v2387 = vrot.slane %v1590, %v2386
        %v2388 = vsel %vm2216, %v2387, %v2383
        %v2389 = vlaneseq
        %v2390 = vshrl.u32 %v2389, 7
        %v2391 = vsub.s32 %v2192, %v2390
        %v2392 = vrot.slane %v1591, %v2391
        %v2393 = vlaneseq
        %v2394 = vshrl.u32 %v2393, 7
        %v2395 = vsub.s32 %v2197, %v2394
        %v2396 = vrot.slane %v1592, %v2395
        %v2397 = vsel %vm2202, %v2396, %v2392
        %v2398 = vlaneseq
        %v2399 = vshrl.u32 %v2398, 7
        %v2400 = vsub.s32 %v2204, %v2399
        %v2401 = vrot.slane %v1593, %v2400
        %v2402 = vsel %vm2209, %v2401, %v2397
        %v2403 = vlaneseq
        %v2404 = vshrl.u32 %v2403, 7
        %v2405 = vsub.s32 %v2211, %v2404
        %v2406 = vrot.slane %v1594, %v2405
        %v2407 = vsel %vm2216, %v2406, %v2402
        %v2408 = vlaneseq
        %v2409 = vshrl.u32 %v2408, 7
        %v2410 = vsub.s32 %v2192, %v2409
        %v2411 = vrot.slane %v1595, %v2410
        %v2412 = vlaneseq
        %v2413 = vshrl.u32 %v2412, 7
        %v2414 = vsub.s32 %v2197, %v2413
        %v2415 = vrot.slane %v1596, %v2414
        %v2416 = vsel %vm2202, %v2415, %v2411
        %v2417 = vlaneseq
        %v2418 = vshrl.u32 %v2417, 7
        %v2419 = vsub.s32 %v2204, %v2418
        %v2420 = vrot.slane %v1597, %v2419
        %v2421 = vsel %vm2209, %v2420, %v2416
        %v2422 = vlaneseq
        %v2423 = vshrl.u32 %v2422, 7
        %v2424 = vsub.s32 %v2211, %v2423
        %v2425 = vrot.slane %v1598, %v2424
        %v2426 = vsel %vm2216, %v2425, %v2421
        %v2427 = vlaneseq
        %v2428 = vshrl.u32 %v2427, 7
        %v2429 = vsub.s32 %v2192, %v2428
        %v2430 = vrot.slane %v1599, %v2429
        %v2431 = vlaneseq
        %v2432 = vshrl.u32 %v2431, 7
        %v2433 = vsub.s32 %v2197, %v2432
        %v2434 = vrot.slane %v1600, %v2433
        %v2435 = vsel %vm2202, %v2434, %v2430
        %v2436 = vlaneseq
        %v2437 = vshrl.u32 %v2436, 7
        %v2438 = vsub.s32 %v2204, %v2437
        %v2439 = vrot.slane %v1601, %v2438
        %v2440 = vsel %vm2209, %v2439, %v2435
        %v2441 = vlaneseq
        %v2442 = vshrl.u32 %v2441, 7
        %v2443 = vsub.s32 %v2211, %v2442
        %v2444 = vrot.slane %v1602, %v2443
        %v2445 = vsel %vm2216, %v2444, %v2440
        %v2446 = vlaneseq
        %v2447 = vshrl.u32 %v2446, 7
        %v2448 = vsub.s32 %v2192, %v2447
        %v2449 = vrot.slane %v1603, %v2448
        %v2450 = vlaneseq
        %v2451 = vshrl.u32 %v2450, 7
        %v2452 = vsub.s32 %v2197, %v2451
        %v2453 = vrot.slane %v1604, %v2452
        %v2454 = vsel %vm2202, %v2453, %v2449
        %v2455 = vlaneseq
        %v2456 = vshrl.u32 %v2455, 7
        %v2457 = vsub.s32 %v2204, %v2456
        %v2458 = vrot.slane %v1605, %v2457
        %v2459 = vsel %vm2209, %v2458, %v2454
        %v2460 = vlaneseq
        %v2461 = vshrl.u32 %v2460, 7
        %v2462 = vsub.s32 %v2211, %v2461
        %v2463 = vrot.slane %v1606, %v2462
        %v2464 = vsel %vm2216, %v2463, %v2459
        %v2465 = vlaneseq
        %v2466 = vshrl.u32 %v2465, 7
        %v2467 = vsub.s32 %v2192, %v2466
        %v2468 = vrot.slane %v1607, %v2467
        %v2469 = vlaneseq
        %v2470 = vshrl.u32 %v2469, 7
        %v2471 = vsub.s32 %v2197, %v2470
        %v2472 = vrot.slane %v1608, %v2471
        %v2473 = vsel %vm2202, %v2472, %v2468
        %v2474 = vlaneseq
        %v2475 = vshrl.u32 %v2474, 7
        %v2476 = vsub.s32 %v2204, %v2475
        %v2477 = vrot.slane %v1609, %v2476
        %v2478 = vsel %vm2209, %v2477, %v2473
        %v2479 = vlaneseq
        %v2480 = vshrl.u32 %v2479, 7
        %v2481 = vsub.s32 %v2211, %v2480
        %v2482 = vrot.slane %v1610, %v2481
        %v2483 = vsel %vm2216, %v2482, %v2478
        %v2484 = vlaneseq
        %v2485 = vshrl.u32 %v2484, 7
        %v2486 = vsub.s32 %v2192, %v2485
        %v2487 = vrot.slane %v1611, %v2486
        %v2488 = vlaneseq
        %v2489 = vshrl.u32 %v2488, 7
        %v2490 = vsub.s32 %v2197, %v2489
        %v2491 = vrot.slane %v1612, %v2490
        %v2492 = vsel %vm2202, %v2491, %v2487
        %v2493 = vlaneseq
        %v2494 = vshrl.u32 %v2493, 7
        %v2495 = vsub.s32 %v2204, %v2494
        %v2496 = vrot.slane %v1613, %v2495
        %v2497 = vsel %vm2209, %v2496, %v2492
        %v2498 = vlaneseq
        %v2499 = vshrl.u32 %v2498, 7
        %v2500 = vsub.s32 %v2211, %v2499
        %v2501 = vrot.slane %v1614, %v2500
        %v2502 = vsel %vm2216, %v2501, %v2497
        %v2503 = vlaneseq
        %v2504 = vshrl.u32 %v2503, 7
        %v2505 = vsub.s32 %v2192, %v2504
        %v2506 = vrot.slane %v1615, %v2505
        %v2507 = vlaneseq
        %v2508 = vshrl.u32 %v2507, 7
        %v2509 = vsub.s32 %v2197, %v2508
        %v2510 = vrot.slane %v1616, %v2509
        %v2511 = vsel %vm2202, %v2510, %v2506
        %v2512 = vlaneseq
        %v2513 = vshrl.u32 %v2512, 7
        %v2514 = vsub.s32 %v2204, %v2513
        %v2515 = vrot.slane %v1617, %v2514
        %v2516 = vsel %vm2209, %v2515, %v2511
        %v2517 = vlaneseq
        %v2518 = vshrl.u32 %v2517, 7
        %v2519 = vsub.s32 %v2211, %v2518
        %v2520 = vrot.slane %v1618, %v2519
        %v2521 = vsel %vm2216, %v2520, %v2516
        %v2522 = vlaneseq
        %v2523 = vshrl.u32 %v2522, 7
        %v2524 = vsub.s32 %v2192, %v2523
        %v2525 = vrot.slane %v1619, %v2524
        %v2526 = vlaneseq
        %v2527 = vshrl.u32 %v2526, 7
        %v2528 = vsub.s32 %v2197, %v2527
        %v2529 = vrot.slane %v1620, %v2528
        %v2530 = vsel %vm2202, %v2529, %v2525
        %v2531 = vlaneseq
        %v2532 = vshrl.u32 %v2531, 7
        %v2533 = vsub.s32 %v2204, %v2532
        %v2534 = vrot.slane %v1621, %v2533
        %v2535 = vsel %vm2209, %v2534, %v2530
        %v2536 = vlaneseq
        %v2537 = vshrl.u32 %v2536, 7
        %v2538 = vsub.s32 %v2211, %v2537
        %v2539 = vrot.slane %v1622, %v2538
        %v2540 = vsel %vm2216, %v2539, %v2535
        %v2541 = vlaneseq
        %v2542 = vshrl.u32 %v2541, 7
        %v2543 = vsub.s32 %v2192, %v2542
        %v2544 = vrot.slane %v1623, %v2543
        %v2545 = vlaneseq
        %v2546 = vshrl.u32 %v2545, 7
        %v2547 = vsub.s32 %v2197, %v2546
        %v2548 = vrot.slane %v1624, %v2547
        %v2549 = vsel %vm2202, %v2548, %v2544
        %v2550 = vlaneseq
        %v2551 = vshrl.u32 %v2550, 7
        %v2552 = vsub.s32 %v2204, %v2551
        %v2553 = vrot.slane %v1625, %v2552
        %v2554 = vsel %vm2209, %v2553, %v2549
        %v2555 = vlaneseq
        %v2556 = vshrl.u32 %v2555, 7
        %v2557 = vsub.s32 %v2211, %v2556
        %v2558 = vrot.slane %v1626, %v2557
        %v2559 = vsel %vm2216, %v2558, %v2554
        %v2560 = vlaneseq
        %v2561 = vshrl.u32 %v2560, 7
        %v2562 = vsub.s32 %v2192, %v2561
        %v2563 = vrot.slane %v1627, %v2562
        %v2564 = vlaneseq
        %v2565 = vshrl.u32 %v2564, 7
        %v2566 = vsub.s32 %v2197, %v2565
        %v2567 = vrot.slane %v1628, %v2566
        %v2568 = vsel %vm2202, %v2567, %v2563
        %v2569 = vlaneseq
        %v2570 = vshrl.u32 %v2569, 7
        %v2571 = vsub.s32 %v2204, %v2570
        %v2572 = vrot.slane %v1629, %v2571
        %v2573 = vsel %vm2209, %v2572, %v2568
        %v2574 = vlaneseq
        %v2575 = vshrl.u32 %v2574, 7
        %v2576 = vsub.s32 %v2211, %v2575
        %v2577 = vrot.slane %v1630, %v2576
        %v2578 = vsel %vm2216, %v2577, %v2573
        %v2579 = vlaneseq
        %v2580 = vshrl.u32 %v2579, 7
        %v2581 = vsub.s32 %v2192, %v2580
        %v2582 = vrot.slane %v1631, %v2581
        %v2583 = vlaneseq
        %v2584 = vshrl.u32 %v2583, 7
        %v2585 = vsub.s32 %v2197, %v2584
        %v2586 = vrot.slane %v1632, %v2585
        %v2587 = vsel %vm2202, %v2586, %v2582
        %v2588 = vlaneseq
        %v2589 = vshrl.u32 %v2588, 7
        %v2590 = vsub.s32 %v2204, %v2589
        %v2591 = vrot.slane %v1633, %v2590
        %v2592 = vsel %vm2209, %v2591, %v2587
        %v2593 = vlaneseq
        %v2594 = vshrl.u32 %v2593, 7
        %v2595 = vsub.s32 %v2211, %v2594
        %v2596 = vrot.slane %v1634, %v2595
        %v2597 = vsel %vm2216, %v2596, %v2592
        %v2598 = vlaneseq
        %v2599 = vshrl.u32 %v2598, 7
        %v2600 = vsub.s32 %v2192, %v2599
        %v2601 = vrot.slane %v1635, %v2600
        %v2602 = vlaneseq
        %v2603 = vshrl.u32 %v2602, 7
        %v2604 = vsub.s32 %v2197, %v2603
        %v2605 = vrot.slane %v1636, %v2604
        %v2606 = vsel %vm2202, %v2605, %v2601
        %v2607 = vlaneseq
        %v2608 = vshrl.u32 %v2607, 7
        %v2609 = vsub.s32 %v2204, %v2608
        %v2610 = vrot.slane %v1637, %v2609
        %v2611 = vsel %vm2209, %v2610, %v2606
        %v2612 = vlaneseq
        %v2613 = vshrl.u32 %v2612, 7
        %v2614 = vsub.s32 %v2211, %v2613
        %v2615 = vrot.slane %v1638, %v2614
        %v2616 = vsel %vm2216, %v2615, %v2611
        %v2617 = vlaneseq
        %v2618 = vshrl.u32 %v2617, 7
        %v2619 = vsub.s32 %v2192, %v2618
        %v2620 = vrot.slane %v1639, %v2619
        %v2621 = vlaneseq
        %v2622 = vshrl.u32 %v2621, 7
        %v2623 = vsub.s32 %v2197, %v2622
        %v2624 = vrot.slane %v1640, %v2623
        %v2625 = vsel %vm2202, %v2624, %v2620
        %v2626 = vlaneseq
        %v2627 = vshrl.u32 %v2626, 7
        %v2628 = vsub.s32 %v2204, %v2627
        %v2629 = vrot.slane %v1641, %v2628
        %v2630 = vsel %vm2209, %v2629, %v2625
        %v2631 = vlaneseq
        %v2632 = vshrl.u32 %v2631, 7
        %v2633 = vsub.s32 %v2211, %v2632
        %v2634 = vrot.slane %v1642, %v2633
        %v2635 = vsel %vm2216, %v2634, %v2630
        %v2636 = vlaneseq
        %v2637 = vshrl.u32 %v2636, 7
        %v2638 = vsub.s32 %v2192, %v2637
        %v2639 = vrot.slane %v1643, %v2638
        %v2640 = vlaneseq
        %v2641 = vshrl.u32 %v2640, 7
        %v2642 = vsub.s32 %v2197, %v2641
        %v2643 = vrot.slane %v1644, %v2642
        %v2644 = vsel %vm2202, %v2643, %v2639
        %v2645 = vlaneseq
        %v2646 = vshrl.u32 %v2645, 7
        %v2647 = vsub.s32 %v2204, %v2646
        %v2648 = vrot.slane %v1645, %v2647
        %v2649 = vsel %vm2209, %v2648, %v2644
        %v2650 = vlaneseq
        %v2651 = vshrl.u32 %v2650, 7
        %v2652 = vsub.s32 %v2211, %v2651
        %v2653 = vrot.slane %v1646, %v2652
        %v2654 = vsel %vm2216, %v2653, %v2649
        %v2655 = vlaneseq
        %v2656 = vshrl.u32 %v2655, 7
        %v2657 = vsub.s32 %v2192, %v2656
        %v2658 = vrot.slane %v1647, %v2657
        %v2659 = vlaneseq
        %v2660 = vshrl.u32 %v2659, 7
        %v2661 = vsub.s32 %v2197, %v2660
        %v2662 = vrot.slane %v1648, %v2661
        %v2663 = vsel %vm2202, %v2662, %v2658
        %v2664 = vlaneseq
        %v2665 = vshrl.u32 %v2664, 7
        %v2666 = vsub.s32 %v2204, %v2665
        %v2667 = vrot.slane %v1649, %v2666
        %v2668 = vsel %vm2209, %v2667, %v2663
        %v2669 = vlaneseq
        %v2670 = vshrl.u32 %v2669, 7
        %v2671 = vsub.s32 %v2211, %v2670
        %v2672 = vrot.slane %v1650, %v2671
        %v2673 = vsel %vm2216, %v2672, %v2668
        %v2674 = vlaneseq
        %v2675 = vshrl.u32 %v2674, 7
        %v2676 = vsub.s32 %v2192, %v2675
        %v2677 = vrot.slane %v1651, %v2676
        %v2678 = vlaneseq
        %v2679 = vshrl.u32 %v2678, 7
        %v2680 = vsub.s32 %v2197, %v2679
        %v2681 = vrot.slane %v1652, %v2680
        %v2682 = vsel %vm2202, %v2681, %v2677
        %v2683 = vlaneseq
        %v2684 = vshrl.u32 %v2683, 7
        %v2685 = vsub.s32 %v2204, %v2684
        %v2686 = vrot.slane %v1653, %v2685
        %v2687 = vsel %vm2209, %v2686, %v2682
        %v2688 = vlaneseq
        %v2689 = vshrl.u32 %v2688, 7
        %v2690 = vsub.s32 %v2211, %v2689
        %v2691 = vrot.slane %v1654, %v2690
        %v2692 = vsel %vm2216, %v2691, %v2687
        %v2693 = vlaneseq
        %v2694 = vshrl.u32 %v2693, 7
        %v2695 = vsub.s32 %v2192, %v2694
        %v2696 = vrot.slane %v1655, %v2695
        %v2697 = vlaneseq
        %v2698 = vshrl.u32 %v2697, 7
        %v2699 = vsub.s32 %v2197, %v2698
        %v2700 = vrot.slane %v1656, %v2699
        %v2701 = vsel %vm2202, %v2700, %v2696
        %v2702 = vlaneseq
        %v2703 = vshrl.u32 %v2702, 7
        %v2704 = vsub.s32 %v2204, %v2703
        %v2705 = vrot.slane %v1657, %v2704
        %v2706 = vsel %vm2209, %v2705, %v2701
        %v2707 = vlaneseq
        %v2708 = vshrl.u32 %v2707, 7
        %v2709 = vsub.s32 %v2211, %v2708
        %v2710 = vrot.slane %v1658, %v2709
        %v2711 = vsel %vm2216, %v2710, %v2706
        %v2712 = vlaneseq
        %v2713 = vshrl.u32 %v2712, 7
        %v2714 = vsub.s32 %v2192, %v2713
        %v2715 = vrot.slane %v1659, %v2714
        %v2716 = vlaneseq
        %v2717 = vshrl.u32 %v2716, 7
        %v2718 = vsub.s32 %v2197, %v2717
        %v2719 = vrot.slane %v1660, %v2718
        %v2720 = vsel %vm2202, %v2719, %v2715
        %v2721 = vlaneseq
        %v2722 = vshrl.u32 %v2721, 7
        %v2723 = vsub.s32 %v2204, %v2722
        %v2724 = vrot.slane %v1661, %v2723
        %v2725 = vsel %vm2209, %v2724, %v2720
        %v2726 = vlaneseq
        %v2727 = vshrl.u32 %v2726, 7
        %v2728 = vsub.s32 %v2211, %v2727
        %v2729 = vrot.slane %v1662, %v2728
        %v2730 = vsel %vm2216, %v2729, %v2725
        %v2731 = vlaneseq
        %v2732 = vshrl.u32 %v2731, 7
        %v2733 = vsub.s32 %v2192, %v2732
        %v2734 = vrot.slane %v1663, %v2733
        %v2735 = vlaneseq
        %v2736 = vshrl.u32 %v2735, 7
        %v2737 = vsub.s32 %v2197, %v2736
        %v2738 = vrot.slane %v1664, %v2737
        %v2739 = vsel %vm2202, %v2738, %v2734
        %v2740 = vlaneseq
        %v2741 = vshrl.u32 %v2740, 7
        %v2742 = vsub.s32 %v2204, %v2741
        %v2743 = vrot.slane %v1665, %v2742
        %v2744 = vsel %vm2209, %v2743, %v2739
        %v2745 = vlaneseq
        %v2746 = vshrl.u32 %v2745, 7
        %v2747 = vsub.s32 %v2211, %v2746
        %v2748 = vrot.slane %v1666, %v2747
        %v2749 = vsel %vm2216, %v2748, %v2744
        %v2750 = vlaneseq
        %v2751 = vshrl.u32 %v2750, 7
        %v2752 = vsub.s32 %v2192, %v2751
        %v2753 = vrot.slane %v1667, %v2752
        %v2754 = vlaneseq
        %v2755 = vshrl.u32 %v2754, 7
        %v2756 = vsub.s32 %v2197, %v2755
        %v2757 = vrot.slane %v1668, %v2756
        %v2758 = vsel %vm2202, %v2757, %v2753
        %v2759 = vlaneseq
        %v2760 = vshrl.u32 %v2759, 7
        %v2761 = vsub.s32 %v2204, %v2760
        %v2762 = vrot.slane %v1669, %v2761
        %v2763 = vsel %vm2209, %v2762, %v2758
        %v2764 = vlaneseq
        %v2765 = vshrl.u32 %v2764, 7
        %v2766 = vsub.s32 %v2211, %v2765
        %v2767 = vrot.slane %v1670, %v2766
        %v2768 = vsel %vm2216, %v2767, %v2763
        %v2769 = vlaneseq
        %v2770 = vshrl.u32 %v2769, 7
        %v2771 = vsub.s32 %v2192, %v2770
        %v2772 = vrot.slane %v1671, %v2771
        %v2773 = vlaneseq
        %v2774 = vshrl.u32 %v2773, 7
        %v2775 = vsub.s32 %v2197, %v2774
        %v2776 = vrot.slane %v1672, %v2775
        %v2777 = vsel %vm2202, %v2776, %v2772
        %v2778 = vlaneseq
        %v2779 = vshrl.u32 %v2778, 7
        %v2780 = vsub.s32 %v2204, %v2779
        %v2781 = vrot.slane %v1673, %v2780
        %v2782 = vsel %vm2209, %v2781, %v2777
        %v2783 = vlaneseq
        %v2784 = vshrl.u32 %v2783, 7
        %v2785 = vsub.s32 %v2211, %v2784
        %v2786 = vrot.slane %v1674, %v2785
        %v2787 = vsel %vm2216, %v2786, %v2782
        %v2788 = vlaneseq
        %v2789 = vshrl.u32 %v2788, 7
        %v2790 = vsub.s32 %v2192, %v2789
        %v2791 = vrot.slane %v1675, %v2790
        %v2792 = vlaneseq
        %v2793 = vshrl.u32 %v2792, 7
        %v2794 = vsub.s32 %v2197, %v2793
        %v2795 = vrot.slane %v1676, %v2794
        %v2796 = vsel %vm2202, %v2795, %v2791
        %v2797 = vlaneseq
        %v2798 = vshrl.u32 %v2797, 7
        %v2799 = vsub.s32 %v2204, %v2798
        %v2800 = vrot.slane %v1677, %v2799
        %v2801 = vsel %vm2209, %v2800, %v2796
        %v2802 = vlaneseq
        %v2803 = vshrl.u32 %v2802, 7
        %v2804 = vsub.s32 %v2211, %v2803
        %v2805 = vrot.slane %v1678, %v2804
        %v2806 = vsel %vm2216, %v2805, %v2801
        %vm2807 = vcmask 1044484
        %v2808 = vsel %vm2807, %v2236, %v2217
        %vm2809 = vcmask 1045509
        %v2810 = vsel %vm2809, %v2255, %v2808
        %vm2811 = vcmask 1046534
        %v2812 = vsel %vm2811, %v2274, %v2810
        %vm2813 = vcmask 1047559
        %v2814 = vsel %vm2813, %v2293, %v2812
        %vm2815 = vcmask 1041409
        %v2816 = vsel %vm2815, %v2331, %v2312
        %vm2817 = vcmask 1042434
        %v2818 = vsel %vm2817, %v2350, %v2816
        %vm2819 = vcmask 1043459
        %v2820 = vsel %vm2819, %v2369, %v2818
        %v2821 = vsel %vm2807, %v2388, %v2820
        %v2822 = vsel %vm2809, %v2407, %v2821
        %v2823 = vsel %vm2811, %v2426, %v2822
        %v2824 = vsel %vm2813, %v2445, %v2823
        %v2825 = vsel %vm2815, %v2483, %v2464
        %v2826 = vsel %vm2817, %v2502, %v2825
        %v2827 = vsel %vm2819, %v2521, %v2826
        %v2828 = vsel %vm2807, %v2540, %v2827
        %v2829 = vsel %vm2809, %v2559, %v2828
        %v2830 = vsel %vm2811, %v2578, %v2829
        %v2831 = vsel %vm2813, %v2597, %v2830
        %v2832 = vsel %vm2815, %v2635, %v2616
        %v2833 = vsel %vm2817, %v2654, %v2832
        %v2834 = vsel %vm2819, %v2673, %v2833
        %v2835 = vsel %vm2807, %v2692, %v2834
        %v2836 = vsel %vm2809, %v2711, %v2835
        %v2837 = vsel %vm2811, %v2730, %v2836
        %v2838 = vsel %vm2813, %v2749, %v2837
        %v2839 = vsel %vm2815, %v2787, %v2768
        %v2840 = vsel %vm2817, %v2806, %v2839
        %vm2846 = vcmask 1042432
        %v2847 = vsel %vm2846, 0.0, %v2814
        %v2848 = vsel %vm2846, %v2840, 0.0
        %v2977 = vlaneseq
        %v2978 = vshrl.u32 %v2977, 7
        %v2979 = vsub.s32 %v2192, %v2978
        %v2980 = vrot.slane %v1681, %v2979
        %v2981 = vlaneseq
        %v2982 = vshrl.u32 %v2981, 7
        %v2983 = vsub.s32 %v2197, %v2982
        %v2984 = vrot.slane %v1684, %v2983
        %v2985 = vsel %vm2202, %v2984, %v2980
        %v2986 = vlaneseq
        %v2987 = vshrl.u32 %v2986, 7
        %v2988 = vsub.s32 %v2204, %v2987
        %v2989 = vrot.slane %v1687, %v2988
        %v2990 = vsel %vm2209, %v2989, %v2985
        %v2991 = vlaneseq
        %v2992 = vshrl.u32 %v2991, 7
        %v2993 = vsub.s32 %v2211, %v2992
        %v2994 = vrot.slane %v1690, %v2993
        %v2995 = vsel %vm2216, %v2994, %v2990
        %v2996 = vlaneseq
        %v2997 = vshrl.u32 %v2996, 7
        %v2998 = vsub.s32 %v2192, %v2997
        %v2999 = vrot.slane %v1693, %v2998
        %v3000 = vlaneseq
        %v3001 = vshrl.u32 %v3000, 7
        %v3002 = vsub.s32 %v2197, %v3001
        %v3003 = vrot.slane %v1696, %v3002
        %v3004 = vsel %vm2202, %v3003, %v2999
        %v3005 = vlaneseq
        %v3006 = vshrl.u32 %v3005, 7
        %v3007 = vsub.s32 %v2204, %v3006
        %v3008 = vrot.slane %v1699, %v3007
        %v3009 = vsel %vm2209, %v3008, %v3004
        %v3010 = vlaneseq
        %v3011 = vshrl.u32 %v3010, 7
        %v3012 = vsub.s32 %v2211, %v3011
        %v3013 = vrot.slane %v1702, %v3012
        %v3014 = vsel %vm2216, %v3013, %v3009
        %v3015 = vlaneseq
        %v3016 = vshrl.u32 %v3015, 7
        %v3017 = vsub.s32 %v2192, %v3016
        %v3018 = vrot.slane %v1705, %v3017
        %v3019 = vlaneseq
        %v3020 = vshrl.u32 %v3019, 7
        %v3021 = vsub.s32 %v2197, %v3020
        %v3022 = vrot.slane %v1708, %v3021
        %v3023 = vsel %vm2202, %v3022, %v3018
        %v3024 = vlaneseq
        %v3025 = vshrl.u32 %v3024, 7
        %v3026 = vsub.s32 %v2204, %v3025
        %v3027 = vrot.slane %v1711, %v3026
        %v3028 = vsel %vm2209, %v3027, %v3023
        %v3029 = vlaneseq
        %v3030 = vshrl.u32 %v3029, 7
        %v3031 = vsub.s32 %v2211, %v3030
        %v3032 = vrot.slane %v1714, %v3031
        %v3033 = vsel %vm2216, %v3032, %v3028
        %v3034 = vlaneseq
        %v3035 = vshrl.u32 %v3034, 7
        %v3036 = vsub.s32 %v2192, %v3035
        %v3037 = vrot.slane %v1717, %v3036
        %v3038 = vlaneseq
        %v3039 = vshrl.u32 %v3038, 7
        %v3040 = vsub.s32 %v2197, %v3039
        %v3041 = vrot.slane %v1720, %v3040
        %v3042 = vsel %vm2202, %v3041, %v3037
        %v3043 = vlaneseq
        %v3044 = vshrl.u32 %v3043, 7
        %v3045 = vsub.s32 %v2204, %v3044
        %v3046 = vrot.slane %v1723, %v3045
        %v3047 = vsel %vm2209, %v3046, %v3042
        %v3048 = vlaneseq
        %v3049 = vshrl.u32 %v3048, 7
        %v3050 = vsub.s32 %v2211, %v3049
        %v3051 = vrot.slane %v1726, %v3050
        %v3052 = vsel %vm2216, %v3051, %v3047
        %v3053 = vlaneseq
        %v3054 = vshrl.u32 %v3053, 7
        %v3055 = vsub.s32 %v2192, %v3054
        %v3056 = vrot.slane %v1729, %v3055
        %v3057 = vlaneseq
        %v3058 = vshrl.u32 %v3057, 7
        %v3059 = vsub.s32 %v2197, %v3058
        %v3060 = vrot.slane %v1732, %v3059
        %v3061 = vsel %vm2202, %v3060, %v3056
        %v3062 = vlaneseq
        %v3063 = vshrl.u32 %v3062, 7
        %v3064 = vsub.s32 %v2204, %v3063
        %v3065 = vrot.slane %v1735, %v3064
        %v3066 = vsel %vm2209, %v3065, %v3061
        %v3067 = vlaneseq
        %v3068 = vshrl.u32 %v3067, 7
        %v3069 = vsub.s32 %v2211, %v3068
        %v3070 = vrot.slane %v1738, %v3069
        %v3071 = vsel %vm2216, %v3070, %v3066
        %v3072 = vlaneseq
        %v3073 = vshrl.u32 %v3072, 7
        %v3074 = vsub.s32 %v2192, %v3073
        %v3075 = vrot.slane %v1741, %v3074
        %v3076 = vlaneseq
        %v3077 = vshrl.u32 %v3076, 7
        %v3078 = vsub.s32 %v2197, %v3077
        %v3079 = vrot.slane %v1744, %v3078
        %v3080 = vsel %vm2202, %v3079, %v3075
        %v3081 = vlaneseq
        %v3082 = vshrl.u32 %v3081, 7
        %v3083 = vsub.s32 %v2204, %v3082
        %v3084 = vrot.slane %v1747, %v3083
        %v3085 = vsel %vm2209, %v3084, %v3080
        %v3086 = vlaneseq
        %v3087 = vshrl.u32 %v3086, 7
        %v3088 = vsub.s32 %v2211, %v3087
        %v3089 = vrot.slane %v1750, %v3088
        %v3090 = vsel %vm2216, %v3089, %v3085
        %v3091 = vlaneseq
        %v3092 = vshrl.u32 %v3091, 7
        %v3093 = vsub.s32 %v2192, %v3092
        %v3094 = vrot.slane %v1753, %v3093
        %v3095 = vlaneseq
        %v3096 = vshrl.u32 %v3095, 7
        %v3097 = vsub.s32 %v2197, %v3096
        %v3098 = vrot.slane %v1756, %v3097
        %v3099 = vsel %vm2202, %v3098, %v3094
        %v3100 = vlaneseq
        %v3101 = vshrl.u32 %v3100, 7
        %v3102 = vsub.s32 %v2204, %v3101
        %v3103 = vrot.slane %v1759, %v3102
        %v3104 = vsel %vm2209, %v3103, %v3099
        %v3105 = vlaneseq
        %v3106 = vshrl.u32 %v3105, 7
        %v3107 = vsub.s32 %v2211, %v3106
        %v3108 = vrot.slane %v1762, %v3107
        %v3109 = vsel %vm2216, %v3108, %v3104
        %v3110 = vlaneseq
        %v3111 = vshrl.u32 %v3110, 7
        %v3112 = vsub.s32 %v2192, %v3111
        %v3113 = vrot.slane %v1765, %v3112
        %v3114 = vlaneseq
        %v3115 = vshrl.u32 %v3114, 7
        %v3116 = vsub.s32 %v2197, %v3115
        %v3117 = vrot.slane %v1768, %v3116
        %v3118 = vsel %vm2202, %v3117, %v3113
        %v3119 = vlaneseq
        %v3120 = vshrl.u32 %v3119, 7
        %v3121 = vsub.s32 %v2204, %v3120
        %v3122 = vrot.slane %v1771, %v3121
        %v3123 = vsel %vm2209, %v3122, %v3118
        %v3124 = vlaneseq
        %v3125 = vshrl.u32 %v3124, 7
        %v3126 = vsub.s32 %v2211, %v3125
        %v3127 = vrot.slane %v1774, %v3126
        %v3128 = vsel %vm2216, %v3127, %v3123
        %v3129 = vlaneseq
        %v3130 = vshrl.u32 %v3129, 7
        %v3131 = vsub.s32 %v2192, %v3130
        %v3132 = vrot.slane %v1777, %v3131
        %v3133 = vlaneseq
        %v3134 = vshrl.u32 %v3133, 7
        %v3135 = vsub.s32 %v2197, %v3134
        %v3136 = vrot.slane %v1780, %v3135
        %v3137 = vsel %vm2202, %v3136, %v3132
        %v3138 = vlaneseq
        %v3139 = vshrl.u32 %v3138, 7
        %v3140 = vsub.s32 %v2204, %v3139
        %v3141 = vrot.slane %v1783, %v3140
        %v3142 = vsel %vm2209, %v3141, %v3137
        %v3143 = vlaneseq
        %v3144 = vshrl.u32 %v3143, 7
        %v3145 = vsub.s32 %v2211, %v3144
        %v3146 = vrot.slane %v1786, %v3145
        %v3147 = vsel %vm2216, %v3146, %v3142
        %v3148 = vlaneseq
        %v3149 = vshrl.u32 %v3148, 7
        %v3150 = vsub.s32 %v2192, %v3149
        %v3151 = vrot.slane %v1789, %v3150
        %v3152 = vlaneseq
        %v3153 = vshrl.u32 %v3152, 7
        %v3154 = vsub.s32 %v2197, %v3153
        %v3155 = vrot.slane %v1792, %v3154
        %v3156 = vsel %vm2202, %v3155, %v3151
        %v3157 = vlaneseq
        %v3158 = vshrl.u32 %v3157, 7
        %v3159 = vsub.s32 %v2204, %v3158
        %v3160 = vrot.slane %v1795, %v3159
        %v3161 = vsel %vm2209, %v3160, %v3156
        %v3162 = vlaneseq
        %v3163 = vshrl.u32 %v3162, 7
        %v3164 = vsub.s32 %v2211, %v3163
        %v3165 = vrot.slane %v1798, %v3164
        %v3166 = vsel %vm2216, %v3165, %v3161
        %v3167 = vlaneseq
        %v3168 = vshrl.u32 %v3167, 7
        %v3169 = vsub.s32 %v2192, %v3168
        %v3170 = vrot.slane %v1801, %v3169
        %v3171 = vlaneseq
        %v3172 = vshrl.u32 %v3171, 7
        %v3173 = vsub.s32 %v2197, %v3172
        %v3174 = vrot.slane %v1804, %v3173
        %v3175 = vsel %vm2202, %v3174, %v3170
        %v3176 = vlaneseq
        %v3177 = vshrl.u32 %v3176, 7
        %v3178 = vsub.s32 %v2204, %v3177
        %v3179 = vrot.slane %v1807, %v3178
        %v3180 = vsel %vm2209, %v3179, %v3175
        %v3181 = vlaneseq
        %v3182 = vshrl.u32 %v3181, 7
        %v3183 = vsub.s32 %v2211, %v3182
        %v3184 = vrot.slane %v1810, %v3183
        %v3185 = vsel %vm2216, %v3184, %v3180
        %v3186 = vlaneseq
        %v3187 = vshrl.u32 %v3186, 7
        %v3188 = vsub.s32 %v2192, %v3187
        %v3189 = vrot.slane %v1813, %v3188
        %v3190 = vlaneseq
        %v3191 = vshrl.u32 %v3190, 7
        %v3192 = vsub.s32 %v2197, %v3191
        %v3193 = vrot.slane %v1816, %v3192
        %v3194 = vsel %vm2202, %v3193, %v3189
        %v3195 = vlaneseq
        %v3196 = vshrl.u32 %v3195, 7
        %v3197 = vsub.s32 %v2204, %v3196
        %v3198 = vrot.slane %v1819, %v3197
        %v3199 = vsel %vm2209, %v3198, %v3194
        %v3200 = vlaneseq
        %v3201 = vshrl.u32 %v3200, 7
        %v3202 = vsub.s32 %v2211, %v3201
        %v3203 = vrot.slane %v1822, %v3202
        %v3204 = vsel %vm2216, %v3203, %v3199
        %v3205 = vlaneseq
        %v3206 = vshrl.u32 %v3205, 7
        %v3207 = vsub.s32 %v2192, %v3206
        %v3208 = vrot.slane %v1825, %v3207
        %v3209 = vlaneseq
        %v3210 = vshrl.u32 %v3209, 7
        %v3211 = vsub.s32 %v2197, %v3210
        %v3212 = vrot.slane %v1828, %v3211
        %v3213 = vsel %vm2202, %v3212, %v3208
        %v3214 = vlaneseq
        %v3215 = vshrl.u32 %v3214, 7
        %v3216 = vsub.s32 %v2204, %v3215
        %v3217 = vrot.slane %v1831, %v3216
        %v3218 = vsel %vm2209, %v3217, %v3213
        %v3219 = vlaneseq
        %v3220 = vshrl.u32 %v3219, 7
        %v3221 = vsub.s32 %v2211, %v3220
        %v3222 = vrot.slane %v1834, %v3221
        %v3223 = vsel %vm2216, %v3222, %v3218
        %v3224 = vlaneseq
        %v3225 = vshrl.u32 %v3224, 7
        %v3226 = vsub.s32 %v2192, %v3225
        %v3227 = vrot.slane %v1837, %v3226
        %v3228 = vlaneseq
        %v3229 = vshrl.u32 %v3228, 7
        %v3230 = vsub.s32 %v2197, %v3229
        %v3231 = vrot.slane %v1840, %v3230
        %v3232 = vsel %vm2202, %v3231, %v3227
        %v3233 = vlaneseq
        %v3234 = vshrl.u32 %v3233, 7
        %v3235 = vsub.s32 %v2204, %v3234
        %v3236 = vrot.slane %v1843, %v3235
        %v3237 = vsel %vm2209, %v3236, %v3232
        %v3238 = vlaneseq
        %v3239 = vshrl.u32 %v3238, 7
        %v3240 = vsub.s32 %v2211, %v3239
        %v3241 = vrot.slane %v1846, %v3240
        %v3242 = vsel %vm2216, %v3241, %v3237
        %v3243 = vlaneseq
        %v3244 = vshrl.u32 %v3243, 7
        %v3245 = vsub.s32 %v2192, %v3244
        %v3246 = vrot.slane %v1849, %v3245
        %v3247 = vlaneseq
        %v3248 = vshrl.u32 %v3247, 7
        %v3249 = vsub.s32 %v2197, %v3248
        %v3250 = vrot.slane %v1852, %v3249
        %v3251 = vsel %vm2202, %v3250, %v3246
        %v3252 = vlaneseq
        %v3253 = vshrl.u32 %v3252, 7
        %v3254 = vsub.s32 %v2204, %v3253
        %v3255 = vrot.slane %v1855, %v3254
        %v3256 = vsel %vm2209, %v3255, %v3251
        %v3257 = vlaneseq
        %v3258 = vshrl.u32 %v3257, 7
        %v3259 = vsub.s32 %v2211, %v3258
        %v3260 = vrot.slane %v1858, %v3259
        %v3261 = vsel %vm2216, %v3260, %v3256
        %v3262 = vlaneseq
        %v3263 = vshrl.u32 %v3262, 7
        %v3264 = vsub.s32 %v2192, %v3263
        %v3265 = vrot.slane %v1861, %v3264
        %v3266 = vlaneseq
        %v3267 = vshrl.u32 %v3266, 7
        %v3268 = vsub.s32 %v2197, %v3267
        %v3269 = vrot.slane %v1864, %v3268
        %v3270 = vsel %vm2202, %v3269, %v3265
        %v3271 = vlaneseq
        %v3272 = vshrl.u32 %v3271, 7
        %v3273 = vsub.s32 %v2204, %v3272
        %v3274 = vrot.slane %v1867, %v3273
        %v3275 = vsel %vm2209, %v3274, %v3270
        %v3276 = vlaneseq
        %v3277 = vshrl.u32 %v3276, 7
        %v3278 = vsub.s32 %v2211, %v3277
        %v3279 = vrot.slane %v1870, %v3278
        %v3280 = vsel %vm2216, %v3279, %v3275
        %v3281 = vlaneseq
        %v3282 = vshrl.u32 %v3281, 7
        %v3283 = vsub.s32 %v2192, %v3282
        %v3284 = vrot.slane %v1873, %v3283
        %v3285 = vlaneseq
        %v3286 = vshrl.u32 %v3285, 7
        %v3287 = vsub.s32 %v2197, %v3286
        %v3288 = vrot.slane %v1876, %v3287
        %v3289 = vsel %vm2202, %v3288, %v3284
        %v3290 = vlaneseq
        %v3291 = vshrl.u32 %v3290, 7
        %v3292 = vsub.s32 %v2204, %v3291
        %v3293 = vrot.slane %v1879, %v3292
        %v3294 = vsel %vm2209, %v3293, %v3289
        %v3295 = vlaneseq
        %v3296 = vshrl.u32 %v3295, 7
        %v3297 = vsub.s32 %v2211, %v3296
        %v3298 = vrot.slane %v1882, %v3297
        %v3299 = vsel %vm2216, %v3298, %v3294
        %v3300 = vlaneseq
        %v3301 = vshrl.u32 %v3300, 7
        %v3302 = vsub.s32 %v2192, %v3301
        %v3303 = vrot.slane %v1885, %v3302
        %v3304 = vlaneseq
        %v3305 = vshrl.u32 %v3304, 7
        %v3306 = vsub.s32 %v2197, %v3305
        %v3307 = vrot.slane %v1888, %v3306
        %v3308 = vsel %vm2202, %v3307, %v3303
        %v3309 = vlaneseq
        %v3310 = vshrl.u32 %v3309, 7
        %v3311 = vsub.s32 %v2204, %v3310
        %v3312 = vrot.slane %v1891, %v3311
        %v3313 = vsel %vm2209, %v3312, %v3308
        %v3314 = vlaneseq
        %v3315 = vshrl.u32 %v3314, 7
        %v3316 = vsub.s32 %v2211, %v3315
        %v3317 = vrot.slane %v1894, %v3316
        %v3318 = vsel %vm2216, %v3317, %v3313
        %v3319 = vlaneseq
        %v3320 = vshrl.u32 %v3319, 7
        %v3321 = vsub.s32 %v2192, %v3320
        %v3322 = vrot.slane %v1897, %v3321
        %v3323 = vlaneseq
        %v3324 = vshrl.u32 %v3323, 7
        %v3325 = vsub.s32 %v2197, %v3324
        %v3326 = vrot.slane %v1900, %v3325
        %v3327 = vsel %vm2202, %v3326, %v3322
        %v3328 = vlaneseq
        %v3329 = vshrl.u32 %v3328, 7
        %v3330 = vsub.s32 %v2204, %v3329
        %v3331 = vrot.slane %v1903, %v3330
        %v3332 = vsel %vm2209, %v3331, %v3327
        %v3333 = vlaneseq
        %v3334 = vshrl.u32 %v3333, 7
        %v3335 = vsub.s32 %v2211, %v3334
        %v3336 = vrot.slane %v1906, %v3335
        %v3337 = vsel %vm2216, %v3336, %v3332
        %v3338 = vlaneseq
        %v3339 = vshrl.u32 %v3338, 7
        %v3340 = vsub.s32 %v2192, %v3339
        %v3341 = vrot.slane %v1909, %v3340
        %v3342 = vlaneseq
        %v3343 = vshrl.u32 %v3342, 7
        %v3344 = vsub.s32 %v2197, %v3343
        %v3345 = vrot.slane %v1912, %v3344
        %v3346 = vsel %vm2202, %v3345, %v3341
        %v3347 = vlaneseq
        %v3348 = vshrl.u32 %v3347, 7
        %v3349 = vsub.s32 %v2204, %v3348
        %v3350 = vrot.slane %v1915, %v3349
        %v3351 = vsel %vm2209, %v3350, %v3346
        %v3352 = vlaneseq
        %v3353 = vshrl.u32 %v3352, 7
        %v3354 = vsub.s32 %v2211, %v3353
        %v3355 = vrot.slane %v1918, %v3354
        %v3356 = vsel %vm2216, %v3355, %v3351
        %v3357 = vlaneseq
        %v3358 = vshrl.u32 %v3357, 7
        %v3359 = vsub.s32 %v2192, %v3358
        %v3360 = vrot.slane %v1921, %v3359
        %v3361 = vlaneseq
        %v3362 = vshrl.u32 %v3361, 7
        %v3363 = vsub.s32 %v2197, %v3362
        %v3364 = vrot.slane %v1924, %v3363
        %v3365 = vsel %vm2202, %v3364, %v3360
        %v3366 = vlaneseq
        %v3367 = vshrl.u32 %v3366, 7
        %v3368 = vsub.s32 %v2204, %v3367
        %v3369 = vrot.slane %v1927, %v3368
        %v3370 = vsel %vm2209, %v3369, %v3365
        %v3371 = vlaneseq
        %v3372 = vshrl.u32 %v3371, 7
        %v3373 = vsub.s32 %v2211, %v3372
        %v3374 = vrot.slane %v1930, %v3373
        %v3375 = vsel %vm2216, %v3374, %v3370
        %v3376 = vlaneseq
        %v3377 = vshrl.u32 %v3376, 7
        %v3378 = vsub.s32 %v2192, %v3377
        %v3379 = vrot.slane %v1933, %v3378
        %v3380 = vlaneseq
        %v3381 = vshrl.u32 %v3380, 7
        %v3382 = vsub.s32 %v2197, %v3381
        %v3383 = vrot.slane %v1936, %v3382
        %v3384 = vsel %vm2202, %v3383, %v3379
        %v3385 = vlaneseq
        %v3386 = vshrl.u32 %v3385, 7
        %v3387 = vsub.s32 %v2204, %v3386
        %v3388 = vrot.slane %v1939, %v3387
        %v3389 = vsel %vm2209, %v3388, %v3384
        %v3390 = vlaneseq
        %v3391 = vshrl.u32 %v3390, 7
        %v3392 = vsub.s32 %v2211, %v3391
        %v3393 = vrot.slane %v1942, %v3392
        %v3394 = vsel %vm2216, %v3393, %v3389
        %v3395 = vlaneseq
        %v3396 = vshrl.u32 %v3395, 7
        %v3397 = vsub.s32 %v2192, %v3396
        %v3398 = vrot.slane %v1945, %v3397
        %v3399 = vlaneseq
        %v3400 = vshrl.u32 %v3399, 7
        %v3401 = vsub.s32 %v2197, %v3400
        %v3402 = vrot.slane %v1948, %v3401
        %v3403 = vsel %vm2202, %v3402, %v3398
        %v3404 = vlaneseq
        %v3405 = vshrl.u32 %v3404, 7
        %v3406 = vsub.s32 %v2204, %v3405
        %v3407 = vrot.slane %v1951, %v3406
        %v3408 = vsel %vm2209, %v3407, %v3403
        %v3409 = vlaneseq
        %v3410 = vshrl.u32 %v3409, 7
        %v3411 = vsub.s32 %v2211, %v3410
        %v3412 = vrot.slane %v1954, %v3411
        %v3413 = vsel %vm2216, %v3412, %v3408
        %v3414 = vlaneseq
        %v3415 = vshrl.u32 %v3414, 7
        %v3416 = vsub.s32 %v2192, %v3415
        %v3417 = vrot.slane %v1957, %v3416
        %v3418 = vlaneseq
        %v3419 = vshrl.u32 %v3418, 7
        %v3420 = vsub.s32 %v2197, %v3419
        %v3421 = vrot.slane %v1960, %v3420
        %v3422 = vsel %vm2202, %v3421, %v3417
        %v3423 = vlaneseq
        %v3424 = vshrl.u32 %v3423, 7
        %v3425 = vsub.s32 %v2204, %v3424
        %v3426 = vrot.slane %v1963, %v3425
        %v3427 = vsel %vm2209, %v3426, %v3422
        %v3428 = vlaneseq
        %v3429 = vshrl.u32 %v3428, 7
        %v3430 = vsub.s32 %v2211, %v3429
        %v3431 = vrot.slane %v1966, %v3430
        %v3432 = vsel %vm2216, %v3431, %v3427
        %v3433 = vlaneseq
        %v3434 = vshrl.u32 %v3433, 7
        %v3435 = vsub.s32 %v2192, %v3434
        %v3436 = vrot.slane %v1969, %v3435
        %v3437 = vlaneseq
        %v3438 = vshrl.u32 %v3437, 7
        %v3439 = vsub.s32 %v2197, %v3438
        %v3440 = vrot.slane %v1972, %v3439
        %v3441 = vsel %vm2202, %v3440, %v3436
        %v3442 = vlaneseq
        %v3443 = vshrl.u32 %v3442, 7
        %v3444 = vsub.s32 %v2204, %v3443
        %v3445 = vrot.slane %v1975, %v3444
        %v3446 = vsel %vm2209, %v3445, %v3441
        %v3447 = vlaneseq
        %v3448 = vshrl.u32 %v3447, 7
        %v3449 = vsub.s32 %v2211, %v3448
        %v3450 = vrot.slane %v1978, %v3449
        %v3451 = vsel %vm2216, %v3450, %v3446
        %v3452 = vlaneseq
        %v3453 = vshrl.u32 %v3452, 7
        %v3454 = vsub.s32 %v2192, %v3453
        %v3455 = vrot.slane %v1981, %v3454
        %v3456 = vlaneseq
        %v3457 = vshrl.u32 %v3456, 7
        %v3458 = vsub.s32 %v2197, %v3457
        %v3459 = vrot.slane %v1984, %v3458
        %v3460 = vsel %vm2202, %v3459, %v3455
        %v3461 = vlaneseq
        %v3462 = vshrl.u32 %v3461, 7
        %v3463 = vsub.s32 %v2204, %v3462
        %v3464 = vrot.slane %v1987, %v3463
        %v3465 = vsel %vm2209, %v3464, %v3460
        %v3466 = vlaneseq
        %v3467 = vshrl.u32 %v3466, 7
        %v3468 = vsub.s32 %v2211, %v3467
        %v3469 = vrot.slane %v1990, %v3468
        %v3470 = vsel %vm2216, %v3469, %v3465
        %v3471 = vlaneseq
        %v3472 = vshrl.u32 %v3471, 7
        %v3473 = vsub.s32 %v2192, %v3472
        %v3474 = vrot.slane %v1993, %v3473
        %v3475 = vlaneseq
        %v3476 = vshrl.u32 %v3475, 7
        %v3477 = vsub.s32 %v2197, %v3476
        %v3478 = vrot.slane %v1996, %v3477
        %v3479 = vsel %vm2202, %v3478, %v3474
        %v3480 = vlaneseq
        %v3481 = vshrl.u32 %v3480, 7
        %v3482 = vsub.s32 %v2204, %v3481
        %v3483 = vrot.slane %v1999, %v3482
        %v3484 = vsel %vm2209, %v3483, %v3479
        %v3485 = vlaneseq
        %v3486 = vshrl.u32 %v3485, 7
        %v3487 = vsub.s32 %v2211, %v3486
        %v3488 = vrot.slane %v2002, %v3487
        %v3489 = vsel %vm2216, %v3488, %v3484
        %v3490 = vlaneseq
        %v3491 = vshrl.u32 %v3490, 7
        %v3492 = vsub.s32 %v2192, %v3491
        %v3493 = vrot.slane %v2005, %v3492
        %v3494 = vlaneseq
        %v3495 = vshrl.u32 %v3494, 7
        %v3496 = vsub.s32 %v2197, %v3495
        %v3497 = vrot.slane %v2008, %v3496
        %v3498 = vsel %vm2202, %v3497, %v3493
        %v3499 = vlaneseq
        %v3500 = vshrl.u32 %v3499, 7
        %v3501 = vsub.s32 %v2204, %v3500
        %v3502 = vrot.slane %v2011, %v3501
        %v3503 = vsel %vm2209, %v3502, %v3498
        %v3504 = vlaneseq
        %v3505 = vshrl.u32 %v3504, 7
        %v3506 = vsub.s32 %v2211, %v3505
        %v3507 = vrot.slane %v2014, %v3506
        %v3508 = vsel %vm2216, %v3507, %v3503
        %v3509 = vlaneseq
        %v3510 = vshrl.u32 %v3509, 7
        %v3511 = vsub.s32 %v2192, %v3510
        %v3512 = vrot.slane %v2017, %v3511
        %v3513 = vlaneseq
        %v3514 = vshrl.u32 %v3513, 7
        %v3515 = vsub.s32 %v2197, %v3514
        %v3516 = vrot.slane %v2020, %v3515
        %v3517 = vsel %vm2202, %v3516, %v3512
        %v3518 = vlaneseq
        %v3519 = vshrl.u32 %v3518, 7
        %v3520 = vsub.s32 %v2204, %v3519
        %v3521 = vrot.slane %v2023, %v3520
        %v3522 = vsel %vm2209, %v3521, %v3517
        %v3523 = vlaneseq
        %v3524 = vshrl.u32 %v3523, 7
        %v3525 = vsub.s32 %v2211, %v3524
        %v3526 = vrot.slane %v2026, %v3525
        %v3527 = vsel %vm2216, %v3526, %v3522
        %v3528 = vlaneseq
        %v3529 = vshrl.u32 %v3528, 7
        %v3530 = vsub.s32 %v2192, %v3529
        %v3531 = vrot.slane %v2029, %v3530
        %v3532 = vlaneseq
        %v3533 = vshrl.u32 %v3532, 7
        %v3534 = vsub.s32 %v2197, %v3533
        %v3535 = vrot.slane %v2032, %v3534
        %v3536 = vsel %vm2202, %v3535, %v3531
        %v3537 = vlaneseq
        %v3538 = vshrl.u32 %v3537, 7
        %v3539 = vsub.s32 %v2204, %v3538
        %v3540 = vrot.slane %v2035, %v3539
        %v3541 = vsel %vm2209, %v3540, %v3536
        %v3542 = vlaneseq
        %v3543 = vshrl.u32 %v3542, 7
        %v3544 = vsub.s32 %v2211, %v3543
        %v3545 = vrot.slane %v2038, %v3544
        %v3546 = vsel %vm2216, %v3545, %v3541
        %v3547 = vlaneseq
        %v3548 = vshrl.u32 %v3547, 7
        %v3549 = vsub.s32 %v2192, %v3548
        %v3550 = vrot.slane %v2041, %v3549
        %v3551 = vlaneseq
        %v3552 = vshrl.u32 %v3551, 7
        %v3553 = vsub.s32 %v2197, %v3552
        %v3554 = vrot.slane %v2044, %v3553
        %v3555 = vsel %vm2202, %v3554, %v3550
        %v3556 = vlaneseq
        %v3557 = vshrl.u32 %v3556, 7
        %v3558 = vsub.s32 %v2204, %v3557
        %v3559 = vrot.slane %v2047, %v3558
        %v3560 = vsel %vm2209, %v3559, %v3555
        %v3561 = vlaneseq
        %v3562 = vshrl.u32 %v3561, 7
        %v3563 = vsub.s32 %v2211, %v3562
        %v3564 = vrot.slane %v2050, %v3563
        %v3565 = vsel %vm2216, %v3564, %v3560
        %v3566 = vlaneseq
        %v3567 = vshrl.u32 %v3566, 7
        %v3568 = vsub.s32 %v2192, %v3567
        %v3569 = vrot.slane %v2053, %v3568
        %v3570 = vlaneseq
        %v3571 = vshrl.u32 %v3570, 7
        %v3572 = vsub.s32 %v2197, %v3571
        %v3573 = vrot.slane %v2056, %v3572
        %v3574 = vsel %vm2202, %v3573, %v3569
        %v3575 = vlaneseq
        %v3576 = vshrl.u32 %v3575, 7
        %v3577 = vsub.s32 %v2204, %v3576
        %v3578 = vrot.slane %v2059, %v3577
        %v3579 = vsel %vm2209, %v3578, %v3574
        %v3580 = vlaneseq
        %v3581 = vshrl.u32 %v3580, 7
        %v3582 = vsub.s32 %v2211, %v3581
        %v3583 = vrot.slane %v2062, %v3582
        %v3584 = vsel %vm2216, %v3583, %v3579
        %v3585 = vsel %vm2807, %v3014, %v2995
        %v3586 = vsel %vm2809, %v3033, %v3585
        %v3587 = vsel %vm2811, %v3052, %v3586
        %v3588 = vsel %vm2813, %v3071, %v3587
        %v3589 = vsel %vm2815, %v3109, %v3090
        %v3590 = vsel %vm2817, %v3128, %v3589
        %v3591 = vsel %vm2819, %v3147, %v3590
        %v3592 = vsel %vm2807, %v3166, %v3591
        %v3593 = vsel %vm2809, %v3185, %v3592
        %v3594 = vsel %vm2811, %v3204, %v3593
        %v3595 = vsel %vm2813, %v3223, %v3594
        %v3596 = vsel %vm2815, %v3261, %v3242
        %v3597 = vsel %vm2817, %v3280, %v3596
        %v3598 = vsel %vm2819, %v3299, %v3597
        %v3599 = vsel %vm2807, %v3318, %v3598
        %v3600 = vsel %vm2809, %v3337, %v3599
        %v3601 = vsel %vm2811, %v3356, %v3600
        %v3602 = vsel %vm2813, %v3375, %v3601
        %v3603 = vsel %vm2815, %v3413, %v3394
        %v3604 = vsel %vm2817, %v3432, %v3603
        %v3605 = vsel %vm2819, %v3451, %v3604
        %v3606 = vsel %vm2807, %v3470, %v3605
        %v3607 = vsel %vm2809, %v3489, %v3606
        %v3608 = vsel %vm2811, %v3508, %v3607
        %v3609 = vsel %vm2813, %v3527, %v3608
        %v3610 = vsel %vm2815, %v3565, %v3546
        %v3611 = vsel %vm2817, %v3584, %v3610
        %v3614 = vsel %vm2846, 0.0, %v3588
        %v3615 = vsel %vm2846, %v3611, 0.0
        %vm3618 = vcmask 1046528
        %v3619 = vrot.slane %v2847, 1
        %v3620 = vrot.slane %v2824, 1
        %v3621 = vsel %vm3618, %v3619, %v3620
        %v3622 = vrot.slane %v2831, 1
        %v3623 = vsel %vm3618, %v3620, %v3622
        %v3624 = vrot.slane %v2838, 1
        %v3625 = vsel %vm3618, %v3622, %v3624
        %v3626 = vrot.slane %v2848, 1
        %v3627 = vsel %vm3618, %v3624, %v3626
        %3628 = vrot.lane.b32.xlu0 %v3621, 32
        %v3629 = vpop.permute.xlu0 %3628
        %3630 = vrot.lane.b32.xlu0 %v3623, 32
        %v3631 = vpop.permute.xlu0 %3630
        %3632 = vrot.lane.b32.xlu0 %v3625, 32
        %v3633 = vpop.permute.xlu0 %3632
        %3634 = vrot.lane.b32.xlu0 %v3627, 32
        %v3635 = vpop.permute.xlu0 %3634
        %vm3640 = vcmask 1045504
        %v3641 = vrot.slane %v2847, 2
        %v3642 = vrot.slane %v2824, 2
        %v3643 = vsel %vm3640, %v3641, %v3642
        %v3644 = vrot.slane %v2831, 2
        %v3645 = vsel %vm3640, %v3642, %v3644
        %v3646 = vrot.slane %v2838, 2
        %v3647 = vsel %vm3640, %v3644, %v3646
        %v3648 = vrot.slane %v2848, 2
        %v3649 = vsel %vm3640, %v3646, %v3648
        %3650 = vrot.lane.b32.xlu0 %v3643, 64
        %v3651 = vpop.permute.xlu0 %3650
        %3652 = vrot.lane.b32.xlu0 %v3645, 64
        %v3653 = vpop.permute.xlu0 %3652
        %3654 = vrot.lane.b32.xlu0 %v3647, 64
        %v3655 = vpop.permute.xlu0 %3654
        %3656 = vrot.lane.b32.xlu0 %v3649, 64
        %v3657 = vpop.permute.xlu0 %3656
        %vm3662 = vcmask 1044480
        %v3663 = vrot.slane %v2847, 3
        %v3664 = vrot.slane %v2824, 3
        %v3665 = vsel %vm3662, %v3663, %v3664
        %v3666 = vrot.slane %v2831, 3
        %v3667 = vsel %vm3662, %v3664, %v3666
        %v3668 = vrot.slane %v2838, 3
        %v3669 = vsel %vm3662, %v3666, %v3668
        %v3670 = vrot.slane %v2848, 3
        %v3671 = vsel %vm3662, %v3668, %v3670
        %3672 = vrot.lane.b32.xlu0 %v3665, 96
        %v3673 = vpop.permute.xlu0 %3672
        %3674 = vrot.lane.b32.xlu0 %v3667, 96
        %v3675 = vpop.permute.xlu0 %3674
        %3676 = vrot.lane.b32.xlu0 %v3669, 96
        %v3677 = vpop.permute.xlu0 %3676
        %3678 = vrot.lane.b32.xlu0 %v3671, 96
        %v3679 = vpop.permute.xlu0 %3678
        %v3684 = vrot.slane %v2847, 4
        %v3685 = vrot.slane %v2824, 4
        %v3686 = vsel %vm950, %v3684, %v3685
        %v3687 = vrot.slane %v2831, 4
        %v3688 = vsel %vm950, %v3685, %v3687
        %v3689 = vrot.slane %v2838, 4
        %v3690 = vsel %vm950, %v3687, %v3689
        %v3691 = vrot.slane %v2848, 4
        %v3692 = vsel %vm950, %v3689, %v3691
        %v3697 = vrot.slane %v2847, 5
        %v3698 = vrot.slane %v2824, 5
        %v3699 = vsel %vm2846, %v3697, %v3698
        %v3700 = vrot.slane %v2831, 5
        %v3701 = vsel %vm2846, %v3698, %v3700
        %v3702 = vrot.slane %v2838, 5
        %v3703 = vsel %vm2846, %v3700, %v3702
        %v3704 = vrot.slane %v2848, 5
        %v3705 = vsel %vm2846, %v3702, %v3704
        %3706 = vrot.lane.b32.xlu0 %v3699, 32
        %v3707 = vpop.permute.xlu0 %3706
        %3708 = vrot.lane.b32.xlu0 %v3701, 32
        %v3709 = vpop.permute.xlu0 %3708
        %3710 = vrot.lane.b32.xlu0 %v3703, 32
        %v3711 = vpop.permute.xlu0 %3710
        %3712 = vrot.lane.b32.xlu0 %v3705, 32
        %v3713 = vpop.permute.xlu0 %3712
        %vm3718 = vcmask 1041408
        %v3719 = vrot.slane %v2847, 6
        %v3720 = vrot.slane %v2824, 6
        %v3721 = vsel %vm3718, %v3719, %v3720
        %v3722 = vrot.slane %v2831, 6
        %v3723 = vsel %vm3718, %v3720, %v3722
        %v3724 = vrot.slane %v2838, 6
        %v3725 = vsel %vm3718, %v3722, %v3724
        %v3726 = vrot.slane %v2848, 6
        %v3727 = vsel %vm3718, %v3724, %v3726
        %3728 = vrot.lane.b32.xlu0 %v3721, 64
        %v3729 = vpop.permute.xlu0 %3728
        %3730 = vrot.lane.b32.xlu0 %v3723, 64
        %v3731 = vpop.permute.xlu0 %3730
        %3732 = vrot.lane.b32.xlu0 %v3725, 64
        %v3733 = vpop.permute.xlu0 %3732
        %3734 = vrot.lane.b32.xlu0 %v3727, 64
        %v3735 = vpop.permute.xlu0 %3734
        %3741 = vrot.lane.b32.xlu0 %v3614, 96
        %v3742 = vpop.permute.xlu0 %3741
        %3743 = vrot.lane.b32.xlu0 %v3595, 96
        %v3744 = vpop.permute.xlu0 %3743
        %3745 = vrot.lane.b32.xlu0 %v3602, 96
        %v3746 = vpop.permute.xlu0 %3745
        %3747 = vrot.lane.b32.xlu0 %v3609, 96
        %v3748 = vpop.permute.xlu0 %3747
        %v3754 = vrot.slane %v3614, 1
        %v3755 = vrot.slane %v3595, 1
        %v3756 = vsel %vm3618, %v3754, %v3755
        %v3757 = vrot.slane %v3602, 1
        %v3758 = vsel %vm3618, %v3755, %v3757
        %v3759 = vrot.slane %v3609, 1
        %v3760 = vsel %vm3618, %v3757, %v3759
        %v3761 = vrot.slane %v3615, 1
        %v3762 = vsel %vm3618, %v3759, %v3761
        %v3767 = vrot.slane %v3614, 2
        %v3768 = vrot.slane %v3595, 2
        %v3769 = vsel %vm3640, %v3767, %v3768
        %v3770 = vrot.slane %v3602, 2
        %v3771 = vsel %vm3640, %v3768, %v3770
        %v3772 = vrot.slane %v3609, 2
        %v3773 = vsel %vm3640, %v3770, %v3772
        %v3774 = vrot.slane %v3615, 2
        %v3775 = vsel %vm3640, %v3772, %v3774
        %3776 = vrot.lane.b32.xlu0 %v3769, 32
        %v3777 = vpop.permute.xlu0 %3776
        %3778 = vrot.lane.b32.xlu0 %v3771, 32
        %v3779 = vpop.permute.xlu0 %3778
        %3780 = vrot.lane.b32.xlu0 %v3773, 32
        %v3781 = vpop.permute.xlu0 %3780
        %3782 = vrot.lane.b32.xlu0 %v3775, 32
        %v3783 = vpop.permute.xlu0 %3782
        %v3788 = vrot.slane %v3614, 3
        %v3789 = vrot.slane %v3595, 3
        %v3790 = vsel %vm3662, %v3788, %v3789
        %v3791 = vrot.slane %v3602, 3
        %v3792 = vsel %vm3662, %v3789, %v3791
        %v3793 = vrot.slane %v3609, 3
        %v3794 = vsel %vm3662, %v3791, %v3793
        %v3795 = vrot.slane %v3615, 3
        %v3796 = vsel %vm3662, %v3793, %v3795
        %3797 = vrot.lane.b32.xlu0 %v3790, 64
        %v3798 = vpop.permute.xlu0 %3797
        %3799 = vrot.lane.b32.xlu0 %v3792, 64
        %v3800 = vpop.permute.xlu0 %3799
        %3801 = vrot.lane.b32.xlu0 %v3794, 64
        %v3802 = vpop.permute.xlu0 %3801
        %3803 = vrot.lane.b32.xlu0 %v3796, 64
        %v3804 = vpop.permute.xlu0 %3803
        %v3809 = vrot.slane %v3614, 4
        %v3810 = vrot.slane %v3595, 4
        %v3811 = vsel %vm950, %v3809, %v3810
        %v3812 = vrot.slane %v3602, 4
        %v3813 = vsel %vm950, %v3810, %v3812
        %v3814 = vrot.slane %v3609, 4
        %v3815 = vsel %vm950, %v3812, %v3814
        %v3816 = vrot.slane %v3615, 4
        %v3817 = vsel %vm950, %v3814, %v3816
        %3818 = vrot.lane.b32.xlu0 %v3811, 96
        %v3819 = vpop.permute.xlu0 %3818
        %3820 = vrot.lane.b32.xlu0 %v3813, 96
        %v3821 = vpop.permute.xlu0 %3820
        %3822 = vrot.lane.b32.xlu0 %v3815, 96
        %v3823 = vpop.permute.xlu0 %3822
        %3824 = vrot.lane.b32.xlu0 %v3817, 96
        %v3825 = vpop.permute.xlu0 %3824
        %v3830 = vrot.slane %v3614, 5
        %v3831 = vrot.slane %v3595, 5
        %v3832 = vsel %vm2846, %v3830, %v3831
        %v3833 = vrot.slane %v3602, 5
        %v3834 = vsel %vm2846, %v3831, %v3833
        %v3835 = vrot.slane %v3609, 5
        %v3836 = vsel %vm2846, %v3833, %v3835
        %v3837 = vrot.slane %v3615, 5
        %v3838 = vsel %vm2846, %v3835, %v3837
        %v3843 = vrot.slane %v3614, 6
        %v3844 = vrot.slane %v3595, 6
        %v3845 = vsel %vm3718, %v3843, %v3844
        %v3846 = vrot.slane %v3602, 6
        %v3847 = vsel %vm3718, %v3844, %v3846
        %v3848 = vrot.slane %v3609, 6
        %v3849 = vsel %vm3718, %v3846, %v3848
        %v3850 = vrot.slane %v3615, 6
        %v3851 = vsel %vm3718, %v3848, %v3850
        %3852 = vrot.lane.b32.xlu0 %v3845, 32
        %v3853 = vpop.permute.xlu0 %3852
        %3854 = vrot.lane.b32.xlu0 %v3847, 32
        %v3855 = vpop.permute.xlu0 %3854
        %3856 = vrot.lane.b32.xlu0 %v3849, 32
        %v3857 = vpop.permute.xlu0 %3856
        %3858 = vrot.lane.b32.xlu0 %v3851, 32
        %v3859 = vpop.permute.xlu0 %3858
        %vm3864 = vcmask 261120
        %v3865 = vsel %vm3864, %v2847, %v3629
        %v3866 = vsel %vm3864, %v2824, %v3631
        %v3867 = vsel %vm3864, %v2831, %v3633
        %v3868 = vsel %vm3864, %v2838, %v3635
        %v3869 = vsel %vm324, %v3865, %v3651
        %v3870 = vsel %vm324, %v3866, %v3653
        %v3871 = vsel %vm324, %v3867, %v3655
        %v3872 = vsel %vm324, %v3868, %v3657
        %vm3873 = vcmask 785408
        %v3874 = vsel %vm3873, %v3869, %v3673
        %v3875 = vsel %vm3873, %v3870, %v3675
        %v3876 = vsel %vm3873, %v3871, %v3677
        %v3877 = vsel %vm3873, %v3872, %v3679
        %v3878 = vsel %vm3864, %v3686, %v3707
        %v3879 = vsel %vm3864, %v3688, %v3709
        %v3880 = vsel %vm3864, %v3690, %v3711
        %v3881 = vsel %vm3864, %v3692, %v3713
        %v3882 = vsel %vm324, %v3878, %v3729
        %v3883 = vsel %vm324, %v3879, %v3731
        %v3884 = vsel %vm324, %v3880, %v3733
        %v3885 = vsel %vm324, %v3881, %v3735
        %v3886 = vsel %vm3873, %v3882, %v3742
        %v3887 = vsel %vm3873, %v3883, %v3744
        %v3888 = vsel %vm3873, %v3884, %v3746
        %v3889 = vsel %vm3873, %v3885, %v3748
        %v3890 = vsel %vm3864, %v3756, %v3777
        %v3891 = vsel %vm3864, %v3758, %v3779
        %v3892 = vsel %vm3864, %v3760, %v3781
        %v3893 = vsel %vm3864, %v3762, %v3783
        %v3894 = vsel %vm324, %v3890, %v3798
        %v3895 = vsel %vm324, %v3891, %v3800
        %v3896 = vsel %vm324, %v3892, %v3802
        %v3897 = vsel %vm324, %v3893, %v3804
        %v3898 = vsel %vm3873, %v3894, %v3819
        %v3899 = vsel %vm3873, %v3895, %v3821
        %v3900 = vsel %vm3873, %v3896, %v3823
        %v3901 = vsel %vm3873, %v3897, %v3825
        %v3902 = vsel %vm3864, %v3832, %v3853
        %v3903 = vsel %vm3864, %v3834, %v3855
        %v3904 = vsel %vm3864, %v3836, %v3857
        %v3905 = vsel %vm3864, %v3838, %v3859
        %v3906 = vld [vmem:[%s3] sm:$0xff]
        %v3907 = vld [vmem:[%s3 + $0x8] sm:$0xff]
        %v3908 = vld [vmem:[%s3 + $0x10] sm:$0xff]
        %v3909 = vld [vmem:[%s3 + $0x18] sm:$0xff]
        %v3910 = vld [vmem:[%s3 + $0x20] sm:$0xff]
        %v3911 = vld [vmem:[%s3 + $0x28] sm:$0xff]
        %v3912 = vld [vmem:[%s3 + $0x30] sm:$0xff]
        %v3913 = vld [vmem:[%s3 + $0x38] sm:$0xff]
        %v3914 = vld [vmem:[%s3 + $0x40] sm:$0xff]
        %v3915 = vld [vmem:[%s3 + $0x48] sm:$0xff]
        %v3916 = vld [vmem:[%s3 + $0x50] sm:$0xff]
        %v3917 = vld [vmem:[%s3 + $0x58] sm:$0xff]
        %v3918 = vld [vmem:[%s3 + $0x60] sm:$0xff]
        %v3919 = vld [vmem:[%s3 + $0x68] sm:$0xff]
        %v3920 = vld [vmem:[%s3 + $0x70] sm:$0xff]
        %v3921 = vld [vmem:[%s3 + $0x78] sm:$0xff]
        %v3922 = vld [vmem:[%s3 + $0x80] sm:$0xff]
        %v3923 = vld [vmem:[%s3 + $0x88] sm:$0xff]
        %v3924 = vld [vmem:[%s3 + $0x90] sm:$0xff]
        %v3925 = vld [vmem:[%s3 + $0x98] sm:$0xff]
        %v3926 = vld [vmem:[%s3 + $0xa0] sm:$0xff]
        %v3927 = vld [vmem:[%s3 + $0xa8] sm:$0xff]
        %v3928 = vld [vmem:[%s3 + $0xb0] sm:$0xff]
        %v3929 = vld [vmem:[%s3 + $0xb8] sm:$0xff]
        %v3930 = vld [vmem:[%s3 + $0xc0] sm:$0xff]
        %v3931 = vld [vmem:[%s3 + $0xc8] sm:$0xff]
        %v3932 = vld [vmem:[%s3 + $0xd0] sm:$0xff]
        %v3933 = vld [vmem:[%s3 + $0xd8] sm:$0xff]
        %v3934 = vld [vmem:[%s3 + $0xe0] sm:$0xff]
        %v3935 = vld [vmem:[%s3 + $0xe8] sm:$0xff]
        %v3936 = vld [vmem:[%s3 + $0xf0] sm:$0xff]
        %v3937 = vld [vmem:[%s3 + $0xf8] sm:$0xff]
        %v3938 = vld [vmem:[%s3 + $0x100] sm:$0xff]
        %v3939 = vld [vmem:[%s3 + $0x108] sm:$0xff]
        %v3940 = vld [vmem:[%s3 + $0x110] sm:$0xff]
        %v3941 = vld [vmem:[%s3 + $0x118] sm:$0xff]
        %v3942 = vld [vmem:[%s3 + $0x120] sm:$0xff]
        %v3943 = vld [vmem:[%s3 + $0x128] sm:$0xff]
        %v3944 = vld [vmem:[%s3 + $0x130] sm:$0xff]
        %v3945 = vld [vmem:[%s3 + $0x138] sm:$0xff]
        %v3946 = vld [vmem:[%s3 + $0x140] sm:$0xff]
        %v3947 = vld [vmem:[%s3 + $0x148] sm:$0xff]
        %v3948 = vld [vmem:[%s3 + $0x150] sm:$0xff]
        %v3949 = vld [vmem:[%s3 + $0x158] sm:$0xff]
        %v3950 = vld [vmem:[%s3 + $0x160] sm:$0xff]
        %v3951 = vld [vmem:[%s3 + $0x168] sm:$0xff]
        %v3952 = vld [vmem:[%s3 + $0x170] sm:$0xff]
        %v3953 = vld [vmem:[%s3 + $0x178] sm:$0xff]
        %v3954 = vld [vmem:[%s3 + $0x180] sm:$0xff]
        %v3955 = vld [vmem:[%s3 + $0x188] sm:$0xff]
        %v3956 = vld [vmem:[%s3 + $0x190] sm:$0xff]
        %v3957 = vld [vmem:[%s3 + $0x198] sm:$0xff]
        %v3958 = vld [vmem:[%s3 + $0x1a0] sm:$0xff]
        %v3959 = vld [vmem:[%s3 + $0x1a8] sm:$0xff]
        %v3960 = vld [vmem:[%s3 + $0x1b0] sm:$0xff]
        %v3961 = vld [vmem:[%s3 + $0x1b8] sm:$0xff]
        %v3963 = vsel %vm324, %v3902, 0
        %v3966 = vsel %vm324, %v3903, 0
        %v3969 = vsel %vm324, %v3904, 0
        %v3972 = vsel %vm324, %v3905, 0
        %3974 = vmatprep.subr.mxu0 0.0
        %3975 = vmatpush1.msra.mxu0 %v3906
        %3976 = vmatprep.subr.mxu0 0.0
        %3977 = vmatpush1.msra.mxu0 %v3907
        %3978 = vmatprep.subr.mxu0 0.0
        %3979 = vmatpush1.msra.mxu0 %v3908
        %3980 = vmatprep.subr.mxu0 0.0
        %3981 = vmatpush1.msra.mxu0 %v3909
        %3982 = vmatprep.subr.mxu0 0.0
        %3983 = vmatpush1.msra.mxu0 %v3910
        %3984 = vmatprep.subr.mxu0 0.0
        %3985 = vmatpush1.msra.mxu0 %v3911
        %3986 = vmatprep.subr.mxu0 0.0
        %3987 = vmatpush1.msra.mxu0 %v3912
        %3988 = vmatprep.subr.mxu0 0.0
        %3989 = vmatpush1.msra.mxu0 %v3913
        %3990 = vmatprep.subr.mxu0 0.0
        %3991 = vmatpush1.msra.mxu0 %v3914
        %3992 = vmatprep.subr.mxu0 0.0
        %3993 = vmatpush1.msra.mxu0 %v3915
        %3994 = vmatprep.subr.mxu0 0.0
        %3995 = vmatpush1.msra.mxu0 %v3916
        %3996 = vmatprep.subr.mxu0 0.0
        %3997 = vmatpush1.msra.mxu0 %v3917
        %3998 = vmatprep.subr.mxu0 0.0
        %3999 = vmatpush1.msra.mxu0 %v3918
        %4000 = vmatprep.subr.mxu0 0.0
        %4001 = vmatpush1.msra.mxu0 %v3919
        %4002 = vmatprep.subr.mxu0 0.0
        %4003 = vmatpush1.msra.mxu0 %v3920
        %4004 = vmatprep.subr.mxu0 0.0
        %4005 = vmatpush1.msra.mxu0 %v3921
        %4006 = vmatprep.subr.mxu0 0.0
        %4007 = vmatpush1.msra.mxu0 %v3922
        %4008 = vmatprep.subr.mxu0 0.0
        %4009 = vmatpush1.msra.mxu0 %v3923
        %4010 = vmatprep.subr.mxu0 0.0
        %4011 = vmatpush1.msra.mxu0 %v3924
        %4012 = vmatprep.subr.mxu0 0.0
        %4013 = vmatpush1.msra.mxu0 %v3925
        %4014 = vmatprep.subr.mxu0 0.0
        %4015 = vmatpush1.msra.mxu0 %v3926
        %4016 = vmatprep.subr.mxu0 0.0
        %4017 = vmatpush1.msra.mxu0 %v3927
        %4018 = vmatprep.subr.mxu0 0.0
        %4019 = vmatpush1.msra.mxu0 %v3928
        %4020 = vmatprep.subr.mxu0 0.0
        %4021 = vmatpush1.msra.mxu0 %v3929
        %4022 = vmatprep.subr.mxu0 0.0
        %4023 = vmatpush1.msra.mxu0 %v3930
        %4024 = vmatprep.subr.mxu0 0.0
        %4025 = vmatpush1.msra.mxu0 %v3931
        %4026 = vmatprep.subr.mxu0 0.0
        %4027 = vmatpush1.msra.mxu0 %v3932
        %4028 = vmatprep.subr.mxu0 0.0
        %4029 = vmatpush1.msra.mxu0 %v3933
        %4030 = vmatprep.subr.mxu0 0.0
        %4031 = vmatpush1.msra.mxu0 %v3934
        %4032 = vmatprep.subr.mxu0 0.0
        %4033 = vmatpush1.msra.mxu0 %v3935
        %4034 = vmatprep.subr.mxu0 0.0
        %4035 = vmatpush1.msra.mxu0 %v3936
        %4036 = vmatprep.subr.mxu0 0.0
        %4037 = vmatpush1.msra.mxu0 %v3937
        %4038 = vmatprep.mubr.f32.mxu0 %v3886
        %4039 = vmatmul.mubr.f32.gmra.mrb[0].mxu0 %v3874
        %v4040 = vpop.f32.mrb[0].mxu0
        %v4041 = vadd.f32 0.0, %v4040
        %v4042 = vpop.f32.mrb[0].mxu0
        %4043 = vmatprep.mubr.f32.mxu0 %v3887
        %4044 = vmatmul.mubr.f32.gmra.mrb[0].mxu0 %v3875
        %v4045 = vpop.f32.mrb[0].mxu0
        %v4046 = vadd.f32 0.0, %v4045
        %v4047 = vpop.f32.mrb[0].mxu0
        %4048 = vmatprep.mubr.f32.mxu0 %v3888
        %4049 = vmatmul.mubr.f32.gmra.mrb[0].mxu0 %v3876
        %v4050 = vpop.f32.mrb[0].mxu0
        %v4051 = vadd.f32 0.0, %v4050
        %v4052 = vpop.f32.mrb[0].mxu0
        %4053 = vmatprep.mubr.f32.mxu0 %v3889
        %4054 = vmatmul.mubr.f32.gmra.mrb[0].mxu0 %v3877
        %v4055 = vpop.f32.mrb[0].mxu0
        %v4056 = vadd.f32 0.0, %v4055
        %v4057 = vpop.f32.mrb[0].mxu0
        %4058 = vdwg.mxu0
        %4059 = vmatprep.subr.mxu0 0.0
        %4060 = vmatpush1.msra.mxu0 %v3938
        %4061 = vmatprep.subr.mxu0 0.0
        %4062 = vmatpush1.msra.mxu0 %v3939
        %4063 = vmatprep.subr.mxu0 0.0
        %4064 = vmatpush1.msra.mxu0 %v3940
        %4065 = vmatprep.subr.mxu0 0.0
        %4066 = vmatpush1.msra.mxu0 %v3941
        %4067 = vmatprep.subr.mxu0 0.0
        %4068 = vmatpush1.msra.mxu0 %v3942
        %4069 = vmatprep.subr.mxu0 0.0
        %4070 = vmatpush1.msra.mxu0 %v3943
        %4071 = vmatprep.subr.mxu0 0.0
        %4072 = vmatpush1.msra.mxu0 %v3944
        %4073 = vmatprep.subr.mxu0 0.0
        %4074 = vmatpush1.msra.mxu0 %v3945
        %4075 = vmatprep.subr.mxu0 0.0
        %4076 = vmatpush1.msra.mxu0 %v3946
        %4077 = vmatprep.subr.mxu0 0.0
        %4078 = vmatpush1.msra.mxu0 %v3947
        %4079 = vmatprep.subr.mxu0 0.0
        %4080 = vmatpush1.msra.mxu0 %v3948
        %4081 = vmatprep.subr.mxu0 0.0
        %4082 = vmatpush1.msra.mxu0 %v3949
        %4083 = vmatprep.subr.mxu0 0.0
        %4084 = vmatpush1.msra.mxu0 %v3950
        %4085 = vmatprep.subr.mxu0 0.0
        %4086 = vmatpush1.msra.mxu0 %v3951
        %4087 = vmatprep.subr.mxu0 0.0
        %4088 = vmatpush1.msra.mxu0 %v3952
        %4089 = vmatprep.subr.mxu0 0.0
        %4090 = vmatpush1.msra.mxu0 %v3953
        %4091 = vmatprep.subr.mxu0 0.0
        %4092 = vmatpush1.msra.mxu0 %v3954
        %4093 = vmatprep.subr.mxu0 0.0
        %4094 = vmatpush1.msra.mxu0 %v3955
        %4095 = vmatprep.subr.mxu0 0.0
        %4096 = vmatpush1.msra.mxu0 %v3956
        %4097 = vmatprep.subr.mxu0 0.0
        %4098 = vmatpush1.msra.mxu0 %v3957
        %4099 = vmatprep.subr.mxu0 0.0
        %4100 = vmatpush1.msra.mxu0 %v3958
        %4101 = vmatprep.subr.mxu0 0.0
        %4102 = vmatpush1.msra.mxu0 %v3959
        %4103 = vmatprep.subr.mxu0 0.0
        %4104 = vmatpush1.msra.mxu0 %v3960
        %4105 = vmatprep.subr.mxu0 0.0
        %4106 = vmatpush1.msra.mxu0 %v3961
        %4107 = vmatprep.subr.mxu0 0.0
        %4108 = vmatpush1.msra.mxu0 0.0
        %4109 = vmatprep.subr.mxu0 0.0
        %4110 = vmatpush1.msra.mxu0 0.0
        %4111 = vmatprep.subr.mxu0 0.0
        %4112 = vmatpush1.msra.mxu0 0.0
        %4113 = vmatprep.subr.mxu0 0.0
        %4114 = vmatpush1.msra.mxu0 0.0
        %4115 = vmatprep.subr.mxu0 0.0
        %4116 = vmatpush1.msra.mxu0 0.0
        %4117 = vmatprep.subr.mxu0 0.0
        %4118 = vmatpush1.msra.mxu0 0.0
        %4119 = vmatprep.subr.mxu0 0.0
        %4120 = vmatpush1.msra.mxu0 0.0
        %4121 = vmatprep.subr.mxu0 0.0
        %4122 = vmatpush1.msra.mxu0 0.0
        %4123 = vmatprep.mubr.f32.mxu0 %v3963
        %4124 = vmatmul.mubr.f32.gmra.mrb[0].mxu0 %v3898
        %v4125 = vpop.f32.mrb[0].mxu0
        %v4126 = vadd.f32 %v4041, %v4125
        %v4127 = vpop.f32.mrb[0].mxu0
        %4128 = vmatprep.mubr.f32.mxu0 %v3966
        %4129 = vmatmul.mubr.f32.gmra.mrb[0].mxu0 %v3899
        %v4130 = vpop.f32.mrb[0].mxu0
        %v4131 = vadd.f32 %v4046, %v4130
        %v4132 = vpop.f32.mrb[0].mxu0
        %4133 = vmatprep.mubr.f32.mxu0 %v3969
        %4134 = vmatmul.mubr.f32.gmra.mrb[0].mxu0 %v3900
        %v4135 = vpop.f32.mrb[0].mxu0
        %v4136 = vadd.f32 %v4051, %v4135
        %v4137 = vpop.f32.mrb[0].mxu0
        %4138 = vmatprep.mubr.f32.mxu0 %v3972
        %4139 = vmatmul.mubr.f32.gmra.mrb[0].mxu0 %v3901
        %v4140 = vpop.f32.mrb[0].mxu0
        %v4141 = vadd.f32 %v4056, %v4140
        %v4142 = vpop.f32.mrb[0].mxu0
        %4143 = vdwg.mxu0
        %v4144 = vxor.u32 %v4126, 2147483648
        %v4145 = vxor.u32 %v4131, 2147483648
        %v4146 = vxor.u32 %v4136, 2147483648
        %v4147 = vxor.u32 %v4141, 2147483648
        %v4148 = vmul.f32 %v4144, 1.442695
        %v4149 = vpow.pop %v4148
        %v4150 = vmul.f32 %v4145, 1.442695
        %v4151 = vpow.pop %v4150
        %v4152 = vmul.f32 %v4146, 1.442695
        %v4153 = vpow.pop %v4152
        %v4154 = vmul.f32 %v4147, 1.442695
        %v4155 = vpow.pop %v4154
        %v4156 = vadd.f32 %v4149, 1.0
        %v4157 = vadd.f32 %v4151, 1.0
        %v4158 = vadd.f32 %v4153, 1.0
        %v4159 = vadd.f32 %v4155, 1.0
        %v4160 = vrcp.pop %v4156
        %v4161 = vmul.f32 1.0, %v4160
        %v4162 = vrcp.pop %v4157
        %v4163 = vmul.f32 1.0, %v4162
        %v4164 = vrcp.pop %v4158
        %v4165 = vmul.f32 1.0, %v4164
        %v4166 = vrcp.pop %v4159
        %v4167 = vmul.f32 1.0, %v4166
        %4168 = vxpose.xlu0.b32.start [1/16] %v4161, 128
        %4169 = vxpose.xlu0.b32.cont [2/16] %v4163, 128
        %4170 = vxpose.xlu0.b32.cont [3/16] %v4165, 128
        %4171 = vxpose.xlu0.b32.cont [4/16] %v4167, 128
        %4172 = vxpose.xlu0.b32.cont [5/16] 0.0, 128
        %4173 = vxpose.xlu0.b32.cont [6/16] 0.0, 128
        %4174 = vxpose.xlu0.b32.cont [7/16] 0.0, 128
        %4175 = vxpose.xlu0.b32.cont [8/16] 0.0, 128
        %4176 = vxpose.xlu0.b32.cont [9/16] 0.0, 128
        %4177 = vxpose.xlu0.b32.cont [10/16] 0.0, 128
        %4178 = vxpose.xlu0.b32.cont [11/16] 0.0, 128
        %4179 = vxpose.xlu0.b32.cont [12/16] 0.0, 128
        %4180 = vxpose.xlu0.b32.cont [13/16] 0.0, 128
        %4181 = vxpose.xlu0.b32.cont [14/16] 0.0, 128
        %4182 = vxpose.xlu0.b32.cont [15/16] 0.0, 128
        %4183 = vxpose.xlu0.b32.end [16/16] 0.0, 128
        %v4184 = vpop.trf.xlu0
        %v4185 = vpop.trf.xlu0
        %v4186 = vpop.trf.xlu0
        %v4187 = vpop.trf.xlu0
        %v4188 = vpop.trf.xlu0
        %v4189 = vpop.trf.xlu0
        %v4190 = vpop.trf.xlu0
        %v4191 = vpop.trf.xlu0
        %v4192 = vpop.trf.xlu0
        %v4193 = vpop.trf.xlu0
        %v4194 = vpop.trf.xlu0
        %v4195 = vpop.trf.xlu0
        %v4196 = vpop.trf.xlu0
        %v4197 = vpop.trf.xlu0
        %v4198 = vpop.trf.xlu0
        %v4199 = vpop.trf.xlu0
        %4201 = vset.pattern.permute.xlu0 0
        %4202 = vperm.xlu0 %4201, %v4184
        %v4203 = vpop.permute.xlu0 %4202
        %4206 = vset.pattern.permute.xlu0 0
        %4207 = vperm.xlu0 %4206, %v4185
        %v4208 = vpop.permute.xlu0 %4207
        %4211 = vset.pattern.permute.xlu0 0
        %4212 = vperm.xlu0 %4211, %v4186
        %v4213 = vpop.permute.xlu0 %4212
        %4216 = vset.pattern.permute.xlu0 0
        %4217 = vperm.xlu0 %4216, %v4187
        %v4218 = vpop.permute.xlu0 %4217
        %v4220 = vmul.f32 %v1038, %v4203
        %v4221 = vmul.f32 %v1039, %v4208
        %v4222 = vmul.f32 %v1040, %v4213
        %v4223 = vmul.f32 %v1041, %v4218
        %4224 = vst.msk [vmem:[%s190] sm:$0xff] %vm324, %v4220
        %4225 = vst.msk [vmem:[%s190 + $0x8] sm:$0xff] %vm324, %v4221
        %4226 = vst.msk [vmem:[%s190 + $0x10] sm:$0xff] %vm324, %v4222
        %4227 = vst.msk [vmem:[%s190 + $0x18] sm:$0xff] %vm324, %v4223
        %4228 = vset.pattern.permute.xlu0 1
        %4229 = vperm.xlu0 %4228, %v4184
        %v4230 = vpop.permute.xlu0 %4229
        %4232 = vset.pattern.permute.xlu0 1
        %4233 = vperm.xlu0 %4232, %v4185
        %v4234 = vpop.permute.xlu0 %4233
        %4236 = vset.pattern.permute.xlu0 1
        %4237 = vperm.xlu0 %4236, %v4186
        %v4238 = vpop.permute.xlu0 %4237
        %4240 = vset.pattern.permute.xlu0 1
        %4241 = vperm.xlu0 %4240, %v4187
        %v4242 = vpop.permute.xlu0 %4241
        %v4244 = vmul.f32 %v1042, %v4230
        %v4245 = vmul.f32 %v1043, %v4234
        %v4246 = vmul.f32 %v1044, %v4238
        %v4247 = vmul.f32 %v1045, %v4242
        %s4248 = scalar_lea.vmem %s190, 32 [#allocation2]
        %4249 = vst.msk [vmem:[%s4248] sm:$0xff] %vm324, %v4244
        %4250 = vst.msk [vmem:[%s4248 + $0x8] sm:$0xff] %vm324, %v4245
        %4251 = vst.msk [vmem:[%s4248 + $0x10] sm:$0xff] %vm324, %v4246
        %4252 = vst.msk [vmem:[%s4248 + $0x18] sm:$0xff] %vm324, %v4247
        %4253 = vset.pattern.permute.xlu0 2
        %4254 = vperm.xlu0 %4253, %v4184
        %v4255 = vpop.permute.xlu0 %4254
        %4257 = vset.pattern.permute.xlu0 2
        %4258 = vperm.xlu0 %4257, %v4185
        %v4259 = vpop.permute.xlu0 %4258
        %4261 = vset.pattern.permute.xlu0 2
        %4262 = vperm.xlu0 %4261, %v4186
        %v4263 = vpop.permute.xlu0 %4262
        %4265 = vset.pattern.permute.xlu0 2
        %4266 = vperm.xlu0 %4265, %v4187
        %v4267 = vpop.permute.xlu0 %4266
        %v4269 = vmul.f32 %v1046, %v4255
        %v4270 = vmul.f32 %v1047, %v4259
        %v4271 = vmul.f32 %v1048, %v4263
        %v4272 = vmul.f32 %v1049, %v4267
        %s4273 = scalar_lea.vmem %s190, 64 [#allocation2]
        %4274 = vst.msk [vmem:[%s4273] sm:$0xff] %vm324, %v4269
        %4275 = vst.msk [vmem:[%s4273 + $0x8] sm:$0xff] %vm324, %v4270
        %4276 = vst.msk [vmem:[%s4273 + $0x10] sm:$0xff] %vm324, %v4271
        %4277 = vst.msk [vmem:[%s4273 + $0x18] sm:$0xff] %vm324, %v4272
        %4278 = vset.pattern.permute.xlu0 3
        %4279 = vperm.xlu0 %4278, %v4184
        %v4280 = vpop.permute.xlu0 %4279
        %4282 = vset.pattern.permute.xlu0 3
        %4283 = vperm.xlu0 %4282, %v4185
        %v4284 = vpop.permute.xlu0 %4283
        %4286 = vset.pattern.permute.xlu0 3
        %4287 = vperm.xlu0 %4286, %v4186
        %v4288 = vpop.permute.xlu0 %4287
        %4290 = vset.pattern.permute.xlu0 3
        %4291 = vperm.xlu0 %4290, %v4187
        %v4292 = vpop.permute.xlu0 %4291
        %v4294 = vmul.f32 %v1050, %v4280
        %v4295 = vmul.f32 %v1051, %v4284
        %v4296 = vmul.f32 %v1052, %v4288
        %v4297 = vmul.f32 %v1053, %v4292
        %s4298 = scalar_lea.vmem %s190, 96 [#allocation2]
        %4299 = vst.msk [vmem:[%s4298] sm:$0xff] %vm324, %v4294
        %4300 = vst.msk [vmem:[%s4298 + $0x8] sm:$0xff] %vm324, %v4295
        %4301 = vst.msk [vmem:[%s4298 + $0x10] sm:$0xff] %vm324, %v4296
        %4302 = vst.msk [vmem:[%s4298 + $0x18] sm:$0xff] %vm324, %v4297
        %4303 = vset.pattern.permute.xlu0 4
        %4304 = vperm.xlu0 %4303, %v4184
        %v4305 = vpop.permute.xlu0 %4304
        %4307 = vset.pattern.permute.xlu0 4
        %4308 = vperm.xlu0 %4307, %v4185
        %v4309 = vpop.permute.xlu0 %4308
        %4311 = vset.pattern.permute.xlu0 4
        %4312 = vperm.xlu0 %4311, %v4186
        %v4313 = vpop.permute.xlu0 %4312
        %4315 = vset.pattern.permute.xlu0 4
        %4316 = vperm.xlu0 %4315, %v4187
        %v4317 = vpop.permute.xlu0 %4316
        %v4319 = vmul.f32 %v1054, %v4305
        %v4320 = vmul.f32 %v1055, %v4309
        %v4321 = vmul.f32 %v1056, %v4313
        %v4322 = vmul.f32 %v1057, %v4317
        %s4323 = scalar_lea.vmem %s190, 128 [#allocation2]
        %4324 = vst.msk [vmem:[%s4323] sm:$0xff] %vm324, %v4319
        %4325 = vst.msk [vmem:[%s4323 + $0x8] sm:$0xff] %vm324, %v4320
        %4326 = vst.msk [vmem:[%s4323 + $0x10] sm:$0xff] %vm324, %v4321
        %4327 = vst.msk [vmem:[%s4323 + $0x18] sm:$0xff] %vm324, %v4322
        %4328 = vset.pattern.permute.xlu0 5
        %4329 = vperm.xlu0 %4328, %v4184
        %v4330 = vpop.permute.xlu0 %4329
        %4332 = vset.pattern.permute.xlu0 5
        %4333 = vperm.xlu0 %4332, %v4185
        %v4334 = vpop.permute.xlu0 %4333
        %4336 = vset.pattern.permute.xlu0 5
        %4337 = vperm.xlu0 %4336, %v4186
        %v4338 = vpop.permute.xlu0 %4337
        %4340 = vset.pattern.permute.xlu0 5
        %4341 = vperm.xlu0 %4340, %v4187
        %v4342 = vpop.permute.xlu0 %4341
        %v4344 = vmul.f32 %v1058, %v4330
        %v4345 = vmul.f32 %v1059, %v4334
        %v4346 = vmul.f32 %v1060, %v4338
        %v4347 = vmul.f32 %v1061, %v4342
        %s4348 = scalar_lea.vmem %s190, 160 [#allocation2]
        %4349 = vst.msk [vmem:[%s4348] sm:$0xff] %vm324, %v4344
        %4350 = vst.msk [vmem:[%s4348 + $0x8] sm:$0xff] %vm324, %v4345
        %4351 = vst.msk [vmem:[%s4348 + $0x10] sm:$0xff] %vm324, %v4346
        %4352 = vst.msk [vmem:[%s4348 + $0x18] sm:$0xff] %vm324, %v4347
        %4353 = vset.pattern.permute.xlu0 6
        %4354 = vperm.xlu0 %4353, %v4184
        %v4355 = vpop.permute.xlu0 %4354
        %4357 = vset.pattern.permute.xlu0 6
        %4358 = vperm.xlu0 %4357, %v4185
        %v4359 = vpop.permute.xlu0 %4358
        %4361 = vset.pattern.permute.xlu0 6
        %4362 = vperm.xlu0 %4361, %v4186
        %v4363 = vpop.permute.xlu0 %4362
        %4365 = vset.pattern.permute.xlu0 6
        %4366 = vperm.xlu0 %4365, %v4187
        %v4367 = vpop.permute.xlu0 %4366
        %v4369 = vmul.f32 %v1062, %v4355
        %v4370 = vmul.f32 %v1063, %v4359
        %v4371 = vmul.f32 %v1064, %v4363
        %v4372 = vmul.f32 %v1065, %v4367
        %s4373 = scalar_lea.vmem %s190, 192 [#allocation2]
        %4374 = vst.msk [vmem:[%s4373] sm:$0xff] %vm324, %v4369
        %4375 = vst.msk [vmem:[%s4373 + $0x8] sm:$0xff] %vm324, %v4370
        %4376 = vst.msk [vmem:[%s4373 + $0x10] sm:$0xff] %vm324, %v4371
        %4377 = vst.msk [vmem:[%s4373 + $0x18] sm:$0xff] %vm324, %v4372
        %4378 = vset.pattern.permute.xlu0 7
        %4379 = vperm.xlu0 %4378, %v4184
        %v4380 = vpop.permute.xlu0 %4379
        %4382 = vset.pattern.permute.xlu0 7
        %4383 = vperm.xlu0 %4382, %v4185
        %v4384 = vpop.permute.xlu0 %4383
        %4386 = vset.pattern.permute.xlu0 7
        %4387 = vperm.xlu0 %4386, %v4186
        %v4388 = vpop.permute.xlu0 %4387
        %4390 = vset.pattern.permute.xlu0 7
        %4391 = vperm.xlu0 %4390, %v4187
        %v4392 = vpop.permute.xlu0 %4391
        %v4394 = vmul.f32 %v1066, %v4380
        %v4395 = vmul.f32 %v1067, %v4384
        %v4396 = vmul.f32 %v1068, %v4388
        %v4397 = vmul.f32 %v1069, %v4392
        %s4398 = scalar_lea.vmem %s190, 224 [#allocation2]
        %4399 = vst.msk [vmem:[%s4398] sm:$0xff] %vm324, %v4394
        %4400 = vst.msk [vmem:[%s4398 + $0x8] sm:$0xff] %vm324, %v4395
        %4401 = vst.msk [vmem:[%s4398 + $0x10] sm:$0xff] %vm324, %v4396
        %4402 = vst.msk [vmem:[%s4398 + $0x18] sm:$0xff] %vm324, %v4397
        %4403 = vset.pattern.permute.xlu0 8
        %4404 = vperm.xlu0 %4403, %v4184
        %v4405 = vpop.permute.xlu0 %4404
        %4407 = vset.pattern.permute.xlu0 8
        %4408 = vperm.xlu0 %4407, %v4185
        %v4409 = vpop.permute.xlu0 %4408
        %4411 = vset.pattern.permute.xlu0 8
        %4412 = vperm.xlu0 %4411, %v4186
        %v4413 = vpop.permute.xlu0 %4412
        %4415 = vset.pattern.permute.xlu0 8
        %4416 = vperm.xlu0 %4415, %v4187
        %v4417 = vpop.permute.xlu0 %4416
        %v4419 = vmul.f32 %v1070, %v4405
        %v4420 = vmul.f32 %v1071, %v4409
        %v4421 = vmul.f32 %v1072, %v4413
        %v4422 = vmul.f32 %v1073, %v4417
        %s4423 = scalar_lea.vmem %s190, 256 [#allocation2]
        %4424 = vst.msk [vmem:[%s4423] sm:$0xff] %vm324, %v4419
        %4425 = vst.msk [vmem:[%s4423 + $0x8] sm:$0xff] %vm324, %v4420
        %4426 = vst.msk [vmem:[%s4423 + $0x10] sm:$0xff] %vm324, %v4421
        %4427 = vst.msk [vmem:[%s4423 + $0x18] sm:$0xff] %vm324, %v4422
        %4428 = vset.pattern.permute.xlu0 9
        %4429 = vperm.xlu0 %4428, %v4184
        %v4430 = vpop.permute.xlu0 %4429
        %4432 = vset.pattern.permute.xlu0 9
        %4433 = vperm.xlu0 %4432, %v4185
        %v4434 = vpop.permute.xlu0 %4433
        %4436 = vset.pattern.permute.xlu0 9
        %4437 = vperm.xlu0 %4436, %v4186
        %v4438 = vpop.permute.xlu0 %4437
        %4440 = vset.pattern.permute.xlu0 9
        %4441 = vperm.xlu0 %4440, %v4187
        %v4442 = vpop.permute.xlu0 %4441
        %v4444 = vmul.f32 %v1074, %v4430
        %v4445 = vmul.f32 %v1075, %v4434
        %v4446 = vmul.f32 %v1076, %v4438
        %v4447 = vmul.f32 %v1077, %v4442
        %s4448 = scalar_lea.vmem %s190, 288 [#allocation2]
        %4449 = vst.msk [vmem:[%s4448] sm:$0xff] %vm324, %v4444
        %4450 = vst.msk [vmem:[%s4448 + $0x8] sm:$0xff] %vm324, %v4445
        %4451 = vst.msk [vmem:[%s4448 + $0x10] sm:$0xff] %vm324, %v4446
        %4452 = vst.msk [vmem:[%s4448 + $0x18] sm:$0xff] %vm324, %v4447
        %4453 = vset.pattern.permute.xlu0 10
        %4454 = vperm.xlu0 %4453, %v4184
        %v4455 = vpop.permute.xlu0 %4454
        %4457 = vset.pattern.permute.xlu0 10
        %4458 = vperm.xlu0 %4457, %v4185
        %v4459 = vpop.permute.xlu0 %4458
        %4461 = vset.pattern.permute.xlu0 10
        %4462 = vperm.xlu0 %4461, %v4186
        %v4463 = vpop.permute.xlu0 %4462
        %4465 = vset.pattern.permute.xlu0 10
        %4466 = vperm.xlu0 %4465, %v4187
        %v4467 = vpop.permute.xlu0 %4466
        %v4469 = vmul.f32 %v1078, %v4455
        %v4470 = vmul.f32 %v1079, %v4459
        %v4471 = vmul.f32 %v1080, %v4463
        %v4472 = vmul.f32 %v1081, %v4467
        %s4473 = scalar_lea.vmem %s190, 320 [#allocation2]
        %4474 = vst.msk [vmem:[%s4473] sm:$0xff] %vm324, %v4469
        %4475 = vst.msk [vmem:[%s4473 + $0x8] sm:$0xff] %vm324, %v4470
        %4476 = vst.msk [vmem:[%s4473 + $0x10] sm:$0xff] %vm324, %v4471
        %4477 = vst.msk [vmem:[%s4473 + $0x18] sm:$0xff] %vm324, %v4472
        %4478 = vset.pattern.permute.xlu0 11
        %4479 = vperm.xlu0 %4478, %v4184
        %v4480 = vpop.permute.xlu0 %4479
        %4482 = vset.pattern.permute.xlu0 11
        %4483 = vperm.xlu0 %4482, %v4185
        %v4484 = vpop.permute.xlu0 %4483
        %4486 = vset.pattern.permute.xlu0 11
        %4487 = vperm.xlu0 %4486, %v4186
        %v4488 = vpop.permute.xlu0 %4487
        %4490 = vset.pattern.permute.xlu0 11
        %4491 = vperm.xlu0 %4490, %v4187
        %v4492 = vpop.permute.xlu0 %4491
        %v4494 = vmul.f32 %v1082, %v4480
        %v4495 = vmul.f32 %v1083, %v4484
        %v4496 = vmul.f32 %v1084, %v4488
        %v4497 = vmul.f32 %v1085, %v4492
        %s4498 = scalar_lea.vmem %s190, 352 [#allocation2]
        %4499 = vst.msk [vmem:[%s4498] sm:$0xff] %vm324, %v4494
        %4500 = vst.msk [vmem:[%s4498 + $0x8] sm:$0xff] %vm324, %v4495
        %4501 = vst.msk [vmem:[%s4498 + $0x10] sm:$0xff] %vm324, %v4496
        %4502 = vst.msk [vmem:[%s4498 + $0x18] sm:$0xff] %vm324, %v4497
        %4503 = vset.pattern.permute.xlu0 12
        %4504 = vperm.xlu0 %4503, %v4184
        %v4505 = vpop.permute.xlu0 %4504
        %4507 = vset.pattern.permute.xlu0 12
        %4508 = vperm.xlu0 %4507, %v4185
        %v4509 = vpop.permute.xlu0 %4508
        %4511 = vset.pattern.permute.xlu0 12
        %4512 = vperm.xlu0 %4511, %v4186
        %v4513 = vpop.permute.xlu0 %4512
        %4515 = vset.pattern.permute.xlu0 12
        %4516 = vperm.xlu0 %4515, %v4187
        %v4517 = vpop.permute.xlu0 %4516
        %v4519 = vmul.f32 %v1086, %v4505
        %v4520 = vmul.f32 %v1087, %v4509
        %v4521 = vmul.f32 %v1088, %v4513
        %v4522 = vmul.f32 %v1089, %v4517
        %s4523 = scalar_lea.vmem %s190, 384 [#allocation2]
        %4524 = vst.msk [vmem:[%s4523] sm:$0xff] %vm324, %v4519
        %4525 = vst.msk [vmem:[%s4523 + $0x8] sm:$0xff] %vm324, %v4520
        %4526 = vst.msk [vmem:[%s4523 + $0x10] sm:$0xff] %vm324, %v4521
        %4527 = vst.msk [vmem:[%s4523 + $0x18] sm:$0xff] %vm324, %v4522
        %4528 = vset.pattern.permute.xlu0 13
        %4529 = vperm.xlu0 %4528, %v4184
        %v4530 = vpop.permute.xlu0 %4529
        %4532 = vset.pattern.permute.xlu0 13
        %4533 = vperm.xlu0 %4532, %v4185
        %v4534 = vpop.permute.xlu0 %4533
        %4536 = vset.pattern.permute.xlu0 13
        %4537 = vperm.xlu0 %4536, %v4186
        %v4538 = vpop.permute.xlu0 %4537
        %4540 = vset.pattern.permute.xlu0 13
        %4541 = vperm.xlu0 %4540, %v4187
        %v4542 = vpop.permute.xlu0 %4541
        %v4544 = vmul.f32 %v1090, %v4530
        %v4545 = vmul.f32 %v1091, %v4534
        %v4546 = vmul.f32 %v1092, %v4538
        %v4547 = vmul.f32 %v1093, %v4542
        %s4548 = scalar_lea.vmem %s190, 416 [#allocation2]
        %4549 = vst.msk [vmem:[%s4548] sm:$0xff] %vm324, %v4544
        %4550 = vst.msk [vmem:[%s4548 + $0x8] sm:$0xff] %vm324, %v4545
        %4551 = vst.msk [vmem:[%s4548 + $0x10] sm:$0xff] %vm324, %v4546
        %4552 = vst.msk [vmem:[%s4548 + $0x18] sm:$0xff] %vm324, %v4547
        %4553 = vset.pattern.permute.xlu0 14
        %4554 = vperm.xlu0 %4553, %v4184
        %v4555 = vpop.permute.xlu0 %4554
        %4557 = vset.pattern.permute.xlu0 14
        %4558 = vperm.xlu0 %4557, %v4185
        %v4559 = vpop.permute.xlu0 %4558
        %4561 = vset.pattern.permute.xlu0 14
        %4562 = vperm.xlu0 %4561, %v4186
        %v4563 = vpop.permute.xlu0 %4562
        %4565 = vset.pattern.permute.xlu0 14
        %4566 = vperm.xlu0 %4565, %v4187
        %v4567 = vpop.permute.xlu0 %4566
        %v4569 = vmul.f32 %v1094, %v4555
        %v4570 = vmul.f32 %v1095, %v4559
        %v4571 = vmul.f32 %v1096, %v4563
        %v4572 = vmul.f32 %v1097, %v4567
        %s4573 = scalar_lea.vmem %s190, 448 [#allocation2]
        %4574 = vst.msk [vmem:[%s4573] sm:$0xff] %vm324, %v4569
        %4575 = vst.msk [vmem:[%s4573 + $0x8] sm:$0xff] %vm324, %v4570
        %4576 = vst.msk [vmem:[%s4573 + $0x10] sm:$0xff] %vm324, %v4571
        %4577 = vst.msk [vmem:[%s4573 + $0x18] sm:$0xff] %vm324, %v4572
        %4578 = vset.pattern.permute.xlu0 15
        %4579 = vperm.xlu0 %4578, %v4184
        %v4580 = vpop.permute.xlu0 %4579
        %4582 = vset.pattern.permute.xlu0 15
        %4583 = vperm.xlu0 %4582, %v4185
        %v4584 = vpop.permute.xlu0 %4583
        %4586 = vset.pattern.permute.xlu0 15
        %4587 = vperm.xlu0 %4586, %v4186
        %v4588 = vpop.permute.xlu0 %4587
        %4590 = vset.pattern.permute.xlu0 15
        %4591 = vperm.xlu0 %4590, %v4187
        %v4592 = vpop.permute.xlu0 %4591
        %v4594 = vmul.f32 %v1098, %v4580
        %v4595 = vmul.f32 %v1099, %v4584
        %v4596 = vmul.f32 %v1100, %v4588
        %v4597 = vmul.f32 %v1101, %v4592
        %s4598 = scalar_lea.vmem %s190, 480 [#allocation2]
        %4599 = vst.msk [vmem:[%s4598] sm:$0xff] %vm324, %v4594
        %4600 = vst.msk [vmem:[%s4598 + $0x8] sm:$0xff] %vm324, %v4595
        %4601 = vst.msk [vmem:[%s4598 + $0x10] sm:$0xff] %vm324, %v4596
        %4602 = vst.msk [vmem:[%s4598 + $0x18] sm:$0xff] %vm324, %v4597
        %4603 = vset.pattern.permute.xlu0 16
        %4604 = vperm.xlu0 %4603, %v4184
        %v4605 = vpop.permute.xlu0 %4604
        %4607 = vset.pattern.permute.xlu0 16
        %4608 = vperm.xlu0 %4607, %v4185
        %v4609 = vpop.permute.xlu0 %4608
        %4611 = vset.pattern.permute.xlu0 16
        %4612 = vperm.xlu0 %4611, %v4186
        %v4613 = vpop.permute.xlu0 %4612
        %4615 = vset.pattern.permute.xlu0 16
        %4616 = vperm.xlu0 %4615, %v4187
        %v4617 = vpop.permute.xlu0 %4616
        %v4619 = vmul.f32 %v1102, %v4605
        %v4620 = vmul.f32 %v1103, %v4609
        %v4621 = vmul.f32 %v1104, %v4613
        %v4622 = vmul.f32 %v1105, %v4617
        %s4623 = scalar_lea.vmem %s190, 512 [#allocation2]
        %4624 = vst.msk [vmem:[%s4623] sm:$0xff] %vm324, %v4619
        %4625 = vst.msk [vmem:[%s4623 + $0x8] sm:$0xff] %vm324, %v4620
        %4626 = vst.msk [vmem:[%s4623 + $0x10] sm:$0xff] %vm324, %v4621
        %4627 = vst.msk [vmem:[%s4623 + $0x18] sm:$0xff] %vm324, %v4622
        %4628 = vset.pattern.permute.xlu0 17
        %4629 = vperm.xlu0 %4628, %v4184
        %v4630 = vpop.permute.xlu0 %4629
        %4632 = vset.pattern.permute.xlu0 17
        %4633 = vperm.xlu0 %4632, %v4185
        %v4634 = vpop.permute.xlu0 %4633
        %4636 = vset.pattern.permute.xlu0 17
        %4637 = vperm.xlu0 %4636, %v4186
        %v4638 = vpop.permute.xlu0 %4637
        %4640 = vset.pattern.permute.xlu0 17
        %4641 = vperm.xlu0 %4640, %v4187
        %v4642 = vpop.permute.xlu0 %4641
        %v4644 = vmul.f32 %v1106, %v4630
        %v4645 = vmul.f32 %v1107, %v4634
        %v4646 = vmul.f32 %v1108, %v4638
        %v4647 = vmul.f32 %v1109, %v4642
        %s4648 = scalar_lea.vmem %s190, 544 [#allocation2]
        %4649 = vst.msk [vmem:[%s4648] sm:$0xff] %vm324, %v4644
        %4650 = vst.msk [vmem:[%s4648 + $0x8] sm:$0xff] %vm324, %v4645
        %4651 = vst.msk [vmem:[%s4648 + $0x10] sm:$0xff] %vm324, %v4646
        %4652 = vst.msk [vmem:[%s4648 + $0x18] sm:$0xff] %vm324, %v4647
        %4653 = vset.pattern.permute.xlu0 18
        %4654 = vperm.xlu0 %4653, %v4184
        %v4655 = vpop.permute.xlu0 %4654
        %4657 = vset.pattern.permute.xlu0 18
        %4658 = vperm.xlu0 %4657, %v4185
        %v4659 = vpop.permute.xlu0 %4658
        %4661 = vset.pattern.permute.xlu0 18
        %4662 = vperm.xlu0 %4661, %v4186
        %v4663 = vpop.permute.xlu0 %4662
        %4665 = vset.pattern.permute.xlu0 18
        %4666 = vperm.xlu0 %4665, %v4187
        %v4667 = vpop.permute.xlu0 %4666
        %v4669 = vmul.f32 %v1110, %v4655
        %v4670 = vmul.f32 %v1111, %v4659
        %v4671 = vmul.f32 %v1112, %v4663
        %v4672 = vmul.f32 %v1113, %v4667
        %s4673 = scalar_lea.vmem %s190, 576 [#allocation2]
        %4674 = vst.msk [vmem:[%s4673] sm:$0xff] %vm324, %v4669
        %4675 = vst.msk [vmem:[%s4673 + $0x8] sm:$0xff] %vm324, %v4670
        %4676 = vst.msk [vmem:[%s4673 + $0x10] sm:$0xff] %vm324, %v4671
        %4677 = vst.msk [vmem:[%s4673 + $0x18] sm:$0xff] %vm324, %v4672
        %4678 = vset.pattern.permute.xlu0 19
        %4679 = vperm.xlu0 %4678, %v4184
        %v4680 = vpop.permute.xlu0 %4679
        %4682 = vset.pattern.permute.xlu0 19
        %4683 = vperm.xlu0 %4682, %v4185
        %v4684 = vpop.permute.xlu0 %4683
        %4686 = vset.pattern.permute.xlu0 19
        %4687 = vperm.xlu0 %4686, %v4186
        %v4688 = vpop.permute.xlu0 %4687
        %4690 = vset.pattern.permute.xlu0 19
        %4691 = vperm.xlu0 %4690, %v4187
        %v4692 = vpop.permute.xlu0 %4691
        %v4694 = vmul.f32 %v1114, %v4680
        %v4695 = vmul.f32 %v1115, %v4684
        %v4696 = vmul.f32 %v1116, %v4688
        %v4697 = vmul.f32 %v1117, %v4692
        %s4698 = scalar_lea.vmem %s190, 608 [#allocation2]
        %4699 = vst.msk [vmem:[%s4698] sm:$0xff] %vm324, %v4694
        %4700 = vst.msk [vmem:[%s4698 + $0x8] sm:$0xff] %vm324, %v4695
        %4701 = vst.msk [vmem:[%s4698 + $0x10] sm:$0xff] %vm324, %v4696
        %4702 = vst.msk [vmem:[%s4698 + $0x18] sm:$0xff] %vm324, %v4697
        %4703 = vset.pattern.permute.xlu0 20
        %4704 = vperm.xlu0 %4703, %v4184
        %v4705 = vpop.permute.xlu0 %4704
        %4707 = vset.pattern.permute.xlu0 20
        %4708 = vperm.xlu0 %4707, %v4185
        %v4709 = vpop.permute.xlu0 %4708
        %4711 = vset.pattern.permute.xlu0 20
        %4712 = vperm.xlu0 %4711, %v4186
        %v4713 = vpop.permute.xlu0 %4712
        %4715 = vset.pattern.permute.xlu0 20
        %4716 = vperm.xlu0 %4715, %v4187
        %v4717 = vpop.permute.xlu0 %4716
        %v4719 = vmul.f32 %v1118, %v4705
        %v4720 = vmul.f32 %v1119, %v4709
        %v4721 = vmul.f32 %v1120, %v4713
        %v4722 = vmul.f32 %v1121, %v4717
        %s4723 = scalar_lea.vmem %s190, 640 [#allocation2]
        %4724 = vst.msk [vmem:[%s4723] sm:$0xff] %vm324, %v4719
        %4725 = vst.msk [vmem:[%s4723 + $0x8] sm:$0xff] %vm324, %v4720
        %4726 = vst.msk [vmem:[%s4723 + $0x10] sm:$0xff] %vm324, %v4721
        %4727 = vst.msk [vmem:[%s4723 + $0x18] sm:$0xff] %vm324, %v4722
        %4728 = vset.pattern.permute.xlu0 21
        %4729 = vperm.xlu0 %4728, %v4184
        %v4730 = vpop.permute.xlu0 %4729
        %4732 = vset.pattern.permute.xlu0 21
        %4733 = vperm.xlu0 %4732, %v4185
        %v4734 = vpop.permute.xlu0 %4733
        %4736 = vset.pattern.permute.xlu0 21
        %4737 = vperm.xlu0 %4736, %v4186
        %v4738 = vpop.permute.xlu0 %4737
        %4740 = vset.pattern.permute.xlu0 21
        %4741 = vperm.xlu0 %4740, %v4187
        %v4742 = vpop.permute.xlu0 %4741
        %v4744 = vmul.f32 %v1122, %v4730
        %v4745 = vmul.f32 %v1123, %v4734
        %v4746 = vmul.f32 %v1124, %v4738
        %v4747 = vmul.f32 %v1125, %v4742
        %s4748 = scalar_lea.vmem %s190, 672 [#allocation2]
        %4749 = vst.msk [vmem:[%s4748] sm:$0xff] %vm324, %v4744
        %4750 = vst.msk [vmem:[%s4748 + $0x8] sm:$0xff] %vm324, %v4745
        %4751 = vst.msk [vmem:[%s4748 + $0x10] sm:$0xff] %vm324, %v4746
        %4752 = vst.msk [vmem:[%s4748 + $0x18] sm:$0xff] %vm324, %v4747
        %4753 = vset.pattern.permute.xlu0 22
        %4754 = vperm.xlu0 %4753, %v4184
        %v4755 = vpop.permute.xlu0 %4754
        %4757 = vset.pattern.permute.xlu0 22
        %4758 = vperm.xlu0 %4757, %v4185
        %v4759 = vpop.permute.xlu0 %4758
        %4761 = vset.pattern.permute.xlu0 22
        %4762 = vperm.xlu0 %4761, %v4186
        %v4763 = vpop.permute.xlu0 %4762
        %4765 = vset.pattern.permute.xlu0 22
        %4766 = vperm.xlu0 %4765, %v4187
        %v4767 = vpop.permute.xlu0 %4766
        %v4769 = vmul.f32 %v1126, %v4755
        %v4770 = vmul.f32 %v1127, %v4759
        %v4771 = vmul.f32 %v1128, %v4763
        %v4772 = vmul.f32 %v1129, %v4767
        %s4773 = scalar_lea.vmem %s190, 704 [#allocation2]
        %4774 = vst.msk [vmem:[%s4773] sm:$0xff] %vm324, %v4769
        %4775 = vst.msk [vmem:[%s4773 + $0x8] sm:$0xff] %vm324, %v4770
        %4776 = vst.msk [vmem:[%s4773 + $0x10] sm:$0xff] %vm324, %v4771
        %4777 = vst.msk [vmem:[%s4773 + $0x18] sm:$0xff] %vm324, %v4772
        %4778 = vset.pattern.permute.xlu0 23
        %4779 = vperm.xlu0 %4778, %v4184
        %v4780 = vpop.permute.xlu0 %4779
        %4782 = vset.pattern.permute.xlu0 23
        %4783 = vperm.xlu0 %4782, %v4185
        %v4784 = vpop.permute.xlu0 %4783
        %4786 = vset.pattern.permute.xlu0 23
        %4787 = vperm.xlu0 %4786, %v4186
        %v4788 = vpop.permute.xlu0 %4787
        %4790 = vset.pattern.permute.xlu0 23
        %4791 = vperm.xlu0 %4790, %v4187
        %v4792 = vpop.permute.xlu0 %4791
        %v4794 = vmul.f32 %v1130, %v4780
        %v4795 = vmul.f32 %v1131, %v4784
        %v4796 = vmul.f32 %v1132, %v4788
        %v4797 = vmul.f32 %v1133, %v4792
        %s4798 = scalar_lea.vmem %s190, 736 [#allocation2]
        %4799 = vst.msk [vmem:[%s4798] sm:$0xff] %vm324, %v4794
        %4800 = vst.msk [vmem:[%s4798 + $0x8] sm:$0xff] %vm324, %v4795
        %4801 = vst.msk [vmem:[%s4798 + $0x10] sm:$0xff] %vm324, %v4796
        %4802 = vst.msk [vmem:[%s4798 + $0x18] sm:$0xff] %vm324, %v4797
        %4803 = vset.pattern.permute.xlu0 24
        %4804 = vperm.xlu0 %4803, %v4184
        %v4805 = vpop.permute.xlu0 %4804
        %4807 = vset.pattern.permute.xlu0 24
        %4808 = vperm.xlu0 %4807, %v4185
        %v4809 = vpop.permute.xlu0 %4808
        %4811 = vset.pattern.permute.xlu0 24
        %4812 = vperm.xlu0 %4811, %v4186
        %v4813 = vpop.permute.xlu0 %4812
        %4815 = vset.pattern.permute.xlu0 24
        %4816 = vperm.xlu0 %4815, %v4187
        %v4817 = vpop.permute.xlu0 %4816
        %v4819 = vmul.f32 %v1134, %v4805
        %v4820 = vmul.f32 %v1135, %v4809
        %v4821 = vmul.f32 %v1136, %v4813
        %v4822 = vmul.f32 %v1137, %v4817
        %s4823 = scalar_lea.vmem %s190, 768 [#allocation2]
        %4824 = vst.msk [vmem:[%s4823] sm:$0xff] %vm324, %v4819
        %4825 = vst.msk [vmem:[%s4823 + $0x8] sm:$0xff] %vm324, %v4820
        %4826 = vst.msk [vmem:[%s4823 + $0x10] sm:$0xff] %vm324, %v4821
        %4827 = vst.msk [vmem:[%s4823 + $0x18] sm:$0xff] %vm324, %v4822
        %4828 = vset.pattern.permute.xlu0 25
        %4829 = vperm.xlu0 %4828, %v4184
        %v4830 = vpop.permute.xlu0 %4829
        %4832 = vset.pattern.permute.xlu0 25
        %4833 = vperm.xlu0 %4832, %v4185
        %v4834 = vpop.permute.xlu0 %4833
        %4836 = vset.pattern.permute.xlu0 25
        %4837 = vperm.xlu0 %4836, %v4186
        %v4838 = vpop.permute.xlu0 %4837
        %4840 = vset.pattern.permute.xlu0 25
        %4841 = vperm.xlu0 %4840, %v4187
        %v4842 = vpop.permute.xlu0 %4841
        %v4844 = vmul.f32 %v1138, %v4830
        %v4845 = vmul.f32 %v1139, %v4834
        %v4846 = vmul.f32 %v1140, %v4838
        %v4847 = vmul.f32 %v1141, %v4842
        %s4848 = scalar_lea.vmem %s190, 800 [#allocation2]
        %4849 = vst.msk [vmem:[%s4848] sm:$0xff] %vm324, %v4844
        %4850 = vst.msk [vmem:[%s4848 + $0x8] sm:$0xff] %vm324, %v4845
        %4851 = vst.msk [vmem:[%s4848 + $0x10] sm:$0xff] %vm324, %v4846
        %4852 = vst.msk [vmem:[%s4848 + $0x18] sm:$0xff] %vm324, %v4847
        %4853 = vset.pattern.permute.xlu0 26
        %4854 = vperm.xlu0 %4853, %v4184
        %v4855 = vpop.permute.xlu0 %4854
        %4857 = vset.pattern.permute.xlu0 26
        %4858 = vperm.xlu0 %4857, %v4185
        %v4859 = vpop.permute.xlu0 %4858
        %4861 = vset.pattern.permute.xlu0 26
        %4862 = vperm.xlu0 %4861, %v4186
        %v4863 = vpop.permute.xlu0 %4862
        %4865 = vset.pattern.permute.xlu0 26
        %4866 = vperm.xlu0 %4865, %v4187
        %v4867 = vpop.permute.xlu0 %4866
        %v4869 = vmul.f32 %v1142, %v4855
        %v4870 = vmul.f32 %v1143, %v4859
        %v4871 = vmul.f32 %v1144, %v4863
        %v4872 = vmul.f32 %v1145, %v4867
        %s4873 = scalar_lea.vmem %s190, 832 [#allocation2]
        %4874 = vst.msk [vmem:[%s4873] sm:$0xff] %vm324, %v4869
        %4875 = vst.msk [vmem:[%s4873 + $0x8] sm:$0xff] %vm324, %v4870
        %4876 = vst.msk [vmem:[%s4873 + $0x10] sm:$0xff] %vm324, %v4871
        %4877 = vst.msk [vmem:[%s4873 + $0x18] sm:$0xff] %vm324, %v4872
        %4878 = vset.pattern.permute.xlu0 27
        %4879 = vperm.xlu0 %4878, %v4184
        %v4880 = vpop.permute.xlu0 %4879
        %4882 = vset.pattern.permute.xlu0 27
        %4883 = vperm.xlu0 %4882, %v4185
        %v4884 = vpop.permute.xlu0 %4883
        %4886 = vset.pattern.permute.xlu0 27
        %4887 = vperm.xlu0 %4886, %v4186
        %v4888 = vpop.permute.xlu0 %4887
        %4890 = vset.pattern.permute.xlu0 27
        %4891 = vperm.xlu0 %4890, %v4187
        %v4892 = vpop.permute.xlu0 %4891
        %v4894 = vmul.f32 %v1146, %v4880
        %v4895 = vmul.f32 %v1147, %v4884
        %v4896 = vmul.f32 %v1148, %v4888
        %v4897 = vmul.f32 %v1149, %v4892
        %s4898 = scalar_lea.vmem %s190, 864 [#allocation2]
        %4899 = vst.msk [vmem:[%s4898] sm:$0xff] %vm324, %v4894
        %4900 = vst.msk [vmem:[%s4898 + $0x8] sm:$0xff] %vm324, %v4895
        %4901 = vst.msk [vmem:[%s4898 + $0x10] sm:$0xff] %vm324, %v4896
        %4902 = vst.msk [vmem:[%s4898 + $0x18] sm:$0xff] %vm324, %v4897
        %4903 = vset.pattern.permute.xlu0 28
        %4904 = vperm.xlu0 %4903, %v4184
        %v4905 = vpop.permute.xlu0 %4904
        %4907 = vset.pattern.permute.xlu0 28
        %4908 = vperm.xlu0 %4907, %v4185
        %v4909 = vpop.permute.xlu0 %4908
        %4911 = vset.pattern.permute.xlu0 28
        %4912 = vperm.xlu0 %4911, %v4186
        %v4913 = vpop.permute.xlu0 %4912
        %4915 = vset.pattern.permute.xlu0 28
        %4916 = vperm.xlu0 %4915, %v4187
        %v4917 = vpop.permute.xlu0 %4916
        %v4919 = vmul.f32 %v1150, %v4905
        %v4920 = vmul.f32 %v1151, %v4909
        %v4921 = vmul.f32 %v1152, %v4913
        %v4922 = vmul.f32 %v1153, %v4917
        %s4923 = scalar_lea.vmem %s190, 896 [#allocation2]
        %4924 = vst.msk [vmem:[%s4923] sm:$0xff] %vm324, %v4919
        %4925 = vst.msk [vmem:[%s4923 + $0x8] sm:$0xff] %vm324, %v4920
        %4926 = vst.msk [vmem:[%s4923 + $0x10] sm:$0xff] %vm324, %v4921
        %4927 = vst.msk [vmem:[%s4923 + $0x18] sm:$0xff] %vm324, %v4922
        %4928 = vset.pattern.permute.xlu0 29
        %4929 = vperm.xlu0 %4928, %v4184
        %v4930 = vpop.permute.xlu0 %4929
        %4932 = vset.pattern.permute.xlu0 29
        %4933 = vperm.xlu0 %4932, %v4185
        %v4934 = vpop.permute.xlu0 %4933
        %4936 = vset.pattern.permute.xlu0 29
        %4937 = vperm.xlu0 %4936, %v4186
        %v4938 = vpop.permute.xlu0 %4937
        %4940 = vset.pattern.permute.xlu0 29
        %4941 = vperm.xlu0 %4940, %v4187
        %v4942 = vpop.permute.xlu0 %4941
        %v4944 = vmul.f32 %v1154, %v4930
        %v4945 = vmul.f32 %v1155, %v4934
        %v4946 = vmul.f32 %v1156, %v4938
        %v4947 = vmul.f32 %v1157, %v4942
        %s4948 = scalar_lea.vmem %s190, 928 [#allocation2]
        %4949 = vst.msk [vmem:[%s4948] sm:$0xff] %vm324, %v4944
        %4950 = vst.msk [vmem:[%s4948 + $0x8] sm:$0xff] %vm324, %v4945
        %4951 = vst.msk [vmem:[%s4948 + $0x10] sm:$0xff] %vm324, %v4946
        %4952 = vst.msk [vmem:[%s4948 + $0x18] sm:$0xff] %vm324, %v4947
        %4953 = vset.pattern.permute.xlu0 30
        %4954 = vperm.xlu0 %4953, %v4184
        %v4955 = vpop.permute.xlu0 %4954
        %4957 = vset.pattern.permute.xlu0 30
        %4958 = vperm.xlu0 %4957, %v4185
        %v4959 = vpop.permute.xlu0 %4958
        %4961 = vset.pattern.permute.xlu0 30
        %4962 = vperm.xlu0 %4961, %v4186
        %v4963 = vpop.permute.xlu0 %4962
        %4965 = vset.pattern.permute.xlu0 30
        %4966 = vperm.xlu0 %4965, %v4187
        %v4967 = vpop.permute.xlu0 %4966
        %v4969 = vmul.f32 %v1158, %v4955
        %v4970 = vmul.f32 %v1159, %v4959
        %v4971 = vmul.f32 %v1160, %v4963
        %v4972 = vmul.f32 %v1161, %v4967
        %s4973 = scalar_lea.vmem %s190, 960 [#allocation2]
        %4974 = vst.msk [vmem:[%s4973] sm:$0xff] %vm324, %v4969
        %4975 = vst.msk [vmem:[%s4973 + $0x8] sm:$0xff] %vm324, %v4970
        %4976 = vst.msk [vmem:[%s4973 + $0x10] sm:$0xff] %vm324, %v4971
        %4977 = vst.msk [vmem:[%s4973 + $0x18] sm:$0xff] %vm324, %v4972
        %4978 = vset.pattern.permute.xlu0 31
        %4979 = vperm.xlu0 %4978, %v4184
        %v4980 = vpop.permute.xlu0 %4979
        %4982 = vset.pattern.permute.xlu0 31
        %4983 = vperm.xlu0 %4982, %v4185
        %v4984 = vpop.permute.xlu0 %4983
        %4986 = vset.pattern.permute.xlu0 31
        %4987 = vperm.xlu0 %4986, %v4186
        %v4988 = vpop.permute.xlu0 %4987
        %4990 = vset.pattern.permute.xlu0 31
        %4991 = vperm.xlu0 %4990, %v4187
        %v4992 = vpop.permute.xlu0 %4991
        %v4994 = vmul.f32 %v1162, %v4980
        %v4995 = vmul.f32 %v1163, %v4984
        %v4996 = vmul.f32 %v1164, %v4988
        %v4997 = vmul.f32 %v1165, %v4992
        %s4998 = scalar_lea.vmem %s190, 992 [#allocation2]
        %4999 = vst.msk [vmem:[%s4998] sm:$0xff] %vm324, %v4994
        %5000 = vst.msk [vmem:[%s4998 + $0x8] sm:$0xff] %vm324, %v4995
        %5001 = vst.msk [vmem:[%s4998 + $0x10] sm:$0xff] %vm324, %v4996
        %5002 = vst.msk [vmem:[%s4998 + $0x18] sm:$0xff] %vm324, %v4997
        %s5003 = sand.u32 %s115, 1
        %s5004 = scalar_lea.sflag [#allocation3], %s5003
        %s5005 = sand.u32 %s115, 1
        %s5006 = smul.addr %s5005, 1024
        %s5007 = scalar_lea.vmem [#allocation2], %s5006
        // Predicated region
        $region37: #{cbam_forward.1} parent=35 // pred_check
          %p5008 = pneg %p125
        $region38: #{cbam_forward.1} parent=35 // pred_check_branch
          %5010 = sbr.rel (%p5008) target = $region40
        $region39: #{cbam_forward.1} parent=35 // pred_region
          %s5012 = ssub.s32 16384, 16384
          %5013 = vsyncadd %s5004, %s5012
          %s5014 = smul.addr %s18, 128
          %s5015 = smul.addr %s5014, 128
          %s5016 = scalar_lea.hbm %s4, %s5015
          %s5017 = sshll.u32 %s5007, 4
          %s5018 = int_to_ptr.vmem [resolvable:$true] %s5017
          %5023 = dma.vmem_to_hbm [thread:$0]  %s5018, 16384, %s5016, %s5004, 128, 128, 8
        $region40: #{cbam_forward.1} parent=35 // pred_fallthru
          _
      $region36: #{cbam_forward.1} parent=5 // pred_fallthru
        _
      %p5024 = scmp.le.s32.totalorder 2, %s13
      // Predicated region
      $region41: #{cbam_forward.1} parent=5 // pred_check
        %p5025 = pneg %p5024
      $region42: #{cbam_forward.1} parent=5 // pred_check_branch
        %5027 = sbr.rel (%p5025) target = $region44
      $region43: #{cbam_forward.1} parent=5 // pred_region
        %s5028 = ssub.s32 %s13, 2
        // Predicated region
        $region45: #{cbam_forward.1} parent=43 // pred_check
          %p5029 = pneg %p131
        $region46: #{cbam_forward.1} parent=43 // pred_check_branch
          %5031 = sbr.rel (%p5029) target = $region48
        $region47: #{cbam_forward.1} parent=43 // pred_region
          %s5032 = sand.u32 %s116, 1
          %s5033 = scalar_lea.sflag [#allocation3], %s5032
          %s5034 = sand.u32 %s116, 1
          %s5035 = smul.addr %s5034, 1024
          %s5036 = scalar_lea.vmem [#allocation2], %s5035
          %5037 = dma.done %s5033, 16384
        $region48: #{cbam_forward.1} parent=43 // pred_fallthru
          _
      $region44: #{cbam_forward.1} parent=5 // pred_fallthru
        _
    $region6: #{cbam_forward.1} parent=1 // loop_footer
      %s17 = sadd.s32 1, %s13
    $region7: #{cbam_forward.1} parent=1 // loop_footer_branch
      %12 = sbr.rel target = $region3
    $region8: #{cbam_forward.1} parent=1 // loop_exit
      _
    %5038 = vsyncpa [#allocation3], 1
    %s5039 = scalar_lea.sflag [#allocation3], 1
    %5040 = vsyncpa %s5039, 1

</llo_original>
